<compile_context>
chip_gen: v5e
topology: v5e:2x2
jax: 0.10.0
libtpu: 0.0.40
codegen_flags: <defaults>
</compile_context>

<pallas_src>
import functools
import math

import numpy as np
import jax
import jax.numpy as jnp
from jax import lax
from jax.experimental import pallas as pl
from jax.experimental.pallas import tpu as pltpu


def _round_up(v, m):
    return ((v + m - 1) // m) * m


def _erf_approx(z):
    # Abramowitz & Stegun 7.1.26 rational approximation, |err| <= 1.5e-7
    # (effectively exact in float32).  exp() lands on the EUP slot.
    a1, a2, a3, a4, a5 = 0.254829592, -0.284496736, 1.421413741, -1.453152027, 1.061405429
    p = 0.3275911
    az = jnp.abs(z)
    t = 1.0 / (1.0 + p * az)
    poly = t * (a1 + t * (a2 + t * (a3 + t * (a4 + t * a5))))
    y = 1.0 - poly * jnp.exp(-az * az)
    return jnp.where(z >= 0.0, y, -y)


def _gelu(z):
    # matches torch.nn.GELU() default (erf-based GELU)
    return 0.5 * z * (1.0 + _erf_approx(z * 0.7071067811865476))


@functools.lru_cache(maxsize=None)
def _roll_tap_mode():
    """One-time semantics guard for pltpu.roll (used to derive the kw taps).

    Returns:
      'roll_np'  -> pltpu.roll matches np.roll (result[i] = x[i - shift])
      'roll_rev' -> pltpu.roll shifts the other way (result[i] = x[i + shift])
      'slice'    -> fall back to slicing a (HPW_pad + KW - 1)-wide base value
    """
    def probe(x_ref, o_ref):
        o_ref[...] = pltpu.roll(x_ref[...], shift=1, axis=-1)

    try:
        x = jnp.tile(jnp.arange(128, dtype=jnp.float32), (8, 1))
        y = pl.pallas_call(
            probe, out_shape=jax.ShapeDtypeStruct((8, 128), jnp.float32))(x)
        v = float(y[0, 0])
    except Exception:
        return "slice"
    if v == 127.0:
        return "roll_np"
    if v == 1.0:
        return "roll_rev"
    return "slice"


def _vmem_limit_bytes():
    # v7x has 64 MiB VMEM per TensorCore; v5e/v6e have 128 MiB.  Leave ~25%
    # headroom for Mosaic scratch + the double-buffered input/output blocks.
    try:
        cap = pltpu.get_tpu_info().vmem_capacity_bytes
    except Exception:
        cap = 64 * 1024 * 1024
    return int(min(cap * 3 // 4, 100 * 1024 * 1024))


def _gap_kernel(x_ref, w0r_ref, b0_ref, w1_ref, b1_ref, w2_ref, b2_ref,
                o_ref, p_ref, inter_ref,
                *, KT, KH, KW, W, Tp, HPW_pad, dot_dtype, tap_mode):
    """Fused GapModuleConv forward for one batch element (grid = (N,)).

    x_ref    : (1, T, cip, HWpad)   channels on sublanes, flat spatial on lanes
    w0r_ref  : (KT, Co, K)          KT temporally-rotated conv weight row orders
    b0_ref   : (Co, 1)
    w1_ref   : (2Co, Co)  b1_ref: (2Co, 1)   pointwise boost conv #1
    w2_ref   : (Co, 2Co)  b2_ref: (Co, 1)    pointwise boost conv #2
    o_ref    : (1, Co, Tp*HPW_pad)  lane-dense output slab
    p_ref    : (K, HPW_pad)         im2col scratch = KT reusable temporal banks
    inter_ref: (Co, Tp*HPW_pad)     f32 st_sample (conv+GELU) output slab
    """
    cip = x_ref.shape[2]
    bank_rows = KH * KW * cip

    def fill_bank(plane, bank):
        # im2col rows of ONE temporal plane -> temporal bank `bank` of p_ref.
        xt = x_ref[0, plane]                               # (cip, HWpad)
        row0 = bank * bank_rows
        for kh in range(KH):
            c0 = kh * W
            # one wide load per (plane, kh); the kw taps are derived from it
            basew = xt[:, c0:c0 + HPW_pad + KW - 1]        # (cip, HPW_pad+KW-1)
            base = basew[:, :HPW_pad]                      # zero-cost prefix
            for kw in range(KW):
                if kw == 0:
                    tap = base
                elif tap_mode == "roll_np":
                    # tap[l] = base[l + kw]; wrapped lanes only land in
                    # columns >= HPW_pad - kw, which the wrapper crops.
                    tap = pltpu.roll(base, shift=HPW_pad - kw, axis=-1)
                elif tap_mode == "roll_rev":
                    tap = pltpu.roll(base, shift=kw, axis=-1)
                else:  # "slice": dtype/semantics-agnostic fallback
                    tap = basew[:, kw:kw + HPW_pad]
                r = row0 + (kh * KW + kw) * cip
                p_ref[r:r + cip, :] = tap

    # ---- prologue: planes 0 .. KT-2 into banks 0 .. KT-2 -------------------
    for b in range(KT - 1):
        fill_bank(b, b)

    # ---- temporal sweep: consecutive windows share KT-1 banks, so each step
    #      im2col's only the newest plane and picks the matching weight order.
    for t in range(Tp):
        plane = t + KT - 1
        fill_bank(plane, plane % KT)
        w0 = w0r_ref[t % KT]                               # (Co, K), bank-ordered
        acc = jnp.dot(w0, p_ref[...], preferred_element_type=jnp.float32)
        inter_ref[:, t * HPW_pad:(t + 1) * HPW_pad] = _gelu(acc + b0_ref[...])

    # ---- boost MLP (two 1x1x1 convs) once over the whole lane-dense slab ----
    inter = inter_ref[...]                                 # (Co, Tp*HPW_pad) f32
    h = jnp.dot(w1_ref[...], inter.astype(dot_dtype),
                preferred_element_type=jnp.float32)
    h = _gelu(h + b1_ref[...])                             # (2Co, Tp*HPW_pad)
    y = jnp.dot(w2_ref[...], h.astype(dot_dtype),
                preferred_element_type=jnp.float32)
    y = _gelu(y + b2_ref[...])                             # (Co, Tp*HPW_pad)

    # ---- residual + single unmasked lane-dense store ------------------------
    o_ref[0] = (y + inter).astype(o_ref.dtype)


def gap_module_conv_forward(x_ncdhw, params, *, dot_dtype=jnp.bfloat16):
    w0, b0, w1, b1, w2, b2 = (params[k] for k in ("w0", "b0", "w1", "b1", "w2", "b2"))
    N, Ci, T, H, W = x_ncdhw.shape
    KT, KH, KW, _, Co = w0.shape
    Tp, Hp, Wp = T - KT + 1, H - KH + 1, W - KW + 1

    HPW = Hp * W                              # full-width output rows, Wp-cropped below
    HPW_pad = _round_up(HPW, 128)             # lane-dense scratch / matmul / output
    # per-plane flat lane extent the kernel reads (kept in lockstep with HPW_pad)
    HWpad = (KH - 1) * W + HPW_pad + (KW - 1)
    assert HWpad >= H * W

    dd = jnp.dtype(dot_dtype)
    # pad channels to full f32 tiles (8 rows) or full packed bf16 tiles (16 rows)
    sub = 8 * max(1, 4 // dd.itemsize)
    cip = _round_up(Ci, sub)
    K = KT * KH * KW * cip
    bank_rows = KH * KW * cip

    # ---- input: (N,Ci,T,H,W) -> (N,T,cip,HWpad) in dot_dtype -----------------
    x = jnp.transpose(x_ncdhw, (0, 2, 1, 3, 4))            # (N, T, Ci, H, W)
    if cip != Ci:
        x = jnp.pad(x, ((0, 0), (0, 0), (0, cip - Ci), (0, 0), (0, 0)))
        w0 = jnp.pad(w0, ((0, 0), (0, 0), (0, 0), (0, cip - Ci), (0, 0)))
    x = x.reshape(N, T, cip, H * W)
    if HWpad > H * W:
        x = jnp.pad(x, ((0, 0), (0, 0), (0, 0), (0, HWpad - H * W)))
    x = x.astype(dot_dtype)

    # ---- conv weight -> KT rotated (Co, K) row orderings (bank <-> kt match) --
    w0f = jnp.transpose(w0.reshape(K, Co)).astype(dot_dtype)        # (Co, K)
    blocks = [w0f[:, kt * bank_rows:(kt + 1) * bank_rows] for kt in range(KT)]
    w0r = jnp.stack(
        [jnp.concatenate([blocks[(b - r) % KT] for b in range(KT)], axis=1)
         for r in range(KT)], axis=0)                               # (KT, Co, K)

    w1t = jnp.transpose(w1).astype(dot_dtype)                       # (2Co, Co)
    w2t = jnp.transpose(w2).astype(dot_dtype)                       # (Co, 2Co)
    b0r = b0.reshape(Co, 1).astype(jnp.float32)
    b1r = b1.reshape(2 * Co, 1).astype(jnp.float32)
    b2r = b2.reshape(Co, 1).astype(jnp.float32)

    # roll-derived taps only for 32-bit operands; packed dtypes use the sliced tap
    tap_mode = _roll_tap_mode() if dd.itemsize == 4 else "slice"

    kernel = functools.partial(
        _gap_kernel, KT=KT, KH=KH, KW=KW, W=W, Tp=Tp, HPW_pad=HPW_pad,
        dot_dtype=dot_dtype, tap_mode=tap_mode)

    out = pl.pallas_call(
        kernel,
        out_shape=jax.ShapeDtypeStruct((N, Co, Tp * HPW_pad), x_ncdhw.dtype),
        grid_spec=pltpu.PrefetchScalarGridSpec(
            num_scalar_prefetch=0,
            grid=(N,),               # Tp folded into the body: no per-t grid overhead
            in_specs=[
                pl.BlockSpec((1, T, cip, HWpad), lambda n: (n, 0, 0, 0)),
                pl.BlockSpec((KT, Co, K), lambda n: (0, 0, 0)),
                pl.BlockSpec((Co, 1), lambda n: (0, 0)),
                pl.BlockSpec((2 * Co, Co), lambda n: (0, 0)),
                pl.BlockSpec((2 * Co, 1), lambda n: (0, 0)),
                pl.BlockSpec((Co, 2 * Co), lambda n: (0, 0)),
                pl.BlockSpec((Co, 1), lambda n: (0, 0)),
            ],
            out_specs=pl.BlockSpec((1, Co, Tp * HPW_pad), lambda n: (n, 0, 0)),
            scratch_shapes=[
                pltpu.VMEM((K, HPW_pad), dot_dtype),           # im2col temporal banks
                pltpu.VMEM((Co, Tp * HPW_pad), jnp.float32),   # st_sample output slab
            ],
        ),
        compiler_params=pltpu.CompilerParams(
            # batch programs are independent; with N>=2 both v7x TensorCores work.
            dimension_semantics=("parallel",),
            vmem_limit_bytes=_vmem_limit_bytes(),
        ),
    )(x, w0r, b0r, w1t, b1r, w2t, b2r)

    # crop lane padding and the wrap-around columns; already NCDHW-ordered
    out = out.reshape(N, Co, Tp, HPW_pad)[..., :HPW]
    out = out.reshape(N, Co, Tp, Hp, W)[..., :Wp]
    return out


def init_params(key, in_chns, out_chns, interp_size_t, interp_size_x):
    kt = 2 * interp_size_t + 1
    kx = 2 * interp_size_x + 1
    k0, k1, k2, k3, k4, k5 = jax.random.split(key, 6)
    fan0 = in_chns * kt * kx * kx
    # conv weight stored directly in kernel layout: (KT, KH, KW, Cin, Cout) == DHWIO
    w0 = jax.random.normal(k0, (kt, kx, kx, in_chns, out_chns), jnp.float32) / math.sqrt(fan0)
    b0 = 0.01 * jax.random.normal(k1, (out_chns,), jnp.float32)
    # boost convs are 1x1x1 (pointwise) -> stored as (Cin, Cout) matrices
    w1 = jax.random.normal(k2, (out_chns, 2 * out_chns), jnp.float32) / math.sqrt(out_chns)
    b1 = 0.01 * jax.random.normal(k3, (2 * out_chns,), jnp.float32)
    w2 = jax.random.normal(k4, (2 * out_chns, out_chns), jnp.float32) / math.sqrt(2 * out_chns)
    b2 = 0.01 * jax.random.normal(k5, (out_chns,), jnp.float32)
    return dict(w0=w0, b0=b0, w1=w1, b1=b1, w2=w2, b2=b2)


def reference_forward(x_ncdhw, params):
    # pure-JAX (XLA) reference of the same forward pass, for the correctness gate
    w0, b0, w1, b1, w2, b2 = (params[k] for k in ("w0", "b0", "w1", "b1", "w2", "b2"))
    gelu = lambda v: jax.nn.gelu(v, approximate=False)
    x = jnp.transpose(x_ncdhw, (0, 2, 3, 4, 1))
    y = lax.conv_general_dilated(
        x, w0, window_strides=(1, 1, 1), padding="VALID",
        dimension_numbers=("NDHWC", "DHWIO", "NDHWC"))
    inter = gelu(y + b0)
    h = gelu(jnp.einsum("nthwc,cd->nthwd", inter, w1) + b1)
    z = gelu(jnp.einsum("nthwd,dc->nthwc", h, w2) + b2)
    out = z + inter
    return jnp.transpose(out, (0, 4, 1, 2, 3))


if __name__ == "__main__":
    key = jax.random.PRNGKey(0)
    k_x, k_p = jax.random.split(key)

    # module config: interp_size_x=1, interp_size_t=1 -> conv kernel (3,3,3), valid
    N, Cin, Cout = 2, 4, 8
    T, H, W = 6, 18, 18
    params = init_params(k_p, Cin, Cout, interp_size_t=1, interp_size_x=1)
    x = jax.random.normal(k_x, (N, Cin, T, H, W), jnp.float32)   # NCDHW like PyTorch

    ref = reference_forward(x, params)

    # f32 MXU path: strict correctness gate against the f32 XLA reference.
    out_f32 = jax.block_until_ready(
        gap_module_conv_forward(x, params, dot_dtype=jnp.float32))
    assert out_f32.shape == (N, Cout, T - 2, H - 2, W - 2), out_f32.shape
    np.testing.assert_allclose(np.asarray(out_f32), np.asarray(ref), rtol=1e-3, atol=1e-3)

    # bf16 MXU path (default): half the HBM/VMEM bytes, native MXU rate on
    # v5e/v6e/v7x; inputs/weights are quantized so the gate is looser.
    out_bf16 = jax.block_until_ready(gap_module_conv_forward(x, params))
    assert out_bf16.shape == out_f32.shape
    np.testing.assert_allclose(np.asarray(out_bf16), np.asarray(ref), rtol=5e-2, atol=5e-2)

    print("KERNEL_OK")
</pallas_src>

<mosaic_0001>
module attributes {stable_mosaic.version = 11 : i64} {
  func.func @_gap_kernel(%arg0: i32, %arg1: memref<1x6x8x422xf32, #tpu.memory_space<vmem>>, %arg2: memref<3x8x216xf32, #tpu.memory_space<vmem>>, %arg3: memref<8x1xf32, #tpu.memory_space<vmem>>, %arg4: memref<16x8xf32, #tpu.memory_space<vmem>>, %arg5: memref<16x1xf32, #tpu.memory_space<vmem>>, %arg6: memref<8x16xf32, #tpu.memory_space<vmem>>, %arg7: memref<8x1xf32, #tpu.memory_space<vmem>>, %arg8: memref<1x8x1536xf32, #tpu.memory_space<vmem>>, %arg9: memref<216x384xf32, #tpu.memory_space<vmem>>, %arg10: memref<8x1536xf32, #tpu.memory_space<vmem>>) attributes {dimension_semantics = [#tpu.dimension_semantics<parallel>], iteration_bounds = array<i64: 2>, scalar_prefetch = 0 : i64, scratch_operands = 2 : i64, tpu.core_type = #tpu.core_type<tc>, window_params = [{transform_indices = @transform_0, window_bounds = array<i64: 1, 6, 8, 422>}, {pipeline_mode = #tpu.pipeline_mode<synchronous>, transform_indices = @transform_1, window_bounds = array<i64: 3, 8, 216>}, {pipeline_mode = #tpu.pipeline_mode<synchronous>, transform_indices = @transform_2, window_bounds = array<i64: 8, 1>}, {pipeline_mode = #tpu.pipeline_mode<synchronous>, transform_indices = @transform_3, window_bounds = array<i64: 16, 8>}, {pipeline_mode = #tpu.pipeline_mode<synchronous>, transform_indices = @transform_4, window_bounds = array<i64: 16, 1>}, {pipeline_mode = #tpu.pipeline_mode<synchronous>, transform_indices = @transform_5, window_bounds = array<i64: 8, 16>}, {pipeline_mode = #tpu.pipeline_mode<synchronous>, transform_indices = @transform_6, window_bounds = array<i64: 8, 1>}, {transform_indices = @transform_7, window_bounds = array<i64: 1, 8, 1536>}]} {
    %c0 = arith.constant 0 : index
    %c0_0 = arith.constant 0 : index
    %c0_1 = arith.constant 0 : index
    %c0_2 = arith.constant 0 : index
    %0 = vector.load %arg1[%c0, %c0_0, %c0_1, %c0_2] : memref<1x6x8x422xf32, #tpu.memory_space<vmem>>, vector<1x1x8x422xf32>
    %1 = vector.shape_cast %0 : vector<1x1x8x422xf32> to vector<8x422xf32>
    %2 = vector.extract_strided_slice %1 {offsets = [0, 0], sizes = [8, 386], strides = [1, 1]} : vector<8x422xf32> to vector<8x386xf32>
    %3 = vector.extract_strided_slice %2 {offsets = [0, 0], sizes = [8, 384], strides = [1, 1]} : vector<8x386xf32> to vector<8x384xf32>
    %c0_3 = arith.constant 0 : index
    %c0_4 = arith.constant 0 : index
    %4 = vector.load %arg9[%c0_3, %c0_4] : memref<216x384xf32, #tpu.memory_space<vmem>>, vector<8x384xf32>
    tpu.vector_store %arg9[%c0_3, %c0_4], %3 {strides = array<i32>} : memref<216x384xf32, #tpu.memory_space<vmem>>, vector<8x384xf32>,
    %5 = vector.extract_strided_slice %2 {offsets = [0, 1], sizes = [8, 384], strides = [1, 1]} : vector<8x386xf32> to vector<8x384xf32>
    %c8 = arith.constant 8 : index
    %c0_5 = arith.constant 0 : index
    %6 = vector.load %arg9[%c8, %c0_5] : memref<216x384xf32, #tpu.memory_space<vmem>>, vector<8x384xf32>
    tpu.vector_store %arg9[%c8, %c0_5], %5 {strides = array<i32>} : memref<216x384xf32, #tpu.memory_space<vmem>>, vector<8x384xf32>,
    %7 = vector.extract_strided_slice %2 {offsets = [0, 2], sizes = [8, 384], strides = [1, 1]} : vector<8x386xf32> to vector<8x384xf32>
    %c16 = arith.constant 16 : index
    %c0_6 = arith.constant 0 : index
    %8 = vector.load %arg9[%c16, %c0_6] : memref<216x384xf32, #tpu.memory_space<vmem>>, vector<8x384xf32>
    tpu.vector_store %arg9[%c16, %c0_6], %7 {strides = array<i32>} : memref<216x384xf32, #tpu.memory_space<vmem>>, vector<8x384xf32>,
    %9 = vector.extract_strided_slice %1 {offsets = [0, 18], sizes = [8, 386], strides = [1, 1]} : vector<8x422xf32> to vector<8x386xf32>
    %10 = vector.extract_strided_slice %9 {offsets = [0, 0], sizes = [8, 384], strides = [1, 1]} : vector<8x386xf32> to vector<8x384xf32>
    %c24 = arith.constant 24 : index
    %c0_7 = arith.constant 0 : index
    %11 = vector.load %arg9[%c24, %c0_7] : memref<216x384xf32, #tpu.memory_space<vmem>>, vector<8x384xf32>
    tpu.vector_store %arg9[%c24, %c0_7], %10 {strides = array<i32>} : memref<216x384xf32, #tpu.memory_space<vmem>>, vector<8x384xf32>,
    %12 = vector.extract_strided_slice %9 {offsets = [0, 1], sizes = [8, 384], strides = [1, 1]} : vector<8x386xf32> to vector<8x384xf32>
    %c32 = arith.constant 32 : index
    %c0_8 = arith.constant 0 : index
    %13 = vector.load %arg9[%c32, %c0_8] : memref<216x384xf32, #tpu.memory_space<vmem>>, vector<8x384xf32>
    tpu.vector_store %arg9[%c32, %c0_8], %12 {strides = array<i32>} : memref<216x384xf32, #tpu.memory_space<vmem>>, vector<8x384xf32>,
    %14 = vector.extract_strided_slice %9 {offsets = [0, 2], sizes = [8, 384], strides = [1, 1]} : vector<8x386xf32> to vector<8x384xf32>
    %c40 = arith.constant 40 : index
    %c0_9 = arith.constant 0 : index
    %15 = vector.load %arg9[%c40, %c0_9] : memref<216x384xf32, #tpu.memory_space<vmem>>, vector<8x384xf32>
    tpu.vector_store %arg9[%c40, %c0_9], %14 {strides = array<i32>} : memref<216x384xf32, #tpu.memory_space<vmem>>, vector<8x384xf32>,
    %16 = vector.extract_strided_slice %1 {offsets = [0, 36], sizes = [8, 386], strides = [1, 1]} : vector<8x422xf32> to vector<8x386xf32>
    %17 = vector.extract_strided_slice %16 {offsets = [0, 0], sizes = [8, 384], strides = [1, 1]} : vector<8x386xf32> to vector<8x384xf32>
    %c48 = arith.constant 48 : index
    %c0_10 = arith.constant 0 : index
    %18 = vector.load %arg9[%c48, %c0_10] : memref<216x384xf32, #tpu.memory_space<vmem>>, vector<8x384xf32>
    tpu.vector_store %arg9[%c48, %c0_10], %17 {strides = array<i32>} : memref<216x384xf32, #tpu.memory_space<vmem>>, vector<8x384xf32>,
    %19 = vector.extract_strided_slice %16 {offsets = [0, 1], sizes = [8, 384], strides = [1, 1]} : vector<8x386xf32> to vector<8x384xf32>
    %c56 = arith.constant 56 : index
    %c0_11 = arith.constant 0 : index
    %20 = vector.load %arg9[%c56, %c0_11] : memref<216x384xf32, #tpu.memory_space<vmem>>, vector<8x384xf32>
    tpu.vector_store %arg9[%c56, %c0_11], %19 {strides = array<i32>} : memref<216x384xf32, #tpu.memory_space<vmem>>, vector<8x384xf32>,
    %21 = vector.extract_strided_slice %16 {offsets = [0, 2], sizes = [8, 384], strides = [1, 1]} : vector<8x386xf32> to vector<8x384xf32>
    %c64 = arith.constant 64 : index
    %c0_12 = arith.constant 0 : index
    %22 = vector.load %arg9[%c64, %c0_12] : memref<216x384xf32, #tpu.memory_space<vmem>>, vector<8x384xf32>
    tpu.vector_store %arg9[%c64, %c0_12], %21 {strides = array<i32>} : memref<216x384xf32, #tpu.memory_space<vmem>>, vector<8x384xf32>,
    %c0_13 = arith.constant 0 : index
    %c1 = arith.constant 1 : index
    %c0_14 = arith.constant 0 : index
    %c0_15 = arith.constant 0 : index
    %23 = vector.load %arg1[%c0_13, %c1, %c0_14, %c0_15] : memref<1x6x8x422xf32, #tpu.memory_space<vmem>>, vector<1x1x8x422xf32>
    %24 = vector.shape_cast %23 : vector<1x1x8x422xf32> to vector<8x422xf32>
    %25 = vector.extract_strided_slice %24 {offsets = [0, 0], sizes = [8, 386], strides = [1, 1]} : vector<8x422xf32> to vector<8x386xf32>
    %26 = vector.extract_strided_slice %25 {offsets = [0, 0], sizes = [8, 384], strides = [1, 1]} : vector<8x386xf32> to vector<8x384xf32>
    %c72 = arith.constant 72 : index
    %c0_16 = arith.constant 0 : index
    %27 = vector.load %arg9[%c72, %c0_16] : memref<216x384xf32, #tpu.memory_space<vmem>>, vector<8x384xf32>
    tpu.vector_store %arg9[%c72, %c0_16], %26 {strides = array<i32>} : memref<216x384xf32, #tpu.memory_space<vmem>>, vector<8x384xf32>,
    %28 = vector.extract_strided_slice %25 {offsets = [0, 1], sizes = [8, 384], strides = [1, 1]} : vector<8x386xf32> to vector<8x384xf32>
    %c80 = arith.constant 80 : index
    %c0_17 = arith.constant 0 : index
    %29 = vector.load %arg9[%c80, %c0_17] : memref<216x384xf32, #tpu.memory_space<vmem>>, vector<8x384xf32>
    tpu.vector_store %arg9[%c80, %c0_17], %28 {strides = array<i32>} : memref<216x384xf32, #tpu.memory_space<vmem>>, vector<8x384xf32>,
    %30 = vector.extract_strided_slice %25 {offsets = [0, 2], sizes = [8, 384], strides = [1, 1]} : vector<8x386xf32> to vector<8x384xf32>
    %c88 = arith.constant 88 : index
    %c0_18 = arith.constant 0 : index
    %31 = vector.load %arg9[%c88, %c0_18] : memref<216x384xf32, #tpu.memory_space<vmem>>, vector<8x384xf32>
    tpu.vector_store %arg9[%c88, %c0_18], %30 {strides = array<i32>} : memref<216x384xf32, #tpu.memory_space<vmem>>, vector<8x384xf32>,
    %32 = vector.extract_strided_slice %24 {offsets = [0, 18], sizes = [8, 386], strides = [1, 1]} : vector<8x422xf32> to vector<8x386xf32>
    %33 = vector.extract_strided_slice %32 {offsets = [0, 0], sizes = [8, 384], strides = [1, 1]} : vector<8x386xf32> to vector<8x384xf32>
    %c96 = arith.constant 96 : index
    %c0_19 = arith.constant 0 : index
    %34 = vector.load %arg9[%c96, %c0_19] : memref<216x384xf32, #tpu.memory_space<vmem>>, vector<8x384xf32>
    tpu.vector_store %arg9[%c96, %c0_19], %33 {strides = array<i32>} : memref<216x384xf32, #tpu.memory_space<vmem>>, vector<8x384xf32>,
    %35 = vector.extract_strided_slice %32 {offsets = [0, 1], sizes = [8, 384], strides = [1, 1]} : vector<8x386xf32> to vector<8x384xf32>
    %c104 = arith.constant 104 : index
    %c0_20 = arith.constant 0 : index
    %36 = vector.load %arg9[%c104, %c0_20] : memref<216x384xf32, #tpu.memory_space<vmem>>, vector<8x384xf32>
    tpu.vector_store %arg9[%c104, %c0_20], %35 {strides = array<i32>} : memref<216x384xf32, #tpu.memory_space<vmem>>, vector<8x384xf32>,
    %37 = vector.extract_strided_slice %32 {offsets = [0, 2], sizes = [8, 384], strides = [1, 1]} : vector<8x386xf32> to vector<8x384xf32>
    %c112 = arith.constant 112 : index
    %c0_21 = arith.constant 0 : index
    %38 = vector.load %arg9[%c112, %c0_21] : memref<216x384xf32, #tpu.memory_space<vmem>>, vector<8x384xf32>
    tpu.vector_store %arg9[%c112, %c0_21], %37 {strides = array<i32>} : memref<216x384xf32, #tpu.memory_space<vmem>>, vector<8x384xf32>,
    %39 = vector.extract_strided_slice %24 {offsets = [0, 36], sizes = [8, 386], strides = [1, 1]} : vector<8x422xf32> to vector<8x386xf32>
    %40 = vector.extract_strided_slice %39 {offsets = [0, 0], sizes = [8, 384], strides = [1, 1]} : vector<8x386xf32> to vector<8x384xf32>
    %c120 = arith.constant 120 : index
    %c0_22 = arith.constant 0 : index
    %41 = vector.load %arg9[%c120, %c0_22] : memref<216x384xf32, #tpu.memory_space<vmem>>, vector<8x384xf32>
    tpu.vector_store %arg9[%c120, %c0_22], %40 {strides = array<i32>} : memref<216x384xf32, #tpu.memory_space<vmem>>, vector<8x384xf32>,
    %42 = vector.extract_strided_slice %39 {offsets = [0, 1], sizes = [8, 384], strides = [1, 1]} : vector<8x386xf32> to vector<8x384xf32>
    %c128 = arith.constant 128 : index
    %c0_23 = arith.constant 0 : index
    %43 = vector.load %arg9[%c128, %c0_23] : memref<216x384xf32, #tpu.memory_space<vmem>>, vector<8x384xf32>
    tpu.vector_store %arg9[%c128, %c0_23], %42 {strides = array<i32>} : memref<216x384xf32, #tpu.memory_space<vmem>>, vector<8x384xf32>,
    %44 = vector.extract_strided_slice %39 {offsets = [0, 2], sizes = [8, 384], strides = [1, 1]} : vector<8x386xf32> to vector<8x384xf32>
    %c136 = arith.constant 136 : index
    %c0_24 = arith.constant 0 : index
    %45 = vector.load %arg9[%c136, %c0_24] : memref<216x384xf32, #tpu.memory_space<vmem>>, vector<8x384xf32>
    tpu.vector_store %arg9[%c136, %c0_24], %44 {strides = array<i32>} : memref<216x384xf32, #tpu.memory_space<vmem>>, vector<8x384xf32>,
    %c0_25 = arith.constant 0 : index
    %c2 = arith.constant 2 : index
    %c0_26 = arith.constant 0 : index
    %c0_27 = arith.constant 0 : index
    %46 = vector.load %arg1[%c0_25, %c2, %c0_26, %c0_27] : memref<1x6x8x422xf32, #tpu.memory_space<vmem>>, vector<1x1x8x422xf32>
    %47 = vector.shape_cast %46 : vector<1x1x8x422xf32> to vector<8x422xf32>
    %48 = vector.extract_strided_slice %47 {offsets = [0, 0], sizes = [8, 386], strides = [1, 1]} : vector<8x422xf32> to vector<8x386xf32>
    %49 = vector.extract_strided_slice %48 {offsets = [0, 0], sizes = [8, 384], strides = [1, 1]} : vector<8x386xf32> to vector<8x384xf32>
    %c144 = arith.constant 144 : index
    %c0_28 = arith.constant 0 : index
    %50 = vector.load %arg9[%c144, %c0_28] : memref<216x384xf32, #tpu.memory_space<vmem>>, vector<8x384xf32>
    tpu.vector_store %arg9[%c144, %c0_28], %49 {strides = array<i32>} : memref<216x384xf32, #tpu.memory_space<vmem>>, vector<8x384xf32>,
    %51 = vector.extract_strided_slice %48 {offsets = [0, 1], sizes = [8, 384], strides = [1, 1]} : vector<8x386xf32> to vector<8x384xf32>
    %c152 = arith.constant 152 : index
    %c0_29 = arith.constant 0 : index
    %52 = vector.load %arg9[%c152, %c0_29] : memref<216x384xf32, #tpu.memory_space<vmem>>, vector<8x384xf32>
    tpu.vector_store %arg9[%c152, %c0_29], %51 {strides = array<i32>} : memref<216x384xf32, #tpu.memory_space<vmem>>, vector<8x384xf32>,
    %53 = vector.extract_strided_slice %48 {offsets = [0, 2], sizes = [8, 384], strides = [1, 1]} : vector<8x386xf32> to vector<8x384xf32>
    %c160 = arith.constant 160 : index
    %c0_30 = arith.constant 0 : index
    %54 = vector.load %arg9[%c160, %c0_30] : memref<216x384xf32, #tpu.memory_space<vmem>>, vector<8x384xf32>
    tpu.vector_store %arg9[%c160, %c0_30], %53 {strides = array<i32>} : memref<216x384xf32, #tpu.memory_space<vmem>>, vector<8x384xf32>,
    %55 = vector.extract_strided_slice %47 {offsets = [0, 18], sizes = [8, 386], strides = [1, 1]} : vector<8x422xf32> to vector<8x386xf32>
    %56 = vector.extract_strided_slice %55 {offsets = [0, 0], sizes = [8, 384], strides = [1, 1]} : vector<8x386xf32> to vector<8x384xf32>
    %c168 = arith.constant 168 : index
    %c0_31 = arith.constant 0 : index
    %57 = vector.load %arg9[%c168, %c0_31] : memref<216x384xf32, #tpu.memory_space<vmem>>, vector<8x384xf32>
    tpu.vector_store %arg9[%c168, %c0_31], %56 {strides = array<i32>} : memref<216x384xf32, #tpu.memory_space<vmem>>, vector<8x384xf32>,
    %58 = vector.extract_strided_slice %55 {offsets = [0, 1], sizes = [8, 384], strides = [1, 1]} : vector<8x386xf32> to vector<8x384xf32>
    %c176 = arith.constant 176 : index
    %c0_32 = arith.constant 0 : index
    %59 = vector.load %arg9[%c176, %c0_32] : memref<216x384xf32, #tpu.memory_space<vmem>>, vector<8x384xf32>
    tpu.vector_store %arg9[%c176, %c0_32], %58 {strides = array<i32>} : memref<216x384xf32, #tpu.memory_space<vmem>>, vector<8x384xf32>,
    %60 = vector.extract_strided_slice %55 {offsets = [0, 2], sizes = [8, 384], strides = [1, 1]} : vector<8x386xf32> to vector<8x384xf32>
    %c184 = arith.constant 184 : index
    %c0_33 = arith.constant 0 : index
    %61 = vector.load %arg9[%c184, %c0_33] : memref<216x384xf32, #tpu.memory_space<vmem>>, vector<8x384xf32>
    tpu.vector_store %arg9[%c184, %c0_33], %60 {strides = array<i32>} : memref<216x384xf32, #tpu.memory_space<vmem>>, vector<8x384xf32>,
    %62 = vector.extract_strided_slice %47 {offsets = [0, 36], sizes = [8, 386], strides = [1, 1]} : vector<8x422xf32> to vector<8x386xf32>
    %63 = vector.extract_strided_slice %62 {offsets = [0, 0], sizes = [8, 384], strides = [1, 1]} : vector<8x386xf32> to vector<8x384xf32>
    %c192 = arith.constant 192 : index
    %c0_34 = arith.constant 0 : index
    %64 = vector.load %arg9[%c192, %c0_34] : memref<216x384xf32, #tpu.memory_space<vmem>>, vector<8x384xf32>
    tpu.vector_store %arg9[%c192, %c0_34], %63 {strides = array<i32>} : memref<216x384xf32, #tpu.memory_space<vmem>>, vector<8x384xf32>,
    %65 = vector.extract_strided_slice %62 {offsets = [0, 1], sizes = [8, 384], strides = [1, 1]} : vector<8x386xf32> to vector<8x384xf32>
    %c200 = arith.constant 200 : index
    %c0_35 = arith.constant 0 : index
    %66 = vector.load %arg9[%c200, %c0_35] : memref<216x384xf32, #tpu.memory_space<vmem>>, vector<8x384xf32>
    tpu.vector_store %arg9[%c200, %c0_35], %65 {strides = array<i32>} : memref<216x384xf32, #tpu.memory_space<vmem>>, vector<8x384xf32>,
    %67 = vector.extract_strided_slice %62 {offsets = [0, 2], sizes = [8, 384], strides = [1, 1]} : vector<8x386xf32> to vector<8x384xf32>
    %c208 = arith.constant 208 : index
    %c0_36 = arith.constant 0 : index
    %68 = vector.load %arg9[%c208, %c0_36] : memref<216x384xf32, #tpu.memory_space<vmem>>, vector<8x384xf32>
    tpu.vector_store %arg9[%c208, %c0_36], %67 {strides = array<i32>} : memref<216x384xf32, #tpu.memory_space<vmem>>, vector<8x384xf32>,
    %c0_37 = arith.constant 0 : index
    %c0_38 = arith.constant 0 : index
    %c0_39 = arith.constant 0 : index
    %69 = vector.load %arg2[%c0_37, %c0_38, %c0_39] : memref<3x8x216xf32, #tpu.memory_space<vmem>>, vector<1x8x216xf32>
    %70 = vector.shape_cast %69 : vector<1x8x216xf32> to vector<8x216xf32>
    %c0_40 = arith.constant 0 : index
    %c0_41 = arith.constant 0 : index
    %71 = vector.load %arg9[%c0_40, %c0_41] : memref<216x384xf32, #tpu.memory_space<vmem>>, vector<216x384xf32>
    %cst = arith.constant dense<0.000000e+00> : vector<8x384xf32>
    %72 = tpu.matmul %70, %71, %cst {dimension_numbers = #tpu.dot_dimension_numbers<[1], [0], [0], [1], [0, 0, 1, 1], [], []>} : vector<8x216xf32>, vector<216x384xf32>, vector<8x384xf32> -> vector<8x384xf32>
    %c0_42 = arith.constant 0 : index
    %c0_43 = arith.constant 0 : index
    %73 = vector.load %arg3[%c0_42, %c0_43] : memref<8x1xf32, #tpu.memory_space<vmem>>, vector<8x1xf32>
    %74 = vector.broadcast %73 : vector<8x1xf32> to vector<8x384xf32>
    %75 = arith.addf %72, %74 : vector<8x384xf32>
    %cst_44 = arith.constant 5.000000e-01 : f32
    %76 = vector.broadcast %cst_44 : f32 to vector<8x384xf32>
    %77 = arith.mulf %76, %75 : vector<8x384xf32>
    %cst_45 = arith.constant 0.707106769 : f32
    %78 = vector.broadcast %cst_45 : f32 to vector<8x384xf32>
    %79 = arith.mulf %75, %78 : vector<8x384xf32>
    %80 = math.absf %79 : vector<8x384xf32>
    %cst_46 = arith.constant 0.327591091 : f32
    %81 = vector.broadcast %cst_46 : f32 to vector<8x384xf32>
    %82 = arith.mulf %81, %80 : vector<8x384xf32>
    %cst_47 = arith.constant 1.000000e+00 : f32
    %83 = vector.broadcast %cst_47 : f32 to vector<8x384xf32>
    %84 = arith.addf %83, %82 : vector<8x384xf32>
    %cst_48 = arith.constant 1.000000e+00 : f32
    %85 = vector.broadcast %cst_48 : f32 to vector<8x384xf32>
    %86 = arith.divf %85, %84 : vector<8x384xf32>
    %cst_49 = arith.constant 1.06140542 : f32
    %87 = vector.broadcast %cst_49 : f32 to vector<8x384xf32>
    %88 = arith.mulf %86, %87 : vector<8x384xf32>
    %cst_50 = arith.constant -1.45315206 : f32
    %89 = vector.broadcast %cst_50 : f32 to vector<8x384xf32>
    %90 = arith.addf %89, %88 : vector<8x384xf32>
    %91 = arith.mulf %86, %90 : vector<8x384xf32>
    %cst_51 = arith.constant 1.42141378 : f32
    %92 = vector.broadcast %cst_51 : f32 to vector<8x384xf32>
    %93 = arith.addf %92, %91 : vector<8x384xf32>
    %94 = arith.mulf %86, %93 : vector<8x384xf32>
    %cst_52 = arith.constant -0.284496725 : f32
    %95 = vector.broadcast %cst_52 : f32 to vector<8x384xf32>
    %96 = arith.addf %95, %94 : vector<8x384xf32>
    %97 = arith.mulf %86, %96 : vector<8x384xf32>
    %cst_53 = arith.constant 0.254829586 : f32
    %98 = vector.broadcast %cst_53 : f32 to vector<8x384xf32>
    %99 = arith.addf %98, %97 : vector<8x384xf32>
    %100 = arith.mulf %86, %99 : vector<8x384xf32>
    %cst_54 = arith.constant 0.000000e+00 : f32
    %101 = vector.broadcast %cst_54 : f32 to vector<8x384xf32>
    %102 = arith.subf %101, %80 : vector<8x384xf32>
    %103 = arith.mulf %102, %80 : vector<8x384xf32>
    %104 = math.exp %103 : vector<8x384xf32>
    %105 = arith.mulf %100, %104 : vector<8x384xf32>
    %cst_55 = arith.constant 1.000000e+00 : f32
    %106 = vector.broadcast %cst_55 : f32 to vector<8x384xf32>
    %107 = arith.subf %106, %105 : vector<8x384xf32>
    %cst_56 = arith.constant 0.000000e+00 : f32
    %108 = vector.broadcast %cst_56 : f32 to vector<8x384xf32>
    %109 = arith.cmpf oge, %79, %108 : vector<8x384xf32>
    %cst_57 = arith.constant 0.000000e+00 : f32
    %110 = vector.broadcast %cst_57 : f32 to vector<8x384xf32>
    %111 = arith.subf %110, %107 : vector<8x384xf32>
    %112 = arith.select %109, %107, %111 : vector<8x384xi1>, vector<8x384xf32>
    %cst_58 = arith.constant 1.000000e+00 : f32
    %113 = vector.broadcast %cst_58 : f32 to vector<8x384xf32>
    %114 = arith.addf %113, %112 : vector<8x384xf32>
    %115 = arith.mulf %77, %114 : vector<8x384xf32>
    %c0_59 = arith.constant 0 : index
    %c0_60 = arith.constant 0 : index
    %116 = vector.load %arg10[%c0_59, %c0_60] : memref<8x1536xf32, #tpu.memory_space<vmem>>, vector<8x384xf32>
    tpu.vector_store %arg10[%c0_59, %c0_60], %115 {strides = array<i32>} : memref<8x1536xf32, #tpu.memory_space<vmem>>, vector<8x384xf32>,
    %c0_61 = arith.constant 0 : index
    %c3 = arith.constant 3 : index
    %c0_62 = arith.constant 0 : index
    %c0_63 = arith.constant 0 : index
    %117 = vector.load %arg1[%c0_61, %c3, %c0_62, %c0_63] : memref<1x6x8x422xf32, #tpu.memory_space<vmem>>, vector<1x1x8x422xf32>
    %118 = vector.shape_cast %117 : vector<1x1x8x422xf32> to vector<8x422xf32>
    %119 = vector.extract_strided_slice %118 {offsets = [0, 0], sizes = [8, 386], strides = [1, 1]} : vector<8x422xf32> to vector<8x386xf32>
    %120 = vector.extract_strided_slice %119 {offsets = [0, 0], sizes = [8, 384], strides = [1, 1]} : vector<8x386xf32> to vector<8x384xf32>
    %c0_64 = arith.constant 0 : index
    %c0_65 = arith.constant 0 : index
    %121 = vector.load %arg9[%c0_64, %c0_65] : memref<216x384xf32, #tpu.memory_space<vmem>>, vector<8x384xf32>
    tpu.vector_store %arg9[%c0_64, %c0_65], %120 {strides = array<i32>} : memref<216x384xf32, #tpu.memory_space<vmem>>, vector<8x384xf32>,
    %122 = vector.extract_strided_slice %119 {offsets = [0, 1], sizes = [8, 384], strides = [1, 1]} : vector<8x386xf32> to vector<8x384xf32>
    %c8_66 = arith.constant 8 : index
    %c0_67 = arith.constant 0 : index
    %123 = vector.load %arg9[%c8_66, %c0_67] : memref<216x384xf32, #tpu.memory_space<vmem>>, vector<8x384xf32>
    tpu.vector_store %arg9[%c8_66, %c0_67], %122 {strides = array<i32>} : memref<216x384xf32, #tpu.memory_space<vmem>>, vector<8x384xf32>,
    %124 = vector.extract_strided_slice %119 {offsets = [0, 2], sizes = [8, 384], strides = [1, 1]} : vector<8x386xf32> to vector<8x384xf32>
    %c16_68 = arith.constant 16 : index
    %c0_69 = arith.constant 0 : index
    %125 = vector.load %arg9[%c16_68, %c0_69] : memref<216x384xf32, #tpu.memory_space<vmem>>, vector<8x384xf32>
    tpu.vector_store %arg9[%c16_68, %c0_69], %124 {strides = array<i32>} : memref<216x384xf32, #tpu.memory_space<vmem>>, vector<8x384xf32>,
    %126 = vector.extract_strided_slice %118 {offsets = [0, 18], sizes = [8, 386], strides = [1, 1]} : vector<8x422xf32> to vector<8x386xf32>
    %127 = vector.extract_strided_slice %126 {offsets = [0, 0], sizes = [8, 384], strides = [1, 1]} : vector<8x386xf32> to vector<8x384xf32>
    %c24_70 = arith.constant 24 : index
    %c0_71 = arith.constant 0 : index
    %128 = vector.load %arg9[%c24_70, %c0_71] : memref<216x384xf32, #tpu.memory_space<vmem>>, vector<8x384xf32>
    tpu.vector_store %arg9[%c24_70, %c0_71], %127 {strides = array<i32>} : memref<216x384xf32, #tpu.memory_space<vmem>>, vector<8x384xf32>,
    %129 = vector.extract_strided_slice %126 {offsets = [0, 1], sizes = [8, 384], strides = [1, 1]} : vector<8x386xf32> to vector<8x384xf32>
    %c32_72 = arith.constant 32 : index
    %c0_73 = arith.constant 0 : index
    %130 = vector.load %arg9[%c32_72, %c0_73] : memref<216x384xf32, #tpu.memory_space<vmem>>, vector<8x384xf32>
    tpu.vector_store %arg9[%c32_72, %c0_73], %129 {strides = array<i32>} : memref<216x384xf32, #tpu.memory_space<vmem>>, vector<8x384xf32>,
    %131 = vector.extract_strided_slice %126 {offsets = [0, 2], sizes = [8, 384], strides = [1, 1]} : vector<8x386xf32> to vector<8x384xf32>
    %c40_74 = arith.constant 40 : index
    %c0_75 = arith.constant 0 : index
    %132 = vector.load %arg9[%c40_74, %c0_75] : memref<216x384xf32, #tpu.memory_space<vmem>>, vector<8x384xf32>
    tpu.vector_store %arg9[%c40_74, %c0_75], %131 {strides = array<i32>} : memref<216x384xf32, #tpu.memory_space<vmem>>, vector<8x384xf32>,
    %133 = vector.extract_strided_slice %118 {offsets = [0, 36], sizes = [8, 386], strides = [1, 1]} : vector<8x422xf32> to vector<8x386xf32>
    %134 = vector.extract_strided_slice %133 {offsets = [0, 0], sizes = [8, 384], strides = [1, 1]} : vector<8x386xf32> to vector<8x384xf32>
    %c48_76 = arith.constant 48 : index
    %c0_77 = arith.constant 0 : index
    %135 = vector.load %arg9[%c48_76, %c0_77] : memref<216x384xf32, #tpu.memory_space<vmem>>, vector<8x384xf32>
    tpu.vector_store %arg9[%c48_76, %c0_77], %134 {strides = array<i32>} : memref<216x384xf32, #tpu.memory_space<vmem>>, vector<8x384xf32>,
    %136 = vector.extract_strided_slice %133 {offsets = [0, 1], sizes = [8, 384], strides = [1, 1]} : vector<8x386xf32> to vector<8x384xf32>
    %c56_78 = arith.constant 56 : index
    %c0_79 = arith.constant 0 : index
    %137 = vector.load %arg9[%c56_78, %c0_79] : memref<216x384xf32, #tpu.memory_space<vmem>>, vector<8x384xf32>
    tpu.vector_store %arg9[%c56_78, %c0_79], %136 {strides = array<i32>} : memref<216x384xf32, #tpu.memory_space<vmem>>, vector<8x384xf32>,
    %138 = vector.extract_strided_slice %133 {offsets = [0, 2], sizes = [8, 384], strides = [1, 1]} : vector<8x386xf32> to vector<8x384xf32>
    %c64_80 = arith.constant 64 : index
    %c0_81 = arith.constant 0 : index
    %139 = vector.load %arg9[%c64_80, %c0_81] : memref<216x384xf32, #tpu.memory_space<vmem>>, vector<8x384xf32>
    tpu.vector_store %arg9[%c64_80, %c0_81], %138 {strides = array<i32>} : memref<216x384xf32, #tpu.memory_space<vmem>>, vector<8x384xf32>,
    %c1_82 = arith.constant 1 : index
    %c0_83 = arith.constant 0 : index
    %c0_84 = arith.constant 0 : index
    %140 = vector.load %arg2[%c1_82, %c0_83, %c0_84] : memref<3x8x216xf32, #tpu.memory_space<vmem>>, vector<1x8x216xf32>
    %141 = vector.shape_cast %140 : vector<1x8x216xf32> to vector<8x216xf32>
    %c0_85 = arith.constant 0 : index
    %c0_86 = arith.constant 0 : index
    %142 = vector.load %arg9[%c0_85, %c0_86] : memref<216x384xf32, #tpu.memory_space<vmem>>, vector<216x384xf32>
    %cst_87 = arith.constant dense<0.000000e+00> : vector<8x384xf32>
    %143 = tpu.matmul %141, %142, %cst_87 {dimension_numbers = #tpu.dot_dimension_numbers<[1], [0], [0], [1], [0, 0, 1, 1], [], []>} : vector<8x216xf32>, vector<216x384xf32>, vector<8x384xf32> -> vector<8x384xf32>
    %c0_88 = arith.constant 0 : index
    %c0_89 = arith.constant 0 : index
    %144 = vector.load %arg3[%c0_88, %c0_89] : memref<8x1xf32, #tpu.memory_space<vmem>>, vector<8x1xf32>
    %145 = vector.broadcast %144 : vector<8x1xf32> to vector<8x384xf32>
    %146 = arith.addf %143, %145 : vector<8x384xf32>
    %cst_90 = arith.constant 5.000000e-01 : f32
    %147 = vector.broadcast %cst_90 : f32 to vector<8x384xf32>
    %148 = arith.mulf %147, %146 : vector<8x384xf32>
    %cst_91 = arith.constant 0.707106769 : f32
    %149 = vector.broadcast %cst_91 : f32 to vector<8x384xf32>
    %150 = arith.mulf %146, %149 : vector<8x384xf32>
    %151 = math.absf %150 : vector<8x384xf32>
    %cst_92 = arith.constant 0.327591091 : f32
    %152 = vector.broadcast %cst_92 : f32 to vector<8x384xf32>
    %153 = arith.mulf %152, %151 : vector<8x384xf32>
    %cst_93 = arith.constant 1.000000e+00 : f32
    %154 = vector.broadcast %cst_93 : f32 to vector<8x384xf32>
    %155 = arith.addf %154, %153 : vector<8x384xf32>
    %cst_94 = arith.constant 1.000000e+00 : f32
    %156 = vector.broadcast %cst_94 : f32 to vector<8x384xf32>
    %157 = arith.divf %156, %155 : vector<8x384xf32>
    %cst_95 = arith.constant 1.06140542 : f32
    %158 = vector.broadcast %cst_95 : f32 to vector<8x384xf32>
    %159 = arith.mulf %157, %158 : vector<8x384xf32>
    %cst_96 = arith.constant -1.45315206 : f32
    %160 = vector.broadcast %cst_96 : f32 to vector<8x384xf32>
    %161 = arith.addf %160, %159 : vector<8x384xf32>
    %162 = arith.mulf %157, %161 : vector<8x384xf32>
    %cst_97 = arith.constant 1.42141378 : f32
    %163 = vector.broadcast %cst_97 : f32 to vector<8x384xf32>
    %164 = arith.addf %163, %162 : vector<8x384xf32>
    %165 = arith.mulf %157, %164 : vector<8x384xf32>
    %cst_98 = arith.constant -0.284496725 : f32
    %166 = vector.broadcast %cst_98 : f32 to vector<8x384xf32>
    %167 = arith.addf %166, %165 : vector<8x384xf32>
    %168 = arith.mulf %157, %167 : vector<8x384xf32>
    %cst_99 = arith.constant 0.254829586 : f32
    %169 = vector.broadcast %cst_99 : f32 to vector<8x384xf32>
    %170 = arith.addf %169, %168 : vector<8x384xf32>
    %171 = arith.mulf %157, %170 : vector<8x384xf32>
    %cst_100 = arith.constant 0.000000e+00 : f32
    %172 = vector.broadcast %cst_100 : f32 to vector<8x384xf32>
    %173 = arith.subf %172, %151 : vector<8x384xf32>
    %174 = arith.mulf %173, %151 : vector<8x384xf32>
    %175 = math.exp %174 : vector<8x384xf32>
    %176 = arith.mulf %171, %175 : vector<8x384xf32>
    %cst_101 = arith.constant 1.000000e+00 : f32
    %177 = vector.broadcast %cst_101 : f32 to vector<8x384xf32>
    %178 = arith.subf %177, %176 : vector<8x384xf32>
    %cst_102 = arith.constant 0.000000e+00 : f32
    %179 = vector.broadcast %cst_102 : f32 to vector<8x384xf32>
    %180 = arith.cmpf oge, %150, %179 : vector<8x384xf32>
    %cst_103 = arith.constant 0.000000e+00 : f32
    %181 = vector.broadcast %cst_103 : f32 to vector<8x384xf32>
    %182 = arith.subf %181, %178 : vector<8x384xf32>
    %183 = arith.select %180, %178, %182 : vector<8x384xi1>, vector<8x384xf32>
    %cst_104 = arith.constant 1.000000e+00 : f32
    %184 = vector.broadcast %cst_104 : f32 to vector<8x384xf32>
    %185 = arith.addf %184, %183 : vector<8x384xf32>
    %186 = arith.mulf %148, %185 : vector<8x384xf32>
    %c0_105 = arith.constant 0 : index
    %c384 = arith.constant 384 : index
    %187 = vector.load %arg10[%c0_105, %c384] : memref<8x1536xf32, #tpu.memory_space<vmem>>, vector<8x384xf32>
    tpu.vector_store %arg10[%c0_105, %c384], %186 {strides = array<i32>} : memref<8x1536xf32, #tpu.memory_space<vmem>>, vector<8x384xf32>,
    %c0_106 = arith.constant 0 : index
    %c4 = arith.constant 4 : index
    %c0_107 = arith.constant 0 : index
    %c0_108 = arith.constant 0 : index
    %188 = vector.load %arg1[%c0_106, %c4, %c0_107, %c0_108] : memref<1x6x8x422xf32, #tpu.memory_space<vmem>>, vector<1x1x8x422xf32>
    %189 = vector.shape_cast %188 : vector<1x1x8x422xf32> to vector<8x422xf32>
    %190 = vector.extract_strided_slice %189 {offsets = [0, 0], sizes = [8, 386], strides = [1, 1]} : vector<8x422xf32> to vector<8x386xf32>
    %191 = vector.extract_strided_slice %190 {offsets = [0, 0], sizes = [8, 384], strides = [1, 1]} : vector<8x386xf32> to vector<8x384xf32>
    %c72_109 = arith.constant 72 : index
    %c0_110 = arith.constant 0 : index
    %192 = vector.load %arg9[%c72_109, %c0_110] : memref<216x384xf32, #tpu.memory_space<vmem>>, vector<8x384xf32>
    tpu.vector_store %arg9[%c72_109, %c0_110], %191 {strides = array<i32>} : memref<216x384xf32, #tpu.memory_space<vmem>>, vector<8x384xf32>,
    %193 = vector.extract_strided_slice %190 {offsets = [0, 1], sizes = [8, 384], strides = [1, 1]} : vector<8x386xf32> to vector<8x384xf32>
    %c80_111 = arith.constant 80 : index
    %c0_112 = arith.constant 0 : index
    %194 = vector.load %arg9[%c80_111, %c0_112] : memref<216x384xf32, #tpu.memory_space<vmem>>, vector<8x384xf32>
    tpu.vector_store %arg9[%c80_111, %c0_112], %193 {strides = array<i32>} : memref<216x384xf32, #tpu.memory_space<vmem>>, vector<8x384xf32>,
    %195 = vector.extract_strided_slice %190 {offsets = [0, 2], sizes = [8, 384], strides = [1, 1]} : vector<8x386xf32> to vector<8x384xf32>
    %c88_113 = arith.constant 88 : index
    %c0_114 = arith.constant 0 : index
    %196 = vector.load %arg9[%c88_113, %c0_114] : memref<216x384xf32, #tpu.memory_space<vmem>>, vector<8x384xf32>
    tpu.vector_store %arg9[%c88_113, %c0_114], %195 {strides = array<i32>} : memref<216x384xf32, #tpu.memory_space<vmem>>, vector<8x384xf32>,
    %197 = vector.extract_strided_slice %189 {offsets = [0, 18], sizes = [8, 386], strides = [1, 1]} : vector<8x422xf32> to vector<8x386xf32>
    %198 = vector.extract_strided_slice %197 {offsets = [0, 0], sizes = [8, 384], strides = [1, 1]} : vector<8x386xf32> to vector<8x384xf32>
    %c96_115 = arith.constant 96 : index
    %c0_116 = arith.constant 0 : index
    %199 = vector.load %arg9[%c96_115, %c0_116] : memref<216x384xf32, #tpu.memory_space<vmem>>, vector<8x384xf32>
    tpu.vector_store %arg9[%c96_115, %c0_116], %198 {strides = array<i32>} : memref<216x384xf32, #tpu.memory_space<vmem>>, vector<8x384xf32>,
    %200 = vector.extract_strided_slice %197 {offsets = [0, 1], sizes = [8, 384], strides = [1, 1]} : vector<8x386xf32> to vector<8x384xf32>
    %c104_117 = arith.constant 104 : index
    %c0_118 = arith.constant 0 : index
    %201 = vector.load %arg9[%c104_117, %c0_118] : memref<216x384xf32, #tpu.memory_space<vmem>>, vector<8x384xf32>
    tpu.vector_store %arg9[%c104_117, %c0_118], %200 {strides = array<i32>} : memref<216x384xf32, #tpu.memory_space<vmem>>, vector<8x384xf32>,
    %202 = vector.extract_strided_slice %197 {offsets = [0, 2], sizes = [8, 384], strides = [1, 1]} : vector<8x386xf32> to vector<8x384xf32>
    %c112_119 = arith.constant 112 : index
    %c0_120 = arith.constant 0 : index
    %203 = vector.load %arg9[%c112_119, %c0_120] : memref<216x384xf32, #tpu.memory_space<vmem>>, vector<8x384xf32>
    tpu.vector_store %arg9[%c112_119, %c0_120], %202 {strides = array<i32>} : memref<216x384xf32, #tpu.memory_space<vmem>>, vector<8x384xf32>,
    %204 = vector.extract_strided_slice %189 {offsets = [0, 36], sizes = [8, 386], strides = [1, 1]} : vector<8x422xf32> to vector<8x386xf32>
    %205 = vector.extract_strided_slice %204 {offsets = [0, 0], sizes = [8, 384], strides = [1, 1]} : vector<8x386xf32> to vector<8x384xf32>
    %c120_121 = arith.constant 120 : index
    %c0_122 = arith.constant 0 : index
    %206 = vector.load %arg9[%c120_121, %c0_122] : memref<216x384xf32, #tpu.memory_space<vmem>>, vector<8x384xf32>
    tpu.vector_store %arg9[%c120_121, %c0_122], %205 {strides = array<i32>} : memref<216x384xf32, #tpu.memory_space<vmem>>, vector<8x384xf32>,
    %207 = vector.extract_strided_slice %204 {offsets = [0, 1], sizes = [8, 384], strides = [1, 1]} : vector<8x386xf32> to vector<8x384xf32>
    %c128_123 = arith.constant 128 : index
    %c0_124 = arith.constant 0 : index
    %208 = vector.load %arg9[%c128_123, %c0_124] : memref<216x384xf32, #tpu.memory_space<vmem>>, vector<8x384xf32>
    tpu.vector_store %arg9[%c128_123, %c0_124], %207 {strides = array<i32>} : memref<216x384xf32, #tpu.memory_space<vmem>>, vector<8x384xf32>,
    %209 = vector.extract_strided_slice %204 {offsets = [0, 2], sizes = [8, 384], strides = [1, 1]} : vector<8x386xf32> to vector<8x384xf32>
    %c136_125 = arith.constant 136 : index
    %c0_126 = arith.constant 0 : index
    %210 = vector.load %arg9[%c136_125, %c0_126] : memref<216x384xf32, #tpu.memory_space<vmem>>, vector<8x384xf32>
    tpu.vector_store %arg9[%c136_125, %c0_126], %209 {strides = array<i32>} : memref<216x384xf32, #tpu.memory_space<vmem>>, vector<8x384xf32>,
    %c2_127 = arith.constant 2 : index
    %c0_128 = arith.constant 0 : index
    %c0_129 = arith.constant 0 : index
    %211 = vector.load %arg2[%c2_127, %c0_128, %c0_129] : memref<3x8x216xf32, #tpu.memory_space<vmem>>, vector<1x8x216xf32>
    %212 = vector.shape_cast %211 : vector<1x8x216xf32> to vector<8x216xf32>
    %c0_130 = arith.constant 0 : index
    %c0_131 = arith.constant 0 : index
    %213 = vector.load %arg9[%c0_130, %c0_131] : memref<216x384xf32, #tpu.memory_space<vmem>>, vector<216x384xf32>
    %cst_132 = arith.constant dense<0.000000e+00> : vector<8x384xf32>
    %214 = tpu.matmul %212, %213, %cst_132 {dimension_numbers = #tpu.dot_dimension_numbers<[1], [0], [0], [1], [0, 0, 1, 1], [], []>} : vector<8x216xf32>, vector<216x384xf32>, vector<8x384xf32> -> vector<8x384xf32>
    %c0_133 = arith.constant 0 : index
    %c0_134 = arith.constant 0 : index
    %215 = vector.load %arg3[%c0_133, %c0_134] : memref<8x1xf32, #tpu.memory_space<vmem>>, vector<8x1xf32>
    %216 = vector.broadcast %215 : vector<8x1xf32> to vector<8x384xf32>
    %217 = arith.addf %214, %216 : vector<8x384xf32>
    %cst_135 = arith.constant 5.000000e-01 : f32
    %218 = vector.broadcast %cst_135 : f32 to vector<8x384xf32>
    %219 = arith.mulf %218, %217 : vector<8x384xf32>
    %cst_136 = arith.constant 0.707106769 : f32
    %220 = vector.broadcast %cst_136 : f32 to vector<8x384xf32>
    %221 = arith.mulf %217, %220 : vector<8x384xf32>
    %222 = math.absf %221 : vector<8x384xf32>
    %cst_137 = arith.constant 0.327591091 : f32
    %223 = vector.broadcast %cst_137 : f32 to vector<8x384xf32>
    %224 = arith.mulf %223, %222 : vector<8x384xf32>
    %cst_138 = arith.constant 1.000000e+00 : f32
    %225 = vector.broadcast %cst_138 : f32 to vector<8x384xf32>
    %226 = arith.addf %225, %224 : vector<8x384xf32>
    %cst_139 = arith.constant 1.000000e+00 : f32
    %227 = vector.broadcast %cst_139 : f32 to vector<8x384xf32>
    %228 = arith.divf %227, %226 : vector<8x384xf32>
    %cst_140 = arith.constant 1.06140542 : f32
    %229 = vector.broadcast %cst_140 : f32 to vector<8x384xf32>
    %230 = arith.mulf %228, %229 : vector<8x384xf32>
    %cst_141 = arith.constant -1.45315206 : f32
    %231 = vector.broadcast %cst_141 : f32 to vector<8x384xf32>
    %232 = arith.addf %231, %230 : vector<8x384xf32>
    %233 = arith.mulf %228, %232 : vector<8x384xf32>
    %cst_142 = arith.constant 1.42141378 : f32
    %234 = vector.broadcast %cst_142 : f32 to vector<8x384xf32>
    %235 = arith.addf %234, %233 : vector<8x384xf32>
    %236 = arith.mulf %228, %235 : vector<8x384xf32>
    %cst_143 = arith.constant -0.284496725 : f32
    %237 = vector.broadcast %cst_143 : f32 to vector<8x384xf32>
    %238 = arith.addf %237, %236 : vector<8x384xf32>
    %239 = arith.mulf %228, %238 : vector<8x384xf32>
    %cst_144 = arith.constant 0.254829586 : f32
    %240 = vector.broadcast %cst_144 : f32 to vector<8x384xf32>
    %241 = arith.addf %240, %239 : vector<8x384xf32>
    %242 = arith.mulf %228, %241 : vector<8x384xf32>
    %cst_145 = arith.constant 0.000000e+00 : f32
    %243 = vector.broadcast %cst_145 : f32 to vector<8x384xf32>
    %244 = arith.subf %243, %222 : vector<8x384xf32>
    %245 = arith.mulf %244, %222 : vector<8x384xf32>
    %246 = math.exp %245 : vector<8x384xf32>
    %247 = arith.mulf %242, %246 : vector<8x384xf32>
    %cst_146 = arith.constant 1.000000e+00 : f32
    %248 = vector.broadcast %cst_146 : f32 to vector<8x384xf32>
    %249 = arith.subf %248, %247 : vector<8x384xf32>
    %cst_147 = arith.constant 0.000000e+00 : f32
    %250 = vector.broadcast %cst_147 : f32 to vector<8x384xf32>
    %251 = arith.cmpf oge, %221, %250 : vector<8x384xf32>
    %cst_148 = arith.constant 0.000000e+00 : f32
    %252 = vector.broadcast %cst_148 : f32 to vector<8x384xf32>
    %253 = arith.subf %252, %249 : vector<8x384xf32>
    %254 = arith.select %251, %249, %253 : vector<8x384xi1>, vector<8x384xf32>
    %cst_149 = arith.constant 1.000000e+00 : f32
    %255 = vector.broadcast %cst_149 : f32 to vector<8x384xf32>
    %256 = arith.addf %255, %254 : vector<8x384xf32>
    %257 = arith.mulf %219, %256 : vector<8x384xf32>
    %c0_150 = arith.constant 0 : index
    %c768 = arith.constant 768 : index
    %258 = vector.load %arg10[%c0_150, %c768] : memref<8x1536xf32, #tpu.memory_space<vmem>>, vector<8x384xf32>
    tpu.vector_store %arg10[%c0_150, %c768], %257 {strides = array<i32>} : memref<8x1536xf32, #tpu.memory_space<vmem>>, vector<8x384xf32>,
    %c0_151 = arith.constant 0 : index
    %c5 = arith.constant 5 : index
    %c0_152 = arith.constant 0 : index
    %c0_153 = arith.constant 0 : index
    %259 = vector.load %arg1[%c0_151, %c5, %c0_152, %c0_153] : memref<1x6x8x422xf32, #tpu.memory_space<vmem>>, vector<1x1x8x422xf32>
    %260 = vector.shape_cast %259 : vector<1x1x8x422xf32> to vector<8x422xf32>
    %261 = vector.extract_strided_slice %260 {offsets = [0, 0], sizes = [8, 386], strides = [1, 1]} : vector<8x422xf32> to vector<8x386xf32>
    %262 = vector.extract_strided_slice %261 {offsets = [0, 0], sizes = [8, 384], strides = [1, 1]} : vector<8x386xf32> to vector<8x384xf32>
    %c144_154 = arith.constant 144 : index
    %c0_155 = arith.constant 0 : index
    %263 = vector.load %arg9[%c144_154, %c0_155] : memref<216x384xf32, #tpu.memory_space<vmem>>, vector<8x384xf32>
    tpu.vector_store %arg9[%c144_154, %c0_155], %262 {strides = array<i32>} : memref<216x384xf32, #tpu.memory_space<vmem>>, vector<8x384xf32>,
    %264 = vector.extract_strided_slice %261 {offsets = [0, 1], sizes = [8, 384], strides = [1, 1]} : vector<8x386xf32> to vector<8x384xf32>
    %c152_156 = arith.constant 152 : index
    %c0_157 = arith.constant 0 : index
    %265 = vector.load %arg9[%c152_156, %c0_157] : memref<216x384xf32, #tpu.memory_space<vmem>>, vector<8x384xf32>
    tpu.vector_store %arg9[%c152_156, %c0_157], %264 {strides = array<i32>} : memref<216x384xf32, #tpu.memory_space<vmem>>, vector<8x384xf32>,
    %266 = vector.extract_strided_slice %261 {offsets = [0, 2], sizes = [8, 384], strides = [1, 1]} : vector<8x386xf32> to vector<8x384xf32>
    %c160_158 = arith.constant 160 : index
    %c0_159 = arith.constant 0 : index
    %267 = vector.load %arg9[%c160_158, %c0_159] : memref<216x384xf32, #tpu.memory_space<vmem>>, vector<8x384xf32>
    tpu.vector_store %arg9[%c160_158, %c0_159], %266 {strides = array<i32>} : memref<216x384xf32, #tpu.memory_space<vmem>>, vector<8x384xf32>,
    %268 = vector.extract_strided_slice %260 {offsets = [0, 18], sizes = [8, 386], strides = [1, 1]} : vector<8x422xf32> to vector<8x386xf32>
    %269 = vector.extract_strided_slice %268 {offsets = [0, 0], sizes = [8, 384], strides = [1, 1]} : vector<8x386xf32> to vector<8x384xf32>
    %c168_160 = arith.constant 168 : index
    %c0_161 = arith.constant 0 : index
    %270 = vector.load %arg9[%c168_160, %c0_161] : memref<216x384xf32, #tpu.memory_space<vmem>>, vector<8x384xf32>
    tpu.vector_store %arg9[%c168_160, %c0_161], %269 {strides = array<i32>} : memref<216x384xf32, #tpu.memory_space<vmem>>, vector<8x384xf32>,
    %271 = vector.extract_strided_slice %268 {offsets = [0, 1], sizes = [8, 384], strides = [1, 1]} : vector<8x386xf32> to vector<8x384xf32>
    %c176_162 = arith.constant 176 : index
    %c0_163 = arith.constant 0 : index
    %272 = vector.load %arg9[%c176_162, %c0_163] : memref<216x384xf32, #tpu.memory_space<vmem>>, vector<8x384xf32>
    tpu.vector_store %arg9[%c176_162, %c0_163], %271 {strides = array<i32>} : memref<216x384xf32, #tpu.memory_space<vmem>>, vector<8x384xf32>,
    %273 = vector.extract_strided_slice %268 {offsets = [0, 2], sizes = [8, 384], strides = [1, 1]} : vector<8x386xf32> to vector<8x384xf32>
    %c184_164 = arith.constant 184 : index
    %c0_165 = arith.constant 0 : index
    %274 = vector.load %arg9[%c184_164, %c0_165] : memref<216x384xf32, #tpu.memory_space<vmem>>, vector<8x384xf32>
    tpu.vector_store %arg9[%c184_164, %c0_165], %273 {strides = array<i32>} : memref<216x384xf32, #tpu.memory_space<vmem>>, vector<8x384xf32>,
    %275 = vector.extract_strided_slice %260 {offsets = [0, 36], sizes = [8, 386], strides = [1, 1]} : vector<8x422xf32> to vector<8x386xf32>
    %276 = vector.extract_strided_slice %275 {offsets = [0, 0], sizes = [8, 384], strides = [1, 1]} : vector<8x386xf32> to vector<8x384xf32>
    %c192_166 = arith.constant 192 : index
    %c0_167 = arith.constant 0 : index
    %277 = vector.load %arg9[%c192_166, %c0_167] : memref<216x384xf32, #tpu.memory_space<vmem>>, vector<8x384xf32>
    tpu.vector_store %arg9[%c192_166, %c0_167], %276 {strides = array<i32>} : memref<216x384xf32, #tpu.memory_space<vmem>>, vector<8x384xf32>,
    %278 = vector.extract_strided_slice %275 {offsets = [0, 1], sizes = [8, 384], strides = [1, 1]} : vector<8x386xf32> to vector<8x384xf32>
    %c200_168 = arith.constant 200 : index
    %c0_169 = arith.constant 0 : index
    %279 = vector.load %arg9[%c200_168, %c0_169] : memref<216x384xf32, #tpu.memory_space<vmem>>, vector<8x384xf32>
    tpu.vector_store %arg9[%c200_168, %c0_169], %278 {strides = array<i32>} : memref<216x384xf32, #tpu.memory_space<vmem>>, vector<8x384xf32>,
    %280 = vector.extract_strided_slice %275 {offsets = [0, 2], sizes = [8, 384], strides = [1, 1]} : vector<8x386xf32> to vector<8x384xf32>
    %c208_170 = arith.constant 208 : index
    %c0_171 = arith.constant 0 : index
    %281 = vector.load %arg9[%c208_170, %c0_171] : memref<216x384xf32, #tpu.memory_space<vmem>>, vector<8x384xf32>
    tpu.vector_store %arg9[%c208_170, %c0_171], %280 {strides = array<i32>} : memref<216x384xf32, #tpu.memory_space<vmem>>, vector<8x384xf32>,
    %c0_172 = arith.constant 0 : index
    %c0_173 = arith.constant 0 : index
    %c0_174 = arith.constant 0 : index
    %282 = vector.load %arg2[%c0_172, %c0_173, %c0_174] : memref<3x8x216xf32, #tpu.memory_space<vmem>>, vector<1x8x216xf32>
    %283 = vector.shape_cast %282 : vector<1x8x216xf32> to vector<8x216xf32>
    %c0_175 = arith.constant 0 : index
    %c0_176 = arith.constant 0 : index
    %284 = vector.load %arg9[%c0_175, %c0_176] : memref<216x384xf32, #tpu.memory_space<vmem>>, vector<216x384xf32>
    %cst_177 = arith.constant dense<0.000000e+00> : vector<8x384xf32>
    %285 = tpu.matmul %283, %284, %cst_177 {dimension_numbers = #tpu.dot_dimension_numbers<[1], [0], [0], [1], [0, 0, 1, 1], [], []>} : vector<8x216xf32>, vector<216x384xf32>, vector<8x384xf32> -> vector<8x384xf32>
    %c0_178 = arith.constant 0 : index
    %c0_179 = arith.constant 0 : index
    %286 = vector.load %arg3[%c0_178, %c0_179] : memref<8x1xf32, #tpu.memory_space<vmem>>, vector<8x1xf32>
    %287 = vector.broadcast %286 : vector<8x1xf32> to vector<8x384xf32>
    %288 = arith.addf %285, %287 : vector<8x384xf32>
    %cst_180 = arith.constant 5.000000e-01 : f32
    %289 = vector.broadcast %cst_180 : f32 to vector<8x384xf32>
    %290 = arith.mulf %289, %288 : vector<8x384xf32>
    %cst_181 = arith.constant 0.707106769 : f32
    %291 = vector.broadcast %cst_181 : f32 to vector<8x384xf32>
    %292 = arith.mulf %288, %291 : vector<8x384xf32>
    %293 = math.absf %292 : vector<8x384xf32>
    %cst_182 = arith.constant 0.327591091 : f32
    %294 = vector.broadcast %cst_182 : f32 to vector<8x384xf32>
    %295 = arith.mulf %294, %293 : vector<8x384xf32>
    %cst_183 = arith.constant 1.000000e+00 : f32
    %296 = vector.broadcast %cst_183 : f32 to vector<8x384xf32>
    %297 = arith.addf %296, %295 : vector<8x384xf32>
    %cst_184 = arith.constant 1.000000e+00 : f32
    %298 = vector.broadcast %cst_184 : f32 to vector<8x384xf32>
    %299 = arith.divf %298, %297 : vector<8x384xf32>
    %cst_185 = arith.constant 1.06140542 : f32
    %300 = vector.broadcast %cst_185 : f32 to vector<8x384xf32>
    %301 = arith.mulf %299, %300 : vector<8x384xf32>
    %cst_186 = arith.constant -1.45315206 : f32
    %302 = vector.broadcast %cst_186 : f32 to vector<8x384xf32>
    %303 = arith.addf %302, %301 : vector<8x384xf32>
    %304 = arith.mulf %299, %303 : vector<8x384xf32>
    %cst_187 = arith.constant 1.42141378 : f32
    %305 = vector.broadcast %cst_187 : f32 to vector<8x384xf32>
    %306 = arith.addf %305, %304 : vector<8x384xf32>
    %307 = arith.mulf %299, %306 : vector<8x384xf32>
    %cst_188 = arith.constant -0.284496725 : f32
    %308 = vector.broadcast %cst_188 : f32 to vector<8x384xf32>
    %309 = arith.addf %308, %307 : vector<8x384xf32>
    %310 = arith.mulf %299, %309 : vector<8x384xf32>
    %cst_189 = arith.constant 0.254829586 : f32
    %311 = vector.broadcast %cst_189 : f32 to vector<8x384xf32>
    %312 = arith.addf %311, %310 : vector<8x384xf32>
    %313 = arith.mulf %299, %312 : vector<8x384xf32>
    %cst_190 = arith.constant 0.000000e+00 : f32
    %314 = vector.broadcast %cst_190 : f32 to vector<8x384xf32>
    %315 = arith.subf %314, %293 : vector<8x384xf32>
    %316 = arith.mulf %315, %293 : vector<8x384xf32>
    %317 = math.exp %316 : vector<8x384xf32>
    %318 = arith.mulf %313, %317 : vector<8x384xf32>
    %cst_191 = arith.constant 1.000000e+00 : f32
    %319 = vector.broadcast %cst_191 : f32 to vector<8x384xf32>
    %320 = arith.subf %319, %318 : vector<8x384xf32>
    %cst_192 = arith.constant 0.000000e+00 : f32
    %321 = vector.broadcast %cst_192 : f32 to vector<8x384xf32>
    %322 = arith.cmpf oge, %292, %321 : vector<8x384xf32>
    %cst_193 = arith.constant 0.000000e+00 : f32
    %323 = vector.broadcast %cst_193 : f32 to vector<8x384xf32>
    %324 = arith.subf %323, %320 : vector<8x384xf32>
    %325 = arith.select %322, %320, %324 : vector<8x384xi1>, vector<8x384xf32>
    %cst_194 = arith.constant 1.000000e+00 : f32
    %326 = vector.broadcast %cst_194 : f32 to vector<8x384xf32>
    %327 = arith.addf %326, %325 : vector<8x384xf32>
    %328 = arith.mulf %290, %327 : vector<8x384xf32>
    %c0_195 = arith.constant 0 : index
    %c1152 = arith.constant 1152 : index
    %329 = vector.load %arg10[%c0_195, %c1152] : memref<8x1536xf32, #tpu.memory_space<vmem>>, vector<8x384xf32>
    tpu.vector_store %arg10[%c0_195, %c1152], %328 {strides = array<i32>} : memref<8x1536xf32, #tpu.memory_space<vmem>>, vector<8x384xf32>,
    %c0_196 = arith.constant 0 : index
    %c0_197 = arith.constant 0 : index
    %330 = vector.load %arg10[%c0_196, %c0_197] : memref<8x1536xf32, #tpu.memory_space<vmem>>, vector<8x1536xf32>
    %c0_198 = arith.constant 0 : index
    %c0_199 = arith.constant 0 : index
    %331 = vector.load %arg4[%c0_198, %c0_199] : memref<16x8xf32, #tpu.memory_space<vmem>>, vector<16x8xf32>
    %cst_200 = arith.constant dense<0.000000e+00> : vector<16x1536xf32>
    %332 = tpu.matmul %331, %330, %cst_200 {dimension_numbers = #tpu.dot_dimension_numbers<[1], [0], [0], [1], [0, 0, 1, 1], [], []>} : vector<16x8xf32>, vector<8x1536xf32>, vector<16x1536xf32> -> vector<16x1536xf32>
    %c0_201 = arith.constant 0 : index
    %c0_202 = arith.constant 0 : index
    %333 = vector.load %arg5[%c0_201, %c0_202] : memref<16x1xf32, #tpu.memory_space<vmem>>, vector<16x1xf32>
    %334 = vector.broadcast %333 : vector<16x1xf32> to vector<16x1536xf32>
    %335 = arith.addf %332, %334 : vector<16x1536xf32>
    %cst_203 = arith.constant 5.000000e-01 : f32
    %336 = vector.broadcast %cst_203 : f32 to vector<16x1536xf32>
    %337 = arith.mulf %336, %335 : vector<16x1536xf32>
    %cst_204 = arith.constant 0.707106769 : f32
    %338 = vector.broadcast %cst_204 : f32 to vector<16x1536xf32>
    %339 = arith.mulf %335, %338 : vector<16x1536xf32>
    %340 = math.absf %339 : vector<16x1536xf32>
    %cst_205 = arith.constant 0.327591091 : f32
    %341 = vector.broadcast %cst_205 : f32 to vector<16x1536xf32>
    %342 = arith.mulf %341, %340 : vector<16x1536xf32>
    %cst_206 = arith.constant 1.000000e+00 : f32
    %343 = vector.broadcast %cst_206 : f32 to vector<16x1536xf32>
    %344 = arith.addf %343, %342 : vector<16x1536xf32>
    %cst_207 = arith.constant 1.000000e+00 : f32
    %345 = vector.broadcast %cst_207 : f32 to vector<16x1536xf32>
    %346 = arith.divf %345, %344 : vector<16x1536xf32>
    %cst_208 = arith.constant 1.06140542 : f32
    %347 = vector.broadcast %cst_208 : f32 to vector<16x1536xf32>
    %348 = arith.mulf %346, %347 : vector<16x1536xf32>
    %cst_209 = arith.constant -1.45315206 : f32
    %349 = vector.broadcast %cst_209 : f32 to vector<16x1536xf32>
    %350 = arith.addf %349, %348 : vector<16x1536xf32>
    %351 = arith.mulf %346, %350 : vector<16x1536xf32>
    %cst_210 = arith.constant 1.42141378 : f32
    %352 = vector.broadcast %cst_210 : f32 to vector<16x1536xf32>
    %353 = arith.addf %352, %351 : vector<16x1536xf32>
    %354 = arith.mulf %346, %353 : vector<16x1536xf32>
    %cst_211 = arith.constant -0.284496725 : f32
    %355 = vector.broadcast %cst_211 : f32 to vector<16x1536xf32>
    %356 = arith.addf %355, %354 : vector<16x1536xf32>
    %357 = arith.mulf %346, %356 : vector<16x1536xf32>
    %cst_212 = arith.constant 0.254829586 : f32
    %358 = vector.broadcast %cst_212 : f32 to vector<16x1536xf32>
    %359 = arith.addf %358, %357 : vector<16x1536xf32>
    %360 = arith.mulf %346, %359 : vector<16x1536xf32>
    %cst_213 = arith.constant 0.000000e+00 : f32
    %361 = vector.broadcast %cst_213 : f32 to vector<16x1536xf32>
    %362 = arith.subf %361, %340 : vector<16x1536xf32>
    %363 = arith.mulf %362, %340 : vector<16x1536xf32>
    %364 = math.exp %363 : vector<16x1536xf32>
    %365 = arith.mulf %360, %364 : vector<16x1536xf32>
    %cst_214 = arith.constant 1.000000e+00 : f32
    %366 = vector.broadcast %cst_214 : f32 to vector<16x1536xf32>
    %367 = arith.subf %366, %365 : vector<16x1536xf32>
    %cst_215 = arith.constant 0.000000e+00 : f32
    %368 = vector.broadcast %cst_215 : f32 to vector<16x1536xf32>
    %369 = arith.cmpf oge, %339, %368 : vector<16x1536xf32>
    %cst_216 = arith.constant 0.000000e+00 : f32
    %370 = vector.broadcast %cst_216 : f32 to vector<16x1536xf32>
    %371 = arith.subf %370, %367 : vector<16x1536xf32>
    %372 = arith.select %369, %367, %371 : vector<16x1536xi1>, vector<16x1536xf32>
    %cst_217 = arith.constant 1.000000e+00 : f32
    %373 = vector.broadcast %cst_217 : f32 to vector<16x1536xf32>
    %374 = arith.addf %373, %372 : vector<16x1536xf32>
    %375 = arith.mulf %337, %374 : vector<16x1536xf32>
    %c0_218 = arith.constant 0 : index
    %c0_219 = arith.constant 0 : index
    %376 = vector.load %arg6[%c0_218, %c0_219] : memref<8x16xf32, #tpu.memory_space<vmem>>, vector<8x16xf32>
    %cst_220 = arith.constant dense<0.000000e+00> : vector<8x1536xf32>
    %377 = tpu.matmul %376, %375, %cst_220 {dimension_numbers = #tpu.dot_dimension_numbers<[1], [0], [0], [1], [0, 0, 1, 1], [], []>} : vector<8x16xf32>, vector<16x1536xf32>, vector<8x1536xf32> -> vector<8x1536xf32>
    %c0_221 = arith.constant 0 : index
    %c0_222 = arith.constant 0 : index
    %378 = vector.load %arg7[%c0_221, %c0_222] : memref<8x1xf32, #tpu.memory_space<vmem>>, vector<8x1xf32>
    %379 = vector.broadcast %378 : vector<8x1xf32> to vector<8x1536xf32>
    %380 = arith.addf %377, %379 : vector<8x1536xf32>
    %cst_223 = arith.constant 5.000000e-01 : f32
    %381 = vector.broadcast %cst_223 : f32 to vector<8x1536xf32>
    %382 = arith.mulf %381, %380 : vector<8x1536xf32>
    %cst_224 = arith.constant 0.707106769 : f32
    %383 = vector.broadcast %cst_224 : f32 to vector<8x1536xf32>
    %384 = arith.mulf %380, %383 : vector<8x1536xf32>
    %385 = math.absf %384 : vector<8x1536xf32>
    %cst_225 = arith.constant 0.327591091 : f32
    %386 = vector.broadcast %cst_225 : f32 to vector<8x1536xf32>
    %387 = arith.mulf %386, %385 : vector<8x1536xf32>
    %cst_226 = arith.constant 1.000000e+00 : f32
    %388 = vector.broadcast %cst_226 : f32 to vector<8x1536xf32>
    %389 = arith.addf %388, %387 : vector<8x1536xf32>
    %cst_227 = arith.constant 1.000000e+00 : f32
    %390 = vector.broadcast %cst_227 : f32 to vector<8x1536xf32>
    %391 = arith.divf %390, %389 : vector<8x1536xf32>
    %cst_228 = arith.constant 1.06140542 : f32
    %392 = vector.broadcast %cst_228 : f32 to vector<8x1536xf32>
    %393 = arith.mulf %391, %392 : vector<8x1536xf32>
    %cst_229 = arith.constant -1.45315206 : f32
    %394 = vector.broadcast %cst_229 : f32 to vector<8x1536xf32>
    %395 = arith.addf %394, %393 : vector<8x1536xf32>
    %396 = arith.mulf %391, %395 : vector<8x1536xf32>
    %cst_230 = arith.constant 1.42141378 : f32
    %397 = vector.broadcast %cst_230 : f32 to vector<8x1536xf32>
    %398 = arith.addf %397, %396 : vector<8x1536xf32>
    %399 = arith.mulf %391, %398 : vector<8x1536xf32>
    %cst_231 = arith.constant -0.284496725 : f32
    %400 = vector.broadcast %cst_231 : f32 to vector<8x1536xf32>
    %401 = arith.addf %400, %399 : vector<8x1536xf32>
    %402 = arith.mulf %391, %401 : vector<8x1536xf32>
    %cst_232 = arith.constant 0.254829586 : f32
    %403 = vector.broadcast %cst_232 : f32 to vector<8x1536xf32>
    %404 = arith.addf %403, %402 : vector<8x1536xf32>
    %405 = arith.mulf %391, %404 : vector<8x1536xf32>
    %cst_233 = arith.constant 0.000000e+00 : f32
    %406 = vector.broadcast %cst_233 : f32 to vector<8x1536xf32>
    %407 = arith.subf %406, %385 : vector<8x1536xf32>
    %408 = arith.mulf %407, %385 : vector<8x1536xf32>
    %409 = math.exp %408 : vector<8x1536xf32>
    %410 = arith.mulf %405, %409 : vector<8x1536xf32>
    %cst_234 = arith.constant 1.000000e+00 : f32
    %411 = vector.broadcast %cst_234 : f32 to vector<8x1536xf32>
    %412 = arith.subf %411, %410 : vector<8x1536xf32>
    %cst_235 = arith.constant 0.000000e+00 : f32
    %413 = vector.broadcast %cst_235 : f32 to vector<8x1536xf32>
    %414 = arith.cmpf oge, %384, %413 : vector<8x1536xf32>
    %cst_236 = arith.constant 0.000000e+00 : f32
    %415 = vector.broadcast %cst_236 : f32 to vector<8x1536xf32>
    %416 = arith.subf %415, %412 : vector<8x1536xf32>
    %417 = arith.select %414, %412, %416 : vector<8x1536xi1>, vector<8x1536xf32>
    %cst_237 = arith.constant 1.000000e+00 : f32
    %418 = vector.broadcast %cst_237 : f32 to vector<8x1536xf32>
    %419 = arith.addf %418, %417 : vector<8x1536xf32>
    %420 = arith.mulf %382, %419 : vector<8x1536xf32>
    %421 = arith.addf %420, %330 : vector<8x1536xf32>
    %c0_238 = arith.constant 0 : index
    %c0_239 = arith.constant 0 : index
    %c0_240 = arith.constant 0 : index
    %422 = vector.load %arg8[%c0_238, %c0_239, %c0_240] : memref<1x8x1536xf32, #tpu.memory_space<vmem>>, vector<1x8x1536xf32>
    %423 = vector.shape_cast %422 : vector<1x8x1536xf32> to vector<8x1536xf32>
    %424 = vector.shape_cast %421 : vector<8x1536xf32> to vector<1x8x1536xf32>
    tpu.vector_store %arg8[%c0_238, %c0_239, %c0_240], %424 {strides = array<i32>} : memref<1x8x1536xf32, #tpu.memory_space<vmem>>, vector<1x8x1536xf32>,
    return
  }
  func.func @transform_0(%arg0: i32) -> (i32, i32, i32, i32) {
    %c0_i32 = arith.constant 0 : i32
    %c0_i32_0 = arith.constant 0 : i32
    %c0_i32_1 = arith.constant 0 : i32
    %c0_i32_2 = arith.constant 0 : i32
    return %arg0, %c0_i32, %c0_i32_0, %c0_i32_1 : i32, i32, i32, i32
  }
  func.func @transform_1(%arg0: i32) -> (i32, i32, i32) {
    %c0_i32 = arith.constant 0 : i32
    %c0_i32_0 = arith.constant 0 : i32
    %c0_i32_1 = arith.constant 0 : i32
    %c0_i32_2 = arith.constant 0 : i32
    return %c0_i32, %c0_i32_0, %c0_i32_1 : i32, i32, i32
  }
  func.func @transform_2(%arg0: i32) -> (i32, i32) {
    %c0_i32 = arith.constant 0 : i32
    %c0_i32_0 = arith.constant 0 : i32
    %c0_i32_1 = arith.constant 0 : i32
    return %c0_i32, %c0_i32_0 : i32, i32
  }
  func.func @transform_3(%arg0: i32) -> (i32, i32) {
    %c0_i32 = arith.constant 0 : i32
    %c0_i32_0 = arith.constant 0 : i32
    %c0_i32_1 = arith.constant 0 : i32
    return %c0_i32, %c0_i32_0 : i32, i32
  }
  func.func @transform_4(%arg0: i32) -> (i32, i32) {
    %c0_i32 = arith.constant 0 : i32
    %c0_i32_0 = arith.constant 0 : i32
    %c0_i32_1 = arith.constant 0 : i32
    return %c0_i32, %c0_i32_0 : i32, i32
  }
  func.func @transform_5(%arg0: i32) -> (i32, i32) {
    %c0_i32 = arith.constant 0 : i32
    %c0_i32_0 = arith.constant 0 : i32
    %c0_i32_1 = arith.constant 0 : i32
    return %c0_i32, %c0_i32_0 : i32, i32
  }
  func.func @transform_6(%arg0: i32) -> (i32, i32) {
    %c0_i32 = arith.constant 0 : i32
    %c0_i32_0 = arith.constant 0 : i32
    %c0_i32_1 = arith.constant 0 : i32
    return %c0_i32, %c0_i32_0 : i32, i32
  }
  func.func @transform_7(%arg0: i32) -> (i32, i32, i32) {
    %c0_i32 = arith.constant 0 : i32
    %c0_i32_0 = arith.constant 0 : i32
    %c0_i32_1 = arith.constant 0 : i32
    return %arg0, %c0_i32, %c0_i32_0 : i32, i32, i32
  }
}

</mosaic_0001>

<llo_original>
// kernel: tpu_custom_call.1
$region0: #{tpu_custom_call.1}
  #allocation0 [shape = 'u32[]', space=smem, size = 0x4, offset = 0x4, fixed_abs, tag = 'smem constant byte address 0x4 - core index']
  #allocation1 [shape = 'u32[72,128]{1,0:T(1,128)}', space=vmem, size = 0x9000, scoped, tag = 'internal scratch']
  #allocation2 [shape = 'f32[216,384]{1,0:T(8,128)}', space=vmem, size = 0x51000, scoped, tag = 'scratch operand']
  #allocation3 [shape = 'f32[8,1536]{1,0:T(8,128)}', space=vmem, size = 0xc000, scoped, tag = 'scratch operand']
  %s0 = inlined_call_operand.hbm [shape: f32[2,6,8,422], index: 0, kind: input, shape index: {}]
  %s1 = inlined_call_operand.hbm [shape: f32[3,8,216], index: 1, kind: input, shape index: {}]
  %s2 = inlined_call_operand.vmem [shape: f32[8,1], index: 2, kind: input, shape index: {}]
  %s3 = inlined_call_operand.vmem [shape: f32[16,8], index: 3, kind: input, shape index: {}]
  %s4 = inlined_call_operand.vmem [shape: f32[16,1], index: 4, kind: input, shape index: {}]
  %s5 = inlined_call_operand.vmem [shape: f32[8,16], index: 5, kind: input, shape index: {}]
  %s6 = inlined_call_operand.vmem [shape: f32[8,1], index: 6, kind: input, shape index: {}]
  %s7 = inlined_call_operand.hbm [shape: f32[2,8,1536], index: 7, kind: output, shape index: {}]
  %s8 = sld [smem:[#allocation0]]
  $region69: #{tpu_custom_call.1} parent=0
    _
  %s10 = ssub.s32 1, %s8
  %s11 = scalar_select 0, %s10, %s8
  $region1: #{tpu_custom_call.1} parent=0
    #allocation4 [shape = 'u8[196608]{0}', space=vmem, size = 0x30000, scoped, tag = 'input window, operand 0']
    #allocation5 [shape = 's32[2]{0}', space=sflag, size = 0x8, scoped, tag = 'scoped memory for tpu_custom_call.1']
    #allocation6 [shape = 's32[2]{0}', space=sflag, size = 0x8, scoped, tag = 'scoped memory for tpu_custom_call.1']
    #allocation7 [shape = 'u8[24576]{0}', space=vmem, size = 0x6000, scoped, tag = 'input window, operand 1, single buffered']
    #allocation8 [shape = 's32[1]{0}', space=sflag, size = 0x4, scoped, tag = 'scoped memory for tpu_custom_call.1']
    #allocation9 [shape = 'u8[98304]{0}', space=vmem, size = 0x18000, scoped, tag = 'output window, operand 0']
    %12 = vsyncpa [#allocation5], 0
    %s13 = scalar_lea.sflag [#allocation5], 1
    %14 = vsyncpa %s13, 0
    %15 = vsyncpa [#allocation8], 0
    %16 = vsyncpa [#allocation6], 0
    %s17 = scalar_lea.sflag [#allocation6], 1
    %18 = vsyncpa %s17, 0
    loop: start=0, step=1, limit=4
    $region2: #{tpu_custom_call.1} parent=1 // loop_pre_header
      _
    $region3: #{tpu_custom_call.1} parent=1 // loop_header
      %s20 = sphi 0, %s24
      %p21 = scmp.ge.s32.totalorder %s20, 4
      %s30 = sphi 0, %s32
      %s33 = sphi 0, %s30
      %s34 = sphi 0, %s33
      %s50 = sphi 0, %s34
      %s54 = sphi 0, %s54
      %s56 = sphi 0, %s54
      %s57 = sphi 0, %s56
      %s71 = sphi 0, %s57
      %s75 = sphi 0, %s75
      %s77 = sphi 0, %s75
      %s78 = sphi 0, %s77
      %s92 = sphi 0, %s78
      %s96 = sphi 0, %s96
      %s98 = sphi 0, %s96
      %s99 = sphi 0, %s98
      %s113 = sphi 0, %s99
      %s117 = sphi 0, %s117
      %s119 = sphi 0, %s117
      %s120 = sphi 0, %s119
      %s134 = sphi 0, %s120
      %s138 = sphi 0, %s138
      %s140 = sphi 0, %s138
      %s141 = sphi 0, %s140
      %s155 = sphi 0, %s141
      %s159 = sphi 0, %s159
      %s161 = sphi 0, %s159
      %s162 = sphi 0, %s161
      %s176 = sphi 0, %s162
      %s182 = sphi 0, %s184
      %s185 = sphi 0, %s182
      %s186 = sphi 0, %s185
      %s202 = sphi 0, %s186
    $region4: #{tpu_custom_call.1} parent=1 // loop_header_branch
      %23 = sbr.rel (%p21) target = $region8
    $region5: #{tpu_custom_call.1} parent=1 // loop_body
      %s25 = ssub.s32 %s20, 1
      %s26 = ssub.s32 %s20, 2
      %s27 = sadd.s32 %s20, 1
      %s28 = ssub.s32 %s20, %s27
      %p29 = scmp.eq.s32.totalorder %s28, 0
      %s31 = sadd.s32 %s30, 1
      %s32 = scalar_select %p29, %s30, %s31
      %p35 = pneg %p29
      %p36 = scmp.eq.s32.totalorder %s20, 1
      %p37 = por %p35, %p36
      %p38 = scmp.ne.s32.totalorder %s30, %s33
      %p39 = scmp.eq.s32.totalorder %s20, 0
      %p40 = por %p38, %p39
      %p41 = scmp.ne.s32.totalorder %s30, %s33
      %p42 = scmp.eq.s32.totalorder %s25, 1
      %p43 = por %p41, %p42
      %p44 = scmp.ne.s32.totalorder %s33, %s34
      %p45 = scmp.eq.s32.totalorder %s25, 0
      %p46 = por %p44, %p45
      %p47 = scmp.ne.s32.totalorder %s33, %s34
      %p48 = scmp.eq.s32.totalorder %s26, 1
      %p49 = por %p47, %p48
      %p51 = scmp.ne.s32.totalorder %s34, %s50
      %p52 = scmp.eq.s32.totalorder %s26, 0
      %p53 = por %p51, %p52
      %s55 = sadd.s32 %s54, 1
      %p58 = scmp.eq.s32.totalorder %s20, 1
      %p59 = scmp.ne.s32.totalorder %s54, %s56
      %p60 = scmp.eq.s32.totalorder %s20, 0
      %p61 = por %p59, %p60
      %p62 = scmp.ne.s32.totalorder %s54, %s56
      %p63 = scmp.eq.s32.totalorder %s25, 1
      %p64 = por %p62, %p63
      %p65 = scmp.ne.s32.totalorder %s56, %s57
      %p66 = scmp.eq.s32.totalorder %s25, 0
      %p67 = por %p65, %p66
      %p68 = scmp.ne.s32.totalorder %s56, %s57
      %p69 = scmp.eq.s32.totalorder %s26, 1
      %p70 = por %p68, %p69
      %p72 = scmp.ne.s32.totalorder %s57, %s71
      %p73 = scmp.eq.s32.totalorder %s26, 0
      %p74 = por %p72, %p73
      %s76 = sadd.s32 %s75, 1
      %p79 = scmp.eq.s32.totalorder %s20, 1
      %p80 = scmp.ne.s32.totalorder %s75, %s77
      %p81 = scmp.eq.s32.totalorder %s20, 0
      %p82 = por %p80, %p81
      %p83 = scmp.ne.s32.totalorder %s75, %s77
      %p84 = scmp.eq.s32.totalorder %s25, 1
      %p85 = por %p83, %p84
      %p86 = scmp.ne.s32.totalorder %s77, %s78
      %p87 = scmp.eq.s32.totalorder %s25, 0
      %p88 = por %p86, %p87
      %p89 = scmp.ne.s32.totalorder %s77, %s78
      %p90 = scmp.eq.s32.totalorder %s26, 1
      %p91 = por %p89, %p90
      %p93 = scmp.ne.s32.totalorder %s78, %s92
      %p94 = scmp.eq.s32.totalorder %s26, 0
      %p95 = por %p93, %p94
      %s97 = sadd.s32 %s96, 1
      %p100 = scmp.eq.s32.totalorder %s20, 1
      %p101 = scmp.ne.s32.totalorder %s96, %s98
      %p102 = scmp.eq.s32.totalorder %s20, 0
      %p103 = por %p101, %p102
      %p104 = scmp.ne.s32.totalorder %s96, %s98
      %p105 = scmp.eq.s32.totalorder %s25, 1
      %p106 = por %p104, %p105
      %p107 = scmp.ne.s32.totalorder %s98, %s99
      %p108 = scmp.eq.s32.totalorder %s25, 0
      %p109 = por %p107, %p108
      %p110 = scmp.ne.s32.totalorder %s98, %s99
      %p111 = scmp.eq.s32.totalorder %s26, 1
      %p112 = por %p110, %p111
      %p114 = scmp.ne.s32.totalorder %s99, %s113
      %p115 = scmp.eq.s32.totalorder %s26, 0
      %p116 = por %p114, %p115
      %s118 = sadd.s32 %s117, 1
      %p121 = scmp.eq.s32.totalorder %s20, 1
      %p122 = scmp.ne.s32.totalorder %s117, %s119
      %p123 = scmp.eq.s32.totalorder %s20, 0
      %p124 = por %p122, %p123
      %p125 = scmp.ne.s32.totalorder %s117, %s119
      %p126 = scmp.eq.s32.totalorder %s25, 1
      %p127 = por %p125, %p126
      %p128 = scmp.ne.s32.totalorder %s119, %s120
      %p129 = scmp.eq.s32.totalorder %s25, 0
      %p130 = por %p128, %p129
      %p131 = scmp.ne.s32.totalorder %s119, %s120
      %p132 = scmp.eq.s32.totalorder %s26, 1
      %p133 = por %p131, %p132
      %p135 = scmp.ne.s32.totalorder %s120, %s134
      %p136 = scmp.eq.s32.totalorder %s26, 0
      %p137 = por %p135, %p136
      %s139 = sadd.s32 %s138, 1
      %p142 = scmp.eq.s32.totalorder %s20, 1
      %p143 = scmp.ne.s32.totalorder %s138, %s140
      %p144 = scmp.eq.s32.totalorder %s20, 0
      %p145 = por %p143, %p144
      %p146 = scmp.ne.s32.totalorder %s138, %s140
      %p147 = scmp.eq.s32.totalorder %s25, 1
      %p148 = por %p146, %p147
      %p149 = scmp.ne.s32.totalorder %s140, %s141
      %p150 = scmp.eq.s32.totalorder %s25, 0
      %p151 = por %p149, %p150
      %p152 = scmp.ne.s32.totalorder %s140, %s141
      %p153 = scmp.eq.s32.totalorder %s26, 1
      %p154 = por %p152, %p153
      %p156 = scmp.ne.s32.totalorder %s141, %s155
      %p157 = scmp.eq.s32.totalorder %s26, 0
      %p158 = por %p156, %p157
      %s160 = sadd.s32 %s159, 1
      %p163 = scmp.eq.s32.totalorder %s20, 1
      %p164 = scmp.ne.s32.totalorder %s159, %s161
      %p165 = scmp.eq.s32.totalorder %s20, 0
      %p166 = por %p164, %p165
      %p167 = scmp.ne.s32.totalorder %s159, %s161
      %p168 = scmp.eq.s32.totalorder %s25, 1
      %p169 = por %p167, %p168
      %p170 = scmp.ne.s32.totalorder %s161, %s162
      %p171 = scmp.eq.s32.totalorder %s25, 0
      %p172 = por %p170, %p171
      %p173 = scmp.ne.s32.totalorder %s161, %s162
      %p174 = scmp.eq.s32.totalorder %s26, 1
      %p175 = por %p173, %p174
      %p177 = scmp.ne.s32.totalorder %s162, %s176
      %p178 = scmp.eq.s32.totalorder %s26, 0
      %p179 = por %p177, %p178
      %s180 = ssub.s32 %s20, %s27
      %p181 = scmp.eq.s32.totalorder %s180, 0
      %s183 = sadd.s32 %s182, 1
      %s184 = scalar_select %p181, %s182, %s183
      %p187 = pneg %p181
      %p188 = scmp.eq.s32.totalorder %s20, 1
      %p189 = por %p187, %p188
      %p190 = scmp.ne.s32.totalorder %s182, %s185
      %p191 = scmp.eq.s32.totalorder %s20, 0
      %p192 = por %p190, %p191
      %p193 = scmp.ne.s32.totalorder %s182, %s185
      %p194 = scmp.eq.s32.totalorder %s25, 1
      %p195 = por %p193, %p194
      %p196 = scmp.ne.s32.totalorder %s185, %s186
      %p197 = scmp.eq.s32.totalorder %s25, 0
      %p198 = por %p196, %p197
      %p199 = scmp.ne.s32.totalorder %s185, %s186
      %p200 = scmp.eq.s32.totalorder %s26, 1
      %p201 = por %p199, %p200
      %p203 = scmp.ne.s32.totalorder %s186, %s202
      %p204 = scmp.eq.s32.totalorder %s26, 0
      %p205 = por %p203, %p204
      %p206 = scmp.le.s32.totalorder 1, %s20
      %p207 = scmp.lt.s32.totalorder %s20, 3
      %p208 = pnand %p206, %p207
      %p209 = pneg %p208
      // Predicated region
      $region9: #{tpu_custom_call.1} parent=5 // pred_check
        _
      $region10: #{tpu_custom_call.1} parent=5 // pred_check_branch
        %211 = sbr.rel (%p208) target = $region12
      $region11: #{tpu_custom_call.1} parent=5 // pred_region
        %s212 = ssub.s32 %s20, 1
        // Predicated region
        $region13: #{tpu_custom_call.1} parent=11 // pred_check
          %p213 = pneg %p67
        $region14: #{tpu_custom_call.1} parent=11 // pred_check_branch
          %215 = sbr.rel (%p213) target = $region16
        $region15: #{tpu_custom_call.1} parent=11 // pred_region
          %217 = vsyncadd [#allocation8], 0
          %s218 = sshll.u32 %s1, 4
          %s219 = int_to_ptr.hbm [resolvable:$true] %s218
          %s220 = sshll.u32 [#allocation7], 4
          %s221 = int_to_ptr.vmem [resolvable:$true] %s220
          %226 = dma.hbm_to_vmem [thread:$0]  %s219, 768, %s221, [#allocation8], 256, 256, 16
        $region16: #{tpu_custom_call.1} parent=11 // pred_fallthru
          _
        // Predicated region
        $region17: #{tpu_custom_call.1} parent=11 // pred_check
          %p227 = pneg %p88
        $region18: #{tpu_custom_call.1} parent=11 // pred_check_branch
          %229 = sbr.rel (%p227) target = $region20
        $region19: #{tpu_custom_call.1} parent=11 // pred_region
          _
        $region20: #{tpu_custom_call.1} parent=11 // pred_fallthru
          _
        // Predicated region
        $region21: #{tpu_custom_call.1} parent=11 // pred_check
          %p230 = pneg %p109
        $region22: #{tpu_custom_call.1} parent=11 // pred_check_branch
          %232 = sbr.rel (%p230) target = $region24
        $region23: #{tpu_custom_call.1} parent=11 // pred_region
          _
        $region24: #{tpu_custom_call.1} parent=11 // pred_fallthru
          _
        // Predicated region
        $region25: #{tpu_custom_call.1} parent=11 // pred_check
          %p233 = pneg %p130
        $region26: #{tpu_custom_call.1} parent=11 // pred_check_branch
          %235 = sbr.rel (%p233) target = $region28
        $region27: #{tpu_custom_call.1} parent=11 // pred_region
          _
        $region28: #{tpu_custom_call.1} parent=11 // pred_fallthru
          _
        // Predicated region
        $region29: #{tpu_custom_call.1} parent=11 // pred_check
          %p236 = pneg %p151
        $region30: #{tpu_custom_call.1} parent=11 // pred_check_branch
          %238 = sbr.rel (%p236) target = $region32
        $region31: #{tpu_custom_call.1} parent=11 // pred_region
          _
        $region32: #{tpu_custom_call.1} parent=11 // pred_fallthru
          _
        // Predicated region
        $region33: #{tpu_custom_call.1} parent=11 // pred_check
          %p239 = pneg %p172
        $region34: #{tpu_custom_call.1} parent=11 // pred_check_branch
          %241 = sbr.rel (%p239) target = $region36
        $region35: #{tpu_custom_call.1} parent=11 // pred_region
          _
        $region36: #{tpu_custom_call.1} parent=11 // pred_fallthru
          _
      $region12: #{tpu_custom_call.1} parent=5 // pred_fallthru
        _
      %p242 = scmp.lt.s32.totalorder %s20, 2
      // Predicated region
      $region37: #{tpu_custom_call.1} parent=5 // pred_check
        %p243 = pneg %p242
      $region38: #{tpu_custom_call.1} parent=5 // pred_check_branch
        %245 = sbr.rel (%p243) target = $region40
      $region39: #{tpu_custom_call.1} parent=5 // pred_region
        // Predicated region
        $region41: #{tpu_custom_call.1} parent=39 // pred_check
          %p246 = pneg %p40
        $region42: #{tpu_custom_call.1} parent=39 // pred_check_branch
          %248 = sbr.rel (%p246) target = $region44
        $region43: #{tpu_custom_call.1} parent=39 // pred_region
          %s249 = sand.u32 %s30, 1
          %s250 = scalar_lea.sflag [#allocation5], %s249
          %s251 = sand.u32 %s30, 1
          %s252 = smul.addr %s251, 192
          %s253 = scalar_lea.vmem [#allocation4], %s252
          %255 = vsyncadd %s250, 0
          %s256 = smul.addr %s20, 24
          %s257 = smul.addr %s256, 8
          %s258 = scalar_lea.hbm %s0, %s257
          %s259 = sshll.u32 %s258, 4
          %s260 = int_to_ptr.hbm [resolvable:$true] %s259
          %s261 = sshll.u32 %s253, 4
          %s262 = int_to_ptr.vmem [resolvable:$true] %s261
          %267 = dma.hbm_to_vmem [thread:$0]  %s260, 3072, %s262, %s250, 512, 512, 32
        $region44: #{tpu_custom_call.1} parent=39 // pred_fallthru
          _
      $region40: #{tpu_custom_call.1} parent=5 // pred_fallthru
        _
      %p268 = scmp.le.s32.totalorder 1, %s20
      %p269 = scmp.lt.s32.totalorder %s20, 3
      %p270 = pnand %p268, %p269
      %p271 = pneg %p270
      // Predicated region
      $region45: #{tpu_custom_call.1} parent=5 // pred_check
        _
      $region46: #{tpu_custom_call.1} parent=5 // pred_check_branch
        %273 = sbr.rel (%p270) target = $region48
      $region47: #{tpu_custom_call.1} parent=5 // pred_region
        %s274 = ssub.s32 %s20, 1
        %s275 = sand.u32 %s33, 1
        %s276 = scalar_lea.sflag [#allocation5], %s275
        %s277 = sand.u32 %s33, 1
        %s278 = smul.addr %s277, 192
        %s279 = scalar_lea.vmem [#allocation4], %s278
        // Predicated region
        $region49: #{tpu_custom_call.1} parent=47 // pred_check
          %p280 = pneg %p46
        $region50: #{tpu_custom_call.1} parent=47 // pred_check_branch
          %282 = sbr.rel (%p280) target = $region52
        $region51: #{tpu_custom_call.1} parent=47 // pred_region
          %284 = dma.done %s276, 3072
        $region52: #{tpu_custom_call.1} parent=47 // pred_fallthru
          _
        // Predicated region
        $region53: #{tpu_custom_call.1} parent=47 // pred_check
          %p285 = pneg %p67
        $region54: #{tpu_custom_call.1} parent=47 // pred_check_branch
          %287 = sbr.rel (%p285) target = $region56
        $region55: #{tpu_custom_call.1} parent=47 // pred_region
          %289 = dma.done [#allocation8], 768
        $region56: #{tpu_custom_call.1} parent=47 // pred_fallthru
          _
        %s290 = sand.u32 %s33, 1
        %s291 = scalar_lea.sflag [#allocation5], %s290
        %s292 = sand.u32 %s33, 1
        %s293 = smul.addr %s292, 192
        %s294 = scalar_lea.vmem [#allocation4], %s293
        %p295 = pneg %p46
        %p296 = pneg %p43
        %p297 = pneg %p67
        %p298 = pneg %p64
        %p299 = pneg %p88
        %p300 = pneg %p85
        %p301 = pneg %p109
        %p302 = pneg %p106
        %p303 = pneg %p130
        %p304 = pneg %p127
        %p305 = pneg %p151
        %p306 = pneg %p148
        %p307 = pneg %p172
        %p308 = pneg %p169
        %p309 = pneg %p198
        %p310 = pneg %p195
        %s311 = sand.u32 %s185, 1
        %s312 = scalar_lea.sflag [#allocation6], %s311
        %s313 = sand.u32 %s185, 1
        %s314 = smul.addr %s313, 96
        %s315 = scalar_lea.vmem [#allocation9], %s314
        %v316 = vld [vmem:[%s279] sm:$0xff]
        %v317 = vld [vmem:[%s279 + $0x8] sm:$0xff]
        %v318 = vld [vmem:[%s279 + $0x10] sm:$0xff]
        %v319 = vld [vmem:[%s279 + $0x18] sm:$0xff]
        %320 = vst [vmem:[#allocation2] sm:$0xff] %v316
        %321 = vst [vmem:[#allocation2 + $0x8] sm:$0xff] %v317
        %322 = vst [vmem:[#allocation2 + $0x10] sm:$0xff] %v318
        %327 = vrot.lane.b32.xlu0 %v316, 127
        %v328 = vpop.permute.xlu0 %327
        %329 = vrot.lane.b32.xlu0 %v317, 127
        %v330 = vpop.permute.xlu0 %329
        %331 = vrot.lane.b32.xlu0 %v318, 127
        %v332 = vpop.permute.xlu0 %331
        %333 = vrot.lane.b32.xlu0 %v319, 127
        %v334 = vpop.permute.xlu0 %333
        %vm335 = vcmask 1039360
        %v336 = vsel %vm335, %v328, %v330
        %v337 = vsel %vm335, %v330, %v332
        %v338 = vsel %vm335, %v332, %v334
        %342 = vst [vmem:[#allocation2 + $0x18] sm:$0xff] %v336
        %343 = vst [vmem:[#allocation2 + $0x20] sm:$0xff] %v337
        %344 = vst [vmem:[#allocation2 + $0x28] sm:$0xff] %v338
        %345 = vrot.lane.b32.xlu0 %v316, 126
        %v346 = vpop.permute.xlu0 %345
        %347 = vrot.lane.b32.xlu0 %v317, 126
        %v348 = vpop.permute.xlu0 %347
        %349 = vrot.lane.b32.xlu0 %v318, 126
        %v350 = vpop.permute.xlu0 %349
        %351 = vrot.lane.b32.xlu0 %v319, 126
        %v352 = vpop.permute.xlu0 %351
        %vm353 = vcmask 1031168
        %v354 = vsel %vm353, %v346, %v348
        %v355 = vsel %vm353, %v348, %v350
        %v356 = vsel %vm353, %v350, %v352
        %360 = vst [vmem:[#allocation2 + $0x30] sm:$0xff] %v354
        %361 = vst [vmem:[#allocation2 + $0x38] sm:$0xff] %v355
        %362 = vst [vmem:[#allocation2 + $0x40] sm:$0xff] %v356
        %363 = vrot.lane.b32.xlu0 %v316, 110
        %v364 = vpop.permute.xlu0 %363
        %365 = vrot.lane.b32.xlu0 %v317, 110
        %v366 = vpop.permute.xlu0 %365
        %367 = vrot.lane.b32.xlu0 %v318, 110
        %v368 = vpop.permute.xlu0 %367
        %369 = vrot.lane.b32.xlu0 %v319, 110
        %v370 = vpop.permute.xlu0 %369
        %vm371 = vcmask 900096
        %v372 = vsel %vm371, %v364, %v366
        %v373 = vsel %vm371, %v366, %v368
        %v374 = vsel %vm371, %v368, %v370
        %378 = vst [vmem:[#allocation2 + $0x48] sm:$0xff] %v372
        %379 = vst [vmem:[#allocation2 + $0x50] sm:$0xff] %v373
        %380 = vst [vmem:[#allocation2 + $0x58] sm:$0xff] %v374
        %381 = vrot.lane.b32.xlu0 %v316, 109
        %v382 = vpop.permute.xlu0 %381
        %383 = vrot.lane.b32.xlu0 %v317, 109
        %v384 = vpop.permute.xlu0 %383
        %385 = vrot.lane.b32.xlu0 %v318, 109
        %v386 = vpop.permute.xlu0 %385
        %387 = vrot.lane.b32.xlu0 %v319, 109
        %v388 = vpop.permute.xlu0 %387
        %vm389 = vcmask 891904
        %v390 = vsel %vm389, %v382, %v384
        %v391 = vsel %vm389, %v384, %v386
        %v392 = vsel %vm389, %v386, %v388
        %396 = vst [vmem:[#allocation2 + $0x60] sm:$0xff] %v390
        %397 = vst [vmem:[#allocation2 + $0x68] sm:$0xff] %v391
        %398 = vst [vmem:[#allocation2 + $0x70] sm:$0xff] %v392
        %399 = vrot.lane.b32.xlu0 %v316, 108
        %v400 = vpop.permute.xlu0 %399
        %401 = vrot.lane.b32.xlu0 %v317, 108
        %v402 = vpop.permute.xlu0 %401
        %403 = vrot.lane.b32.xlu0 %v318, 108
        %v404 = vpop.permute.xlu0 %403
        %405 = vrot.lane.b32.xlu0 %v319, 108
        %v406 = vpop.permute.xlu0 %405
        %vm407 = vcmask 883712
        %v408 = vsel %vm407, %v400, %v402
        %v409 = vsel %vm407, %v402, %v404
        %v410 = vsel %vm407, %v404, %v406
        %414 = vst [vmem:[#allocation2 + $0x78] sm:$0xff] %v408
        %415 = vst [vmem:[#allocation2 + $0x80] sm:$0xff] %v409
        %416 = vst [vmem:[#allocation2 + $0x88] sm:$0xff] %v410
        %417 = vrot.lane.b32.xlu0 %v316, 92
        %v418 = vpop.permute.xlu0 %417
        %419 = vrot.lane.b32.xlu0 %v317, 92
        %v420 = vpop.permute.xlu0 %419
        %421 = vrot.lane.b32.xlu0 %v318, 92
        %v422 = vpop.permute.xlu0 %421
        %423 = vrot.lane.b32.xlu0 %v319, 92
        %v424 = vpop.permute.xlu0 %423
        %vm425 = vcmask 752640
        %v426 = vsel %vm425, %v418, %v420
        %v427 = vsel %vm425, %v420, %v422
        %v428 = vsel %vm425, %v422, %v424
        %432 = vst [vmem:[#allocation2 + $0x90] sm:$0xff] %v426
        %433 = vst [vmem:[#allocation2 + $0x98] sm:$0xff] %v427
        %434 = vst [vmem:[#allocation2 + $0xa0] sm:$0xff] %v428
        %435 = vrot.lane.b32.xlu0 %v316, 91
        %v436 = vpop.permute.xlu0 %435
        %437 = vrot.lane.b32.xlu0 %v317, 91
        %v438 = vpop.permute.xlu0 %437
        %439 = vrot.lane.b32.xlu0 %v318, 91
        %v440 = vpop.permute.xlu0 %439
        %441 = vrot.lane.b32.xlu0 %v319, 91
        %v442 = vpop.permute.xlu0 %441
        %vm443 = vcmask 744448
        %v444 = vsel %vm443, %v436, %v438
        %v445 = vsel %vm443, %v438, %v440
        %v446 = vsel %vm443, %v440, %v442
        %450 = vst [vmem:[#allocation2 + $0xa8] sm:$0xff] %v444
        %451 = vst [vmem:[#allocation2 + $0xb0] sm:$0xff] %v445
        %452 = vst [vmem:[#allocation2 + $0xb8] sm:$0xff] %v446
        %453 = vrot.lane.b32.xlu0 %v316, 90
        %v454 = vpop.permute.xlu0 %453
        %455 = vrot.lane.b32.xlu0 %v317, 90
        %v456 = vpop.permute.xlu0 %455
        %457 = vrot.lane.b32.xlu0 %v318, 90
        %v458 = vpop.permute.xlu0 %457
        %459 = vrot.lane.b32.xlu0 %v319, 90
        %v460 = vpop.permute.xlu0 %459
        %vm461 = vcmask 736256
        %v462 = vsel %vm461, %v454, %v456
        %v463 = vsel %vm461, %v456, %v458
        %v464 = vsel %vm461, %v458, %v460
        %468 = vst [vmem:[#allocation2 + $0xc0] sm:$0xff] %v462
        %469 = vst [vmem:[#allocation2 + $0xc8] sm:$0xff] %v463
        %470 = vst [vmem:[#allocation2 + $0xd0] sm:$0xff] %v464
        %s471 = scalar_lea.vmem %s279, 32 [#allocation4]
        %v472 = vld [vmem:[%s471] sm:$0xff]
        %v473 = vld [vmem:[%s471 + $0x8] sm:$0xff]
        %v474 = vld [vmem:[%s471 + $0x10] sm:$0xff]
        %v475 = vld [vmem:[%s471 + $0x18] sm:$0xff]
        %476 = vst [vmem:[#allocation2 + $0xd8] sm:$0xff] %v472
        %477 = vst [vmem:[#allocation2 + $0xe0] sm:$0xff] %v473
        %478 = vst [vmem:[#allocation2 + $0xe8] sm:$0xff] %v474
        %483 = vrot.lane.b32.xlu0 %v472, 127
        %v484 = vpop.permute.xlu0 %483
        %485 = vrot.lane.b32.xlu0 %v473, 127
        %v486 = vpop.permute.xlu0 %485
        %487 = vrot.lane.b32.xlu0 %v474, 127
        %v488 = vpop.permute.xlu0 %487
        %489 = vrot.lane.b32.xlu0 %v475, 127
        %v490 = vpop.permute.xlu0 %489
        %v491 = vsel %vm335, %v484, %v486
        %v492 = vsel %vm335, %v486, %v488
        %v493 = vsel %vm335, %v488, %v490
        %497 = vst [vmem:[#allocation2 + $0xf0] sm:$0xff] %v491
        %498 = vst [vmem:[#allocation2 + $0xf8] sm:$0xff] %v492
        %499 = vst [vmem:[#allocation2 + $0x100] sm:$0xff] %v493
        %500 = vrot.lane.b32.xlu0 %v472, 126
        %v501 = vpop.permute.xlu0 %500
        %502 = vrot.lane.b32.xlu0 %v473, 126
        %v503 = vpop.permute.xlu0 %502
        %504 = vrot.lane.b32.xlu0 %v474, 126
        %v505 = vpop.permute.xlu0 %504
        %506 = vrot.lane.b32.xlu0 %v475, 126
        %v507 = vpop.permute.xlu0 %506
        %v508 = vsel %vm353, %v501, %v503
        %v509 = vsel %vm353, %v503, %v505
        %v510 = vsel %vm353, %v505, %v507
        %514 = vst [vmem:[#allocation2 + $0x108] sm:$0xff] %v508
        %515 = vst [vmem:[#allocation2 + $0x110] sm:$0xff] %v509
        %516 = vst [vmem:[#allocation2 + $0x118] sm:$0xff] %v510
        %517 = vrot.lane.b32.xlu0 %v472, 110
        %v518 = vpop.permute.xlu0 %517
        %519 = vrot.lane.b32.xlu0 %v473, 110
        %v520 = vpop.permute.xlu0 %519
        %521 = vrot.lane.b32.xlu0 %v474, 110
        %v522 = vpop.permute.xlu0 %521
        %523 = vrot.lane.b32.xlu0 %v475, 110
        %v524 = vpop.permute.xlu0 %523
        %v525 = vsel %vm371, %v518, %v520
        %v526 = vsel %vm371, %v520, %v522
        %v527 = vsel %vm371, %v522, %v524
        %531 = vst [vmem:[#allocation2 + $0x120] sm:$0xff] %v525
        %532 = vst [vmem:[#allocation2 + $0x128] sm:$0xff] %v526
        %533 = vst [vmem:[#allocation2 + $0x130] sm:$0xff] %v527
        %534 = vrot.lane.b32.xlu0 %v472, 109
        %v535 = vpop.permute.xlu0 %534
        %536 = vrot.lane.b32.xlu0 %v473, 109
        %v537 = vpop.permute.xlu0 %536
        %538 = vrot.lane.b32.xlu0 %v474, 109
        %v539 = vpop.permute.xlu0 %538
        %540 = vrot.lane.b32.xlu0 %v475, 109
        %v541 = vpop.permute.xlu0 %540
        %v542 = vsel %vm389, %v535, %v537
        %v543 = vsel %vm389, %v537, %v539
        %v544 = vsel %vm389, %v539, %v541
        %548 = vst [vmem:[#allocation2 + $0x138] sm:$0xff] %v542
        %549 = vst [vmem:[#allocation2 + $0x140] sm:$0xff] %v543
        %550 = vst [vmem:[#allocation2 + $0x148] sm:$0xff] %v544
        %551 = vrot.lane.b32.xlu0 %v472, 108
        %v552 = vpop.permute.xlu0 %551
        %553 = vrot.lane.b32.xlu0 %v473, 108
        %v554 = vpop.permute.xlu0 %553
        %555 = vrot.lane.b32.xlu0 %v474, 108
        %v556 = vpop.permute.xlu0 %555
        %557 = vrot.lane.b32.xlu0 %v475, 108
        %v558 = vpop.permute.xlu0 %557
        %v559 = vsel %vm407, %v552, %v554
        %v560 = vsel %vm407, %v554, %v556
        %v561 = vsel %vm407, %v556, %v558
        %565 = vst [vmem:[#allocation2 + $0x150] sm:$0xff] %v559
        %566 = vst [vmem:[#allocation2 + $0x158] sm:$0xff] %v560
        %567 = vst [vmem:[#allocation2 + $0x160] sm:$0xff] %v561
        %568 = vrot.lane.b32.xlu0 %v472, 92
        %v569 = vpop.permute.xlu0 %568
        %570 = vrot.lane.b32.xlu0 %v473, 92
        %v571 = vpop.permute.xlu0 %570
        %572 = vrot.lane.b32.xlu0 %v474, 92
        %v573 = vpop.permute.xlu0 %572
        %574 = vrot.lane.b32.xlu0 %v475, 92
        %v575 = vpop.permute.xlu0 %574
        %v576 = vsel %vm425, %v569, %v571
        %v577 = vsel %vm425, %v571, %v573
        %v578 = vsel %vm425, %v573, %v575
        %582 = vst [vmem:[#allocation2 + $0x168] sm:$0xff] %v576
        %583 = vst [vmem:[#allocation2 + $0x170] sm:$0xff] %v577
        %584 = vst [vmem:[#allocation2 + $0x178] sm:$0xff] %v578
        %585 = vrot.lane.b32.xlu0 %v472, 91
        %v586 = vpop.permute.xlu0 %585
        %587 = vrot.lane.b32.xlu0 %v473, 91
        %v588 = vpop.permute.xlu0 %587
        %589 = vrot.lane.b32.xlu0 %v474, 91
        %v590 = vpop.permute.xlu0 %589
        %591 = vrot.lane.b32.xlu0 %v475, 91
        %v592 = vpop.permute.xlu0 %591
        %v593 = vsel %vm443, %v586, %v588
        %v594 = vsel %vm443, %v588, %v590
        %v595 = vsel %vm443, %v590, %v592
        %599 = vst [vmem:[#allocation2 + $0x180] sm:$0xff] %v593
        %600 = vst [vmem:[#allocation2 + $0x188] sm:$0xff] %v594
        %601 = vst [vmem:[#allocation2 + $0x190] sm:$0xff] %v595
        %602 = vrot.lane.b32.xlu0 %v472, 90
        %v603 = vpop.permute.xlu0 %602
        %604 = vrot.lane.b32.xlu0 %v473, 90
        %v605 = vpop.permute.xlu0 %604
        %606 = vrot.lane.b32.xlu0 %v474, 90
        %v607 = vpop.permute.xlu0 %606
        %608 = vrot.lane.b32.xlu0 %v475, 90
        %v609 = vpop.permute.xlu0 %608
        %v610 = vsel %vm461, %v603, %v605
        %v611 = vsel %vm461, %v605, %v607
        %v612 = vsel %vm461, %v607, %v609
        %616 = vst [vmem:[#allocation2 + $0x198] sm:$0xff] %v610
        %617 = vst [vmem:[#allocation2 + $0x1a0] sm:$0xff] %v611
        %618 = vst [vmem:[#allocation2 + $0x1a8] sm:$0xff] %v612
        %s619 = scalar_lea.vmem %s279, 64 [#allocation4]
        %v620 = vld [vmem:[%s619] sm:$0xff]
        %v621 = vld [vmem:[%s619 + $0x8] sm:$0xff]
        %v622 = vld [vmem:[%s619 + $0x10] sm:$0xff]
        %v623 = vld [vmem:[%s619 + $0x18] sm:$0xff]
        %624 = vst [vmem:[#allocation2 + $0x1b0] sm:$0xff] %v620
        %625 = vst [vmem:[#allocation2 + $0x1b8] sm:$0xff] %v621
        %626 = vst [vmem:[#allocation2 + $0x1c0] sm:$0xff] %v622
        %631 = vrot.lane.b32.xlu0 %v620, 127
        %v632 = vpop.permute.xlu0 %631
        %633 = vrot.lane.b32.xlu0 %v621, 127
        %v634 = vpop.permute.xlu0 %633
        %635 = vrot.lane.b32.xlu0 %v622, 127
        %v636 = vpop.permute.xlu0 %635
        %637 = vrot.lane.b32.xlu0 %v623, 127
        %v638 = vpop.permute.xlu0 %637
        %v639 = vsel %vm335, %v632, %v634
        %v640 = vsel %vm335, %v634, %v636
        %v641 = vsel %vm335, %v636, %v638
        %645 = vst [vmem:[#allocation2 + $0x1c8] sm:$0xff] %v639
        %646 = vst [vmem:[#allocation2 + $0x1d0] sm:$0xff] %v640
        %647 = vst [vmem:[#allocation2 + $0x1d8] sm:$0xff] %v641
        %648 = vrot.lane.b32.xlu0 %v620, 126
        %v649 = vpop.permute.xlu0 %648
        %650 = vrot.lane.b32.xlu0 %v621, 126
        %v651 = vpop.permute.xlu0 %650
        %652 = vrot.lane.b32.xlu0 %v622, 126
        %v653 = vpop.permute.xlu0 %652
        %654 = vrot.lane.b32.xlu0 %v623, 126
        %v655 = vpop.permute.xlu0 %654
        %v656 = vsel %vm353, %v649, %v651
        %v657 = vsel %vm353, %v651, %v653
        %v658 = vsel %vm353, %v653, %v655
        %662 = vst [vmem:[#allocation2 + $0x1e0] sm:$0xff] %v656
        %663 = vst [vmem:[#allocation2 + $0x1e8] sm:$0xff] %v657
        %664 = vst [vmem:[#allocation2 + $0x1f0] sm:$0xff] %v658
        %665 = vrot.lane.b32.xlu0 %v620, 110
        %v666 = vpop.permute.xlu0 %665
        %667 = vrot.lane.b32.xlu0 %v621, 110
        %v668 = vpop.permute.xlu0 %667
        %669 = vrot.lane.b32.xlu0 %v622, 110
        %v670 = vpop.permute.xlu0 %669
        %671 = vrot.lane.b32.xlu0 %v623, 110
        %v672 = vpop.permute.xlu0 %671
        %v673 = vsel %vm371, %v666, %v668
        %v674 = vsel %vm371, %v668, %v670
        %v675 = vsel %vm371, %v670, %v672
        %679 = vst [vmem:[#allocation2 + $0x1f8] sm:$0xff] %v673
        %680 = vst [vmem:[#allocation2 + $0x200] sm:$0xff] %v674
        %681 = vst [vmem:[#allocation2 + $0x208] sm:$0xff] %v675
        %682 = vrot.lane.b32.xlu0 %v620, 109
        %v683 = vpop.permute.xlu0 %682
        %684 = vrot.lane.b32.xlu0 %v621, 109
        %v685 = vpop.permute.xlu0 %684
        %686 = vrot.lane.b32.xlu0 %v622, 109
        %v687 = vpop.permute.xlu0 %686
        %688 = vrot.lane.b32.xlu0 %v623, 109
        %v689 = vpop.permute.xlu0 %688
        %v690 = vsel %vm389, %v683, %v685
        %v691 = vsel %vm389, %v685, %v687
        %v692 = vsel %vm389, %v687, %v689
        %696 = vst [vmem:[#allocation2 + $0x210] sm:$0xff] %v690
        %697 = vst [vmem:[#allocation2 + $0x218] sm:$0xff] %v691
        %698 = vst [vmem:[#allocation2 + $0x220] sm:$0xff] %v692
        %699 = vrot.lane.b32.xlu0 %v620, 108
        %v700 = vpop.permute.xlu0 %699
        %701 = vrot.lane.b32.xlu0 %v621, 108
        %v702 = vpop.permute.xlu0 %701
        %703 = vrot.lane.b32.xlu0 %v622, 108
        %v704 = vpop.permute.xlu0 %703
        %705 = vrot.lane.b32.xlu0 %v623, 108
        %v706 = vpop.permute.xlu0 %705
        %v707 = vsel %vm407, %v700, %v702
        %v708 = vsel %vm407, %v702, %v704
        %v709 = vsel %vm407, %v704, %v706
        %713 = vst [vmem:[#allocation2 + $0x228] sm:$0xff] %v707
        %714 = vst [vmem:[#allocation2 + $0x230] sm:$0xff] %v708
        %715 = vst [vmem:[#allocation2 + $0x238] sm:$0xff] %v709
        %716 = vrot.lane.b32.xlu0 %v620, 92
        %v717 = vpop.permute.xlu0 %716
        %718 = vrot.lane.b32.xlu0 %v621, 92
        %v719 = vpop.permute.xlu0 %718
        %720 = vrot.lane.b32.xlu0 %v622, 92
        %v721 = vpop.permute.xlu0 %720
        %722 = vrot.lane.b32.xlu0 %v623, 92
        %v723 = vpop.permute.xlu0 %722
        %v724 = vsel %vm425, %v717, %v719
        %v725 = vsel %vm425, %v719, %v721
        %v726 = vsel %vm425, %v721, %v723
        %730 = vst [vmem:[#allocation2 + $0x240] sm:$0xff] %v724
        %731 = vst [vmem:[#allocation2 + $0x248] sm:$0xff] %v725
        %732 = vst [vmem:[#allocation2 + $0x250] sm:$0xff] %v726
        %733 = vrot.lane.b32.xlu0 %v620, 91
        %v734 = vpop.permute.xlu0 %733
        %735 = vrot.lane.b32.xlu0 %v621, 91
        %v736 = vpop.permute.xlu0 %735
        %737 = vrot.lane.b32.xlu0 %v622, 91
        %v738 = vpop.permute.xlu0 %737
        %739 = vrot.lane.b32.xlu0 %v623, 91
        %v740 = vpop.permute.xlu0 %739
        %v741 = vsel %vm443, %v734, %v736
        %v742 = vsel %vm443, %v736, %v738
        %v743 = vsel %vm443, %v738, %v740
        %747 = vst [vmem:[#allocation2 + $0x258] sm:$0xff] %v741
        %748 = vst [vmem:[#allocation2 + $0x260] sm:$0xff] %v742
        %749 = vst [vmem:[#allocation2 + $0x268] sm:$0xff] %v743
        %750 = vrot.lane.b32.xlu0 %v620, 90
        %v751 = vpop.permute.xlu0 %750
        %752 = vrot.lane.b32.xlu0 %v621, 90
        %v753 = vpop.permute.xlu0 %752
        %754 = vrot.lane.b32.xlu0 %v622, 90
        %v755 = vpop.permute.xlu0 %754
        %756 = vrot.lane.b32.xlu0 %v623, 90
        %v757 = vpop.permute.xlu0 %756
        %v758 = vsel %vm461, %v751, %v753
        %v759 = vsel %vm461, %v753, %v755
        %v760 = vsel %vm461, %v755, %v757
        %764 = vst [vmem:[#allocation2 + $0x270] sm:$0xff] %v758
        %765 = vst [vmem:[#allocation2 + $0x278] sm:$0xff] %v759
        %766 = vst [vmem:[#allocation2 + $0x280] sm:$0xff] %v760
        %v767 = vld [vmem:[#allocation7] sm:$0xff]
        %v768 = vld [vmem:[#allocation7 + $0x8] sm:$0xff]
        %v769 = vld [vmem:[#allocation2] sm:$0xff]
        %v770 = vld [vmem:[#allocation2 + $0x8] sm:$0xff]
        %v771 = vld [vmem:[#allocation2 + $0x10] sm:$0xff]
        %v772 = vld [vmem:[#allocation2 + $0x18] sm:$0xff]
        %v773 = vld [vmem:[#allocation2 + $0x20] sm:$0xff]
        %v774 = vld [vmem:[#allocation2 + $0x28] sm:$0xff]
        %v775 = vld [vmem:[#allocation2 + $0x30] sm:$0xff]
        %v776 = vld [vmem:[#allocation2 + $0x38] sm:$0xff]
        %v777 = vld [vmem:[#allocation2 + $0x40] sm:$0xff]
        %v778 = vld [vmem:[#allocation2 + $0x48] sm:$0xff]
        %v779 = vld [vmem:[#allocation2 + $0x50] sm:$0xff]
        %v780 = vld [vmem:[#allocation2 + $0x58] sm:$0xff]
        %v781 = vld [vmem:[#allocation2 + $0x60] sm:$0xff]
        %v782 = vld [vmem:[#allocation2 + $0x68] sm:$0xff]
        %v783 = vld [vmem:[#allocation2 + $0x70] sm:$0xff]
        %v784 = vld [vmem:[#allocation2 + $0x78] sm:$0xff]
        %v785 = vld [vmem:[#allocation2 + $0x80] sm:$0xff]
        %v786 = vld [vmem:[#allocation2 + $0x88] sm:$0xff]
        %v787 = vld [vmem:[#allocation2 + $0x90] sm:$0xff]
        %v788 = vld [vmem:[#allocation2 + $0x98] sm:$0xff]
        %v789 = vld [vmem:[#allocation2 + $0xa0] sm:$0xff]
        %v790 = vld [vmem:[#allocation2 + $0xa8] sm:$0xff]
        %v791 = vld [vmem:[#allocation2 + $0xb0] sm:$0xff]
        %v792 = vld [vmem:[#allocation2 + $0xb8] sm:$0xff]
        %v793 = vld [vmem:[#allocation2 + $0xc0] sm:$0xff]
        %v794 = vld [vmem:[#allocation2 + $0xc8] sm:$0xff]
        %v795 = vld [vmem:[#allocation2 + $0xd0] sm:$0xff]
        %v796 = vld [vmem:[#allocation2 + $0xd8] sm:$0xff]
        %v797 = vld [vmem:[#allocation2 + $0xe0] sm:$0xff]
        %v798 = vld [vmem:[#allocation2 + $0xe8] sm:$0xff]
        %v799 = vld [vmem:[#allocation2 + $0xf0] sm:$0xff]
        %v800 = vld [vmem:[#allocation2 + $0xf8] sm:$0xff]
        %v801 = vld [vmem:[#allocation2 + $0x100] sm:$0xff]
        %v802 = vld [vmem:[#allocation2 + $0x108] sm:$0xff]
        %v803 = vld [vmem:[#allocation2 + $0x110] sm:$0xff]
        %v804 = vld [vmem:[#allocation2 + $0x118] sm:$0xff]
        %v805 = vld [vmem:[#allocation2 + $0x120] sm:$0xff]
        %v806 = vld [vmem:[#allocation2 + $0x128] sm:$0xff]
        %v807 = vld [vmem:[#allocation2 + $0x130] sm:$0xff]
        %v808 = vld [vmem:[#allocation2 + $0x138] sm:$0xff]
        %v809 = vld [vmem:[#allocation2 + $0x140] sm:$0xff]
        %v810 = vld [vmem:[#allocation2 + $0x148] sm:$0xff]
        %v811 = vld [vmem:[#allocation2 + $0x150] sm:$0xff]
        %v812 = vld [vmem:[#allocation2 + $0x158] sm:$0xff]
        %v813 = vld [vmem:[#allocation2 + $0x160] sm:$0xff]
        %v814 = vld [vmem:[#allocation2 + $0x168] sm:$0xff]
        %v815 = vld [vmem:[#allocation2 + $0x170] sm:$0xff]
        %v816 = vld [vmem:[#allocation2 + $0x178] sm:$0xff]
        %v817 = vld [vmem:[#allocation2 + $0x180] sm:$0xff]
        %v818 = vld [vmem:[#allocation2 + $0x188] sm:$0xff]
        %v819 = vld [vmem:[#allocation2 + $0x190] sm:$0xff]
        %v820 = vld [vmem:[#allocation2 + $0x198] sm:$0xff]
        %v821 = vld [vmem:[#allocation2 + $0x1a0] sm:$0xff]
        %v822 = vld [vmem:[#allocation2 + $0x1a8] sm:$0xff]
        %v823 = vld [vmem:[#allocation2 + $0x1b0] sm:$0xff]
        %v824 = vld [vmem:[#allocation2 + $0x1b8] sm:$0xff]
        %v825 = vld [vmem:[#allocation2 + $0x1c0] sm:$0xff]
        %v826 = vld [vmem:[#allocation2 + $0x1c8] sm:$0xff]
        %v827 = vld [vmem:[#allocation2 + $0x1d0] sm:$0xff]
        %v828 = vld [vmem:[#allocation2 + $0x1d8] sm:$0xff]
        %v829 = vld [vmem:[#allocation2 + $0x1e0] sm:$0xff]
        %v830 = vld [vmem:[#allocation2 + $0x1e8] sm:$0xff]
        %v831 = vld [vmem:[#allocation2 + $0x1f0] sm:$0xff]
        %v832 = vld [vmem:[#allocation2 + $0x1f8] sm:$0xff]
        %v833 = vld [vmem:[#allocation2 + $0x200] sm:$0xff]
        %v834 = vld [vmem:[#allocation2 + $0x208] sm:$0xff]
        %v835 = vld [vmem:[#allocation2 + $0x210] sm:$0xff]
        %v836 = vld [vmem:[#allocation2 + $0x218] sm:$0xff]
        %v837 = vld [vmem:[#allocation2 + $0x220] sm:$0xff]
        %v838 = vld [vmem:[#allocation2 + $0x228] sm:$0xff]
        %v839 = vld [vmem:[#allocation2 + $0x230] sm:$0xff]
        %v840 = vld [vmem:[#allocation2 + $0x238] sm:$0xff]
        %v841 = vld [vmem:[#allocation2 + $0x240] sm:$0xff]
        %v842 = vld [vmem:[#allocation2 + $0x248] sm:$0xff]
        %v843 = vld [vmem:[#allocation2 + $0x250] sm:$0xff]
        %v844 = vld [vmem:[#allocation2 + $0x258] sm:$0xff]
        %v845 = vld [vmem:[#allocation2 + $0x260] sm:$0xff]
        %v846 = vld [vmem:[#allocation2 + $0x268] sm:$0xff]
        %v847 = vld [vmem:[#allocation2 + $0x270] sm:$0xff]
        %v848 = vld [vmem:[#allocation2 + $0x278] sm:$0xff]
        %v849 = vld [vmem:[#allocation2 + $0x280] sm:$0xff]
        %v850 = vld [vmem:[%s2] sm:$0xff]
        %852 = vset.pattern.permute.xlu0 0
        %853 = vperm.xlu0 %852, %v850
        %v854 = vpop.permute.xlu0 %853
        %vm856 = vcmask 719872
        %v858 = vsel %vm856, %v768, 0
        %860 = vmatpush.msra.mxu0 %v814
        %861 = vmatpush.msra.mxu0 %v811
        %862 = vmatpush.msra.mxu0 %v808
        %863 = vmatpush.msra.mxu0 %v805
        %864 = vmatpush.msra.mxu0 %v802
        %865 = vmatpush.msra.mxu0 %v799
        %866 = vmatpush.msra.mxu0 %v796
        %867 = vmatpush.msra.mxu0 %v793
        %868 = vmatpush.msra.mxu0 %v790
        %869 = vmatpush.msra.mxu0 %v787
        %870 = vmatpush.msra.mxu0 %v784
        %871 = vmatpush.msra.mxu0 %v781
        %872 = vmatpush.msra.mxu0 %v778
        %873 = vmatpush.msra.mxu0 %v775
        %874 = vmatpush.msra.mxu0 %v772
        %875 = vmatpush.msra.mxu0 %v769
        %876 = vmatmul.f32.gmra.mxu0 %v767
        %v877 = vpop.f32.mrf.mxu0
        %v878 = vadd.f32 %v854, %v877
        %879 = vdwg.mxu0
        %880 = vmatpush.msra.mxu0 0.0
        %881 = vmatpush.msra.mxu0 0.0
        %882 = vmatpush.msra.mxu0 0.0
        %883 = vmatpush.msra.mxu0 0.0
        %884 = vmatpush.msra.mxu0 0.0
        %885 = vmatpush.msra.mxu0 %v847
        %886 = vmatpush.msra.mxu0 %v844
        %887 = vmatpush.msra.mxu0 %v841
        %888 = vmatpush.msra.mxu0 %v838
        %889 = vmatpush.msra.mxu0 %v835
        %890 = vmatpush.msra.mxu0 %v832
        %891 = vmatpush.msra.mxu0 %v829
        %892 = vmatpush.msra.mxu0 %v826
        %893 = vmatpush.msra.mxu0 %v823
        %894 = vmatpush.msra.mxu0 %v820
        %895 = vmatpush.msra.mxu0 %v817
        %896 = vmatmul.f32.gmra.mxu0 %v858
        %v897 = vpop.f32.mrf.mxu0
        %v898 = vadd.f32 %v878, %v897
        %899 = vdwg.mxu0
        %900 = vmatpush.msra.mxu0 %v815
        %901 = vmatpush.msra.mxu0 %v812
        %902 = vmatpush.msra.mxu0 %v809
        %903 = vmatpush.msra.mxu0 %v806
        %904 = vmatpush.msra.mxu0 %v803
        %905 = vmatpush.msra.mxu0 %v800
        %906 = vmatpush.msra.mxu0 %v797
        %907 = vmatpush.msra.mxu0 %v794
        %908 = vmatpush.msra.mxu0 %v791
        %909 = vmatpush.msra.mxu0 %v788
        %910 = vmatpush.msra.mxu0 %v785
        %911 = vmatpush.msra.mxu0 %v782
        %912 = vmatpush.msra.mxu0 %v779
        %913 = vmatpush.msra.mxu0 %v776
        %914 = vmatpush.msra.mxu0 %v773
        %915 = vmatpush.msra.mxu0 %v770
        %916 = vmatmul.f32.gmra.mxu0 %v767
        %v917 = vpop.f32.mrf.mxu0
        %v918 = vadd.f32 %v854, %v917
        %919 = vdwg.mxu0
        %920 = vmatpush.msra.mxu0 0.0
        %921 = vmatpush.msra.mxu0 0.0
        %922 = vmatpush.msra.mxu0 0.0
        %923 = vmatpush.msra.mxu0 0.0
        %924 = vmatpush.msra.mxu0 0.0
        %925 = vmatpush.msra.mxu0 %v848
        %926 = vmatpush.msra.mxu0 %v845
        %927 = vmatpush.msra.mxu0 %v842
        %928 = vmatpush.msra.mxu0 %v839
        %929 = vmatpush.msra.mxu0 %v836
        %930 = vmatpush.msra.mxu0 %v833
        %931 = vmatpush.msra.mxu0 %v830
        %932 = vmatpush.msra.mxu0 %v827
        %933 = vmatpush.msra.mxu0 %v824
        %934 = vmatpush.msra.mxu0 %v821
        %935 = vmatpush.msra.mxu0 %v818
        %936 = vmatmul.f32.gmra.mxu0 %v858
        %v937 = vpop.f32.mrf.mxu0
        %v938 = vadd.f32 %v918, %v937
        %939 = vdwg.mxu0
        %940 = vmatpush.msra.mxu0 %v816
        %941 = vmatpush.msra.mxu0 %v813
        %942 = vmatpush.msra.mxu0 %v810
        %943 = vmatpush.msra.mxu0 %v807
        %944 = vmatpush.msra.mxu0 %v804
        %945 = vmatpush.msra.mxu0 %v801
        %946 = vmatpush.msra.mxu0 %v798
        %947 = vmatpush.msra.mxu0 %v795
        %948 = vmatpush.msra.mxu0 %v792
        %949 = vmatpush.msra.mxu0 %v789
        %950 = vmatpush.msra.mxu0 %v786
        %951 = vmatpush.msra.mxu0 %v783
        %952 = vmatpush.msra.mxu0 %v780
        %953 = vmatpush.msra.mxu0 %v777
        %954 = vmatpush.msra.mxu0 %v774
        %955 = vmatpush.msra.mxu0 %v771
        %956 = vmatmul.f32.gmra.mxu0 %v767
        %v957 = vpop.f32.mrf.mxu0
        %v958 = vadd.f32 %v854, %v957
        %959 = vdwg.mxu0
        %960 = vmatpush.msra.mxu0 0.0
        %961 = vmatpush.msra.mxu0 0.0
        %962 = vmatpush.msra.mxu0 0.0
        %963 = vmatpush.msra.mxu0 0.0
        %964 = vmatpush.msra.mxu0 0.0
        %965 = vmatpush.msra.mxu0 %v849
        %966 = vmatpush.msra.mxu0 %v846
        %967 = vmatpush.msra.mxu0 %v843
        %968 = vmatpush.msra.mxu0 %v840
        %969 = vmatpush.msra.mxu0 %v837
        %970 = vmatpush.msra.mxu0 %v834
        %971 = vmatpush.msra.mxu0 %v831
        %972 = vmatpush.msra.mxu0 %v828
        %973 = vmatpush.msra.mxu0 %v825
        %974 = vmatpush.msra.mxu0 %v822
        %975 = vmatpush.msra.mxu0 %v819
        %976 = vmatmul.f32.gmra.mxu0 %v858
        %v977 = vpop.f32.mrf.mxu0
        %v978 = vadd.f32 %v958, %v977
        %979 = vdwg.mxu0
        %v980 = vmul.f32 %v898, 0.5
        %v981 = vmul.f32 %v938, 0.5
        %v982 = vmul.f32 %v978, 0.5
        %v983 = vmul.f32 %v898, 0.70710677
        %v984 = vmul.f32 %v938, 0.70710677
        %v985 = vmul.f32 %v978, 0.70710677
        %v986 = vand.u32 2147483647, %v983
        %v987 = vand.u32 2147483647, %v984
        %v988 = vand.u32 2147483647, %v985
        %v989 = vmul.f32 %v986, 0.3275911
        %v990 = vmul.f32 %v987, 0.3275911
        %v991 = vmul.f32 %v988, 0.3275911
        %v992 = vadd.f32 %v989, 1.0
        %v993 = vadd.f32 %v990, 1.0
        %v994 = vadd.f32 %v991, 1.0
        %v995 = vrcp.pop %v992
        %v996 = vmul.f32 %v992, %v995
        %v997 = vsub.f32 1.0, %v996
        %v998 = vmul.f32 %v995, %v997
        %v999 = vadd.f32 %v995, %v998
        %vm1000 = vweird.f32 %v992
        %vm1001 = vweird.f32 %v995
        %vm1002 = vmor %vm1000, %vm1001
        %v1003 = vsel %vm1002, %v995, %v999
        %v1004 = vand.u32 2147483647, %v992
        %vm1005 = vcmp.eq.f32.partialorder %v1004, 8.507059e+37
        %v1006 = vand.u32 %v992, 2147483648
        %v1007 = vor.u32 1.1754944e-38, %v1006
        %v1008 = vsel %vm1005, %v1007, %v1003
        %v1009 = vmul.f32 1.0, %v1008
        %v1010 = vrcp.pop %v993
        %v1011 = vmul.f32 %v993, %v1010
        %v1012 = vsub.f32 1.0, %v1011
        %v1013 = vmul.f32 %v1010, %v1012
        %v1014 = vadd.f32 %v1010, %v1013
        %vm1015 = vweird.f32 %v993
        %vm1016 = vweird.f32 %v1010
        %vm1017 = vmor %vm1015, %vm1016
        %v1018 = vsel %vm1017, %v1010, %v1014
        %v1019 = vand.u32 2147483647, %v993
        %vm1020 = vcmp.eq.f32.partialorder %v1019, 8.507059e+37
        %v1021 = vand.u32 %v993, 2147483648
        %v1022 = vor.u32 1.1754944e-38, %v1021
        %v1023 = vsel %vm1020, %v1022, %v1018
        %v1024 = vmul.f32 1.0, %v1023
        %v1025 = vrcp.pop %v994
        %v1026 = vmul.f32 %v994, %v1025
        %v1027 = vsub.f32 1.0, %v1026
        %v1028 = vmul.f32 %v1025, %v1027
        %v1029 = vadd.f32 %v1025, %v1028
        %vm1030 = vweird.f32 %v994
        %vm1031 = vweird.f32 %v1025
        %vm1032 = vmor %vm1030, %vm1031
        %v1033 = vsel %vm1032, %v1025, %v1029
        %v1034 = vand.u32 2147483647, %v994
        %vm1035 = vcmp.eq.f32.partialorder %v1034, 8.507059e+37
        %v1036 = vand.u32 %v994, 2147483648
        %v1037 = vor.u32 1.1754944e-38, %v1036
        %v1038 = vsel %vm1035, %v1037, %v1033
        %v1039 = vmul.f32 1.0, %v1038
        %v1040 = vmul.f32 %v1009, 1.0614054
        %v1041 = vmul.f32 %v1024, 1.0614054
        %v1042 = vmul.f32 %v1039, 1.0614054
        %v1043 = vadd.f32 %v1040, -1.4531521
        %v1044 = vadd.f32 %v1041, -1.4531521
        %v1045 = vadd.f32 %v1042, -1.4531521
        %v1046 = vmul.f32 %v1009, %v1043
        %v1047 = vmul.f32 %v1024, %v1044
        %v1048 = vmul.f32 %v1039, %v1045
        %v1049 = vadd.f32 %v1046, 1.4214138
        %v1050 = vadd.f32 %v1047, 1.4214138
        %v1051 = vadd.f32 %v1048, 1.4214138
        %v1052 = vmul.f32 %v1009, %v1049
        %v1053 = vmul.f32 %v1024, %v1050
        %v1054 = vmul.f32 %v1039, %v1051
        %v1055 = vadd.f32 %v1052, -0.28449672
        %v1056 = vadd.f32 %v1053, -0.28449672
        %v1057 = vadd.f32 %v1054, -0.28449672
        %v1058 = vmul.f32 %v1009, %v1055
        %v1059 = vmul.f32 %v1024, %v1056
        %v1060 = vmul.f32 %v1039, %v1057
        %v1061 = vadd.f32 %v1058, 0.2548296
        %v1062 = vadd.f32 %v1059, 0.2548296
        %v1063 = vadd.f32 %v1060, 0.2548296
        %v1064 = vmul.f32 %v1009, %v1061
        %v1065 = vmul.f32 %v1024, %v1062
        %v1066 = vmul.f32 %v1039, %v1063
        %v1067 = vsub.f32 0.0, %v986
        %v1068 = vsub.f32 0.0, %v987
        %v1069 = vsub.f32 0.0, %v988
        %v1070 = vmul.f32 %v1067, %v986
        %v1071 = vmul.f32 %v1068, %v987
        %v1072 = vmul.f32 %v1069, %v988
        %v1073 = vmul.f32 %v1070, 1.442695
        %v1074 = vpow.pop %v1073
        %v1075 = vmul.f32 %v1071, 1.442695
        %v1076 = vpow.pop %v1075
        %v1077 = vmul.f32 %v1072, 1.442695
        %v1078 = vpow.pop %v1077
        %v1079 = vmul.f32 %v1064, %v1074
        %v1080 = vmul.f32 %v1065, %v1076
        %v1081 = vmul.f32 %v1066, %v1078
        %v1082 = vsub.f32 1.0, %v1079
        %v1083 = vsub.f32 1.0, %v1080
        %v1084 = vsub.f32 1.0, %v1081
        %vm1085 = vcmp.ge.f32.partialorder %v983, 0.0
        %vm1086 = vcmp.ge.f32.partialorder %v984, 0.0
        %vm1087 = vcmp.ge.f32.partialorder %v985, 0.0
        %v1088 = vsub.f32 0.0, %v1082
        %v1089 = vsub.f32 0.0, %v1083
        %v1090 = vsub.f32 0.0, %v1084
        %v1091 = vsel %vm1085, %v1082, %v1088
        %v1092 = vsel %vm1086, %v1083, %v1089
        %v1093 = vsel %vm1087, %v1084, %v1090
        %v1094 = vadd.f32 %v1091, 1.0
        %v1095 = vadd.f32 %v1092, 1.0
        %v1096 = vadd.f32 %v1093, 1.0
        %v1097 = vmul.f32 %v980, %v1094
        %v1098 = vmul.f32 %v981, %v1095
        %v1099 = vmul.f32 %v982, %v1096
        %1100 = vst [vmem:[#allocation3] sm:$0xff] %v1097
        %1101 = vst [vmem:[#allocation3 + $0x8] sm:$0xff] %v1098
        %1102 = vst [vmem:[#allocation3 + $0x10] sm:$0xff] %v1099
        %s1103 = scalar_lea.vmem %s279, 96 [#allocation4]
        %v1104 = vld [vmem:[%s1103] sm:$0xff]
        %v1105 = vld [vmem:[%s1103 + $0x8] sm:$0xff]
        %v1106 = vld [vmem:[%s1103 + $0x10] sm:$0xff]
        %v1107 = vld [vmem:[%s1103 + $0x18] sm:$0xff]
        %1108 = vst [vmem:[#allocation2] sm:$0xff] %v1104
        %1109 = vst [vmem:[#allocation2 + $0x8] sm:$0xff] %v1105
        %1110 = vst [vmem:[#allocation2 + $0x10] sm:$0xff] %v1106
        %1115 = vrot.lane.b32.xlu0 %v1104, 127
        %v1116 = vpop.permute.xlu0 %1115
        %1117 = vrot.lane.b32.xlu0 %v1105, 127
        %v1118 = vpop.permute.xlu0 %1117
        %1119 = vrot.lane.b32.xlu0 %v1106, 127
        %v1120 = vpop.permute.xlu0 %1119
        %1121 = vrot.lane.b32.xlu0 %v1107, 127
        %v1122 = vpop.permute.xlu0 %1121
        %v1123 = vsel %vm335, %v1116, %v1118
        %v1124 = vsel %vm335, %v1118, %v1120
        %v1125 = vsel %vm335, %v1120, %v1122
        %1129 = vst [vmem:[#allocation2 + $0x18] sm:$0xff] %v1123
        %1130 = vst [vmem:[#allocation2 + $0x20] sm:$0xff] %v1124
        %1131 = vst [vmem:[#allocation2 + $0x28] sm:$0xff] %v1125
        %1132 = vrot.lane.b32.xlu0 %v1104, 126
        %v1133 = vpop.permute.xlu0 %1132
        %1134 = vrot.lane.b32.xlu0 %v1105, 126
        %v1135 = vpop.permute.xlu0 %1134
        %1136 = vrot.lane.b32.xlu0 %v1106, 126
        %v1137 = vpop.permute.xlu0 %1136
        %1138 = vrot.lane.b32.xlu0 %v1107, 126
        %v1139 = vpop.permute.xlu0 %1138
        %v1140 = vsel %vm353, %v1133, %v1135
        %v1141 = vsel %vm353, %v1135, %v1137
        %v1142 = vsel %vm353, %v1137, %v1139
        %1146 = vst [vmem:[#allocation2 + $0x30] sm:$0xff] %v1140
        %1147 = vst [vmem:[#allocation2 + $0x38] sm:$0xff] %v1141
        %1148 = vst [vmem:[#allocation2 + $0x40] sm:$0xff] %v1142
        %1149 = vrot.lane.b32.xlu0 %v1104, 110
        %v1150 = vpop.permute.xlu0 %1149
        %1151 = vrot.lane.b32.xlu0 %v1105, 110
        %v1152 = vpop.permute.xlu0 %1151
        %1153 = vrot.lane.b32.xlu0 %v1106, 110
        %v1154 = vpop.permute.xlu0 %1153
        %1155 = vrot.lane.b32.xlu0 %v1107, 110
        %v1156 = vpop.permute.xlu0 %1155
        %v1157 = vsel %vm371, %v1150, %v1152
        %v1158 = vsel %vm371, %v1152, %v1154
        %v1159 = vsel %vm371, %v1154, %v1156
        %1163 = vst [vmem:[#allocation2 + $0x48] sm:$0xff] %v1157
        %1164 = vst [vmem:[#allocation2 + $0x50] sm:$0xff] %v1158
        %1165 = vst [vmem:[#allocation2 + $0x58] sm:$0xff] %v1159
        %1166 = vrot.lane.b32.xlu0 %v1104, 109
        %v1167 = vpop.permute.xlu0 %1166
        %1168 = vrot.lane.b32.xlu0 %v1105, 109
        %v1169 = vpop.permute.xlu0 %1168
        %1170 = vrot.lane.b32.xlu0 %v1106, 109
        %v1171 = vpop.permute.xlu0 %1170
        %1172 = vrot.lane.b32.xlu0 %v1107, 109
        %v1173 = vpop.permute.xlu0 %1172
        %v1174 = vsel %vm389, %v1167, %v1169
        %v1175 = vsel %vm389, %v1169, %v1171
        %v1176 = vsel %vm389, %v1171, %v1173
        %1180 = vst [vmem:[#allocation2 + $0x60] sm:$0xff] %v1174
        %1181 = vst [vmem:[#allocation2 + $0x68] sm:$0xff] %v1175
        %1182 = vst [vmem:[#allocation2 + $0x70] sm:$0xff] %v1176
        %1183 = vrot.lane.b32.xlu0 %v1104, 108
        %v1184 = vpop.permute.xlu0 %1183
        %1185 = vrot.lane.b32.xlu0 %v1105, 108
        %v1186 = vpop.permute.xlu0 %1185
        %1187 = vrot.lane.b32.xlu0 %v1106, 108
        %v1188 = vpop.permute.xlu0 %1187
        %1189 = vrot.lane.b32.xlu0 %v1107, 108
        %v1190 = vpop.permute.xlu0 %1189
        %v1191 = vsel %vm407, %v1184, %v1186
        %v1192 = vsel %vm407, %v1186, %v1188
        %v1193 = vsel %vm407, %v1188, %v1190
        %1197 = vst [vmem:[#allocation2 + $0x78] sm:$0xff] %v1191
        %1198 = vst [vmem:[#allocation2 + $0x80] sm:$0xff] %v1192
        %1199 = vst [vmem:[#allocation2 + $0x88] sm:$0xff] %v1193
        %1200 = vrot.lane.b32.xlu0 %v1104, 92
        %v1201 = vpop.permute.xlu0 %1200
        %1202 = vrot.lane.b32.xlu0 %v1105, 92
        %v1203 = vpop.permute.xlu0 %1202
        %1204 = vrot.lane.b32.xlu0 %v1106, 92
        %v1205 = vpop.permute.xlu0 %1204
        %1206 = vrot.lane.b32.xlu0 %v1107, 92
        %v1207 = vpop.permute.xlu0 %1206
        %v1208 = vsel %vm425, %v1201, %v1203
        %v1209 = vsel %vm425, %v1203, %v1205
        %v1210 = vsel %vm425, %v1205, %v1207
        %1214 = vst [vmem:[#allocation2 + $0x90] sm:$0xff] %v1208
        %1215 = vst [vmem:[#allocation2 + $0x98] sm:$0xff] %v1209
        %1216 = vst [vmem:[#allocation2 + $0xa0] sm:$0xff] %v1210
        %1217 = vrot.lane.b32.xlu0 %v1104, 91
        %v1218 = vpop.permute.xlu0 %1217
        %1219 = vrot.lane.b32.xlu0 %v1105, 91
        %v1220 = vpop.permute.xlu0 %1219
        %1221 = vrot.lane.b32.xlu0 %v1106, 91
        %v1222 = vpop.permute.xlu0 %1221
        %1223 = vrot.lane.b32.xlu0 %v1107, 91
        %v1224 = vpop.permute.xlu0 %1223
        %v1225 = vsel %vm443, %v1218, %v1220
        %v1226 = vsel %vm443, %v1220, %v1222
        %v1227 = vsel %vm443, %v1222, %v1224
        %1231 = vst [vmem:[#allocation2 + $0xa8] sm:$0xff] %v1225
        %1232 = vst [vmem:[#allocation2 + $0xb0] sm:$0xff] %v1226
        %1233 = vst [vmem:[#allocation2 + $0xb8] sm:$0xff] %v1227
        %1234 = vrot.lane.b32.xlu0 %v1104, 90
        %v1235 = vpop.permute.xlu0 %1234
        %1236 = vrot.lane.b32.xlu0 %v1105, 90
        %v1237 = vpop.permute.xlu0 %1236
        %1238 = vrot.lane.b32.xlu0 %v1106, 90
        %v1239 = vpop.permute.xlu0 %1238
        %1240 = vrot.lane.b32.xlu0 %v1107, 90
        %v1241 = vpop.permute.xlu0 %1240
        %v1242 = vsel %vm461, %v1235, %v1237
        %v1243 = vsel %vm461, %v1237, %v1239
        %v1244 = vsel %vm461, %v1239, %v1241
        %1248 = vst [vmem:[#allocation2 + $0xc0] sm:$0xff] %v1242
        %1249 = vst [vmem:[#allocation2 + $0xc8] sm:$0xff] %v1243
        %1250 = vst [vmem:[#allocation2 + $0xd0] sm:$0xff] %v1244
        %s1251 = scalar_lea.vmem [#allocation7], 16
        %v1252 = vld [vmem:[%s1251] sm:$0xff]
        %v1253 = vld [vmem:[%s1251 + $0x8] sm:$0xff]
        %v1254 = vld [vmem:[#allocation2] sm:$0xff]
        %v1255 = vld [vmem:[#allocation2 + $0x8] sm:$0xff]
        %v1256 = vld [vmem:[#allocation2 + $0x10] sm:$0xff]
        %v1257 = vld [vmem:[#allocation2 + $0x18] sm:$0xff]
        %v1258 = vld [vmem:[#allocation2 + $0x20] sm:$0xff]
        %v1259 = vld [vmem:[#allocation2 + $0x28] sm:$0xff]
        %v1260 = vld [vmem:[#allocation2 + $0x30] sm:$0xff]
        %v1261 = vld [vmem:[#allocation2 + $0x38] sm:$0xff]
        %v1262 = vld [vmem:[#allocation2 + $0x40] sm:$0xff]
        %v1263 = vld [vmem:[#allocation2 + $0x48] sm:$0xff]
        %v1264 = vld [vmem:[#allocation2 + $0x50] sm:$0xff]
        %v1265 = vld [vmem:[#allocation2 + $0x58] sm:$0xff]
        %v1266 = vld [vmem:[#allocation2 + $0x60] sm:$0xff]
        %v1267 = vld [vmem:[#allocation2 + $0x68] sm:$0xff]
        %v1268 = vld [vmem:[#allocation2 + $0x70] sm:$0xff]
        %v1269 = vld [vmem:[#allocation2 + $0x78] sm:$0xff]
        %v1270 = vld [vmem:[#allocation2 + $0x80] sm:$0xff]
        %v1271 = vld [vmem:[#allocation2 + $0x88] sm:$0xff]
        %v1272 = vld [vmem:[#allocation2 + $0x90] sm:$0xff]
        %v1273 = vld [vmem:[#allocation2 + $0x98] sm:$0xff]
        %v1274 = vld [vmem:[#allocation2 + $0xa0] sm:$0xff]
        %v1275 = vld [vmem:[#allocation2 + $0xa8] sm:$0xff]
        %v1276 = vld [vmem:[#allocation2 + $0xb0] sm:$0xff]
        %v1277 = vld [vmem:[#allocation2 + $0xb8] sm:$0xff]
        %v1278 = vld [vmem:[#allocation2 + $0xc0] sm:$0xff]
        %v1279 = vld [vmem:[#allocation2 + $0xc8] sm:$0xff]
        %v1280 = vld [vmem:[#allocation2 + $0xd0] sm:$0xff]
        %v1281 = vld [vmem:[#allocation2 + $0xd8] sm:$0xff]
        %v1282 = vld [vmem:[#allocation2 + $0xe0] sm:$0xff]
        %v1283 = vld [vmem:[#allocation2 + $0xe8] sm:$0xff]
        %v1284 = vld [vmem:[#allocation2 + $0xf0] sm:$0xff]
        %v1285 = vld [vmem:[#allocation2 + $0xf8] sm:$0xff]
        %v1286 = vld [vmem:[#allocation2 + $0x100] sm:$0xff]
        %v1287 = vld [vmem:[#allocation2 + $0x108] sm:$0xff]
        %v1288 = vld [vmem:[#allocation2 + $0x110] sm:$0xff]
        %v1289 = vld [vmem:[#allocation2 + $0x118] sm:$0xff]
        %v1290 = vld [vmem:[#allocation2 + $0x120] sm:$0xff]
        %v1291 = vld [vmem:[#allocation2 + $0x128] sm:$0xff]
        %v1292 = vld [vmem:[#allocation2 + $0x130] sm:$0xff]
        %v1293 = vld [vmem:[#allocation2 + $0x138] sm:$0xff]
        %v1294 = vld [vmem:[#allocation2 + $0x140] sm:$0xff]
        %v1295 = vld [vmem:[#allocation2 + $0x148] sm:$0xff]
        %v1296 = vld [vmem:[#allocation2 + $0x150] sm:$0xff]
        %v1297 = vld [vmem:[#allocation2 + $0x158] sm:$0xff]
        %v1298 = vld [vmem:[#allocation2 + $0x160] sm:$0xff]
        %v1299 = vld [vmem:[#allocation2 + $0x168] sm:$0xff]
        %v1300 = vld [vmem:[#allocation2 + $0x170] sm:$0xff]
        %v1301 = vld [vmem:[#allocation2 + $0x178] sm:$0xff]
        %v1302 = vld [vmem:[#allocation2 + $0x180] sm:$0xff]
        %v1303 = vld [vmem:[#allocation2 + $0x188] sm:$0xff]
        %v1304 = vld [vmem:[#allocation2 + $0x190] sm:$0xff]
        %v1305 = vld [vmem:[#allocation2 + $0x198] sm:$0xff]
        %v1306 = vld [vmem:[#allocation2 + $0x1a0] sm:$0xff]
        %v1307 = vld [vmem:[#allocation2 + $0x1a8] sm:$0xff]
        %v1308 = vld [vmem:[#allocation2 + $0x1b0] sm:$0xff]
        %v1309 = vld [vmem:[#allocation2 + $0x1b8] sm:$0xff]
        %v1310 = vld [vmem:[#allocation2 + $0x1c0] sm:$0xff]
        %v1311 = vld [vmem:[#allocation2 + $0x1c8] sm:$0xff]
        %v1312 = vld [vmem:[#allocation2 + $0x1d0] sm:$0xff]
        %v1313 = vld [vmem:[#allocation2 + $0x1d8] sm:$0xff]
        %v1314 = vld [vmem:[#allocation2 + $0x1e0] sm:$0xff]
        %v1315 = vld [vmem:[#allocation2 + $0x1e8] sm:$0xff]
        %v1316 = vld [vmem:[#allocation2 + $0x1f0] sm:$0xff]
        %v1317 = vld [vmem:[#allocation2 + $0x1f8] sm:$0xff]
        %v1318 = vld [vmem:[#allocation2 + $0x200] sm:$0xff]
        %v1319 = vld [vmem:[#allocation2 + $0x208] sm:$0xff]
        %v1320 = vld [vmem:[#allocation2 + $0x210] sm:$0xff]
        %v1321 = vld [vmem:[#allocation2 + $0x218] sm:$0xff]
        %v1322 = vld [vmem:[#allocation2 + $0x220] sm:$0xff]
        %v1323 = vld [vmem:[#allocation2 + $0x228] sm:$0xff]
        %v1324 = vld [vmem:[#allocation2 + $0x230] sm:$0xff]
        %v1325 = vld [vmem:[#allocation2 + $0x238] sm:$0xff]
        %v1326 = vld [vmem:[#allocation2 + $0x240] sm:$0xff]
        %v1327 = vld [vmem:[#allocation2 + $0x248] sm:$0xff]
        %v1328 = vld [vmem:[#allocation2 + $0x250] sm:$0xff]
        %v1329 = vld [vmem:[#allocation2 + $0x258] sm:$0xff]
        %v1330 = vld [vmem:[#allocation2 + $0x260] sm:$0xff]
        %v1331 = vld [vmem:[#allocation2 + $0x268] sm:$0xff]
        %v1332 = vld [vmem:[#allocation2 + $0x270] sm:$0xff]
        %v1333 = vld [vmem:[#allocation2 + $0x278] sm:$0xff]
        %v1334 = vld [vmem:[#allocation2 + $0x280] sm:$0xff]
        %v1335 = vld [vmem:[%s2] sm:$0xff]
        %1337 = vset.pattern.permute.xlu0 0
        %1338 = vperm.xlu0 %1337, %v1335
        %v1339 = vpop.permute.xlu0 %1338
        %v1342 = vsel %vm856, %v1253, 0
        %1344 = vmatpush.msra.mxu0 %v1299
        %1345 = vmatpush.msra.mxu0 %v1296
        %1346 = vmatpush.msra.mxu0 %v1293
        %1347 = vmatpush.msra.mxu0 %v1290
        %1348 = vmatpush.msra.mxu0 %v1287
        %1349 = vmatpush.msra.mxu0 %v1284
        %1350 = vmatpush.msra.mxu0 %v1281
        %1351 = vmatpush.msra.mxu0 %v1278
        %1352 = vmatpush.msra.mxu0 %v1275
        %1353 = vmatpush.msra.mxu0 %v1272
        %1354 = vmatpush.msra.mxu0 %v1269
        %1355 = vmatpush.msra.mxu0 %v1266
        %1356 = vmatpush.msra.mxu0 %v1263
        %1357 = vmatpush.msra.mxu0 %v1260
        %1358 = vmatpush.msra.mxu0 %v1257
        %1359 = vmatpush.msra.mxu0 %v1254
        %1360 = vmatmul.f32.gmra.mxu0 %v1252
        %v1361 = vpop.f32.mrf.mxu0
        %v1362 = vadd.f32 %v1339, %v1361
        %1363 = vdwg.mxu0
        %1364 = vmatpush.msra.mxu0 0.0
        %1365 = vmatpush.msra.mxu0 0.0
        %1366 = vmatpush.msra.mxu0 0.0
        %1367 = vmatpush.msra.mxu0 0.0
        %1368 = vmatpush.msra.mxu0 0.0
        %1369 = vmatpush.msra.mxu0 %v1332
        %1370 = vmatpush.msra.mxu0 %v1329
        %1371 = vmatpush.msra.mxu0 %v1326
        %1372 = vmatpush.msra.mxu0 %v1323
        %1373 = vmatpush.msra.mxu0 %v1320
        %1374 = vmatpush.msra.mxu0 %v1317
        %1375 = vmatpush.msra.mxu0 %v1314
        %1376 = vmatpush.msra.mxu0 %v1311
        %1377 = vmatpush.msra.mxu0 %v1308
        %1378 = vmatpush.msra.mxu0 %v1305
        %1379 = vmatpush.msra.mxu0 %v1302
        %1380 = vmatmul.f32.gmra.mxu0 %v1342
        %v1381 = vpop.f32.mrf.mxu0
        %v1382 = vadd.f32 %v1362, %v1381
        %1383 = vdwg.mxu0
        %1384 = vmatpush.msra.mxu0 %v1300
        %1385 = vmatpush.msra.mxu0 %v1297
        %1386 = vmatpush.msra.mxu0 %v1294
        %1387 = vmatpush.msra.mxu0 %v1291
        %1388 = vmatpush.msra.mxu0 %v1288
        %1389 = vmatpush.msra.mxu0 %v1285
        %1390 = vmatpush.msra.mxu0 %v1282
        %1391 = vmatpush.msra.mxu0 %v1279
        %1392 = vmatpush.msra.mxu0 %v1276
        %1393 = vmatpush.msra.mxu0 %v1273
        %1394 = vmatpush.msra.mxu0 %v1270
        %1395 = vmatpush.msra.mxu0 %v1267
        %1396 = vmatpush.msra.mxu0 %v1264
        %1397 = vmatpush.msra.mxu0 %v1261
        %1398 = vmatpush.msra.mxu0 %v1258
        %1399 = vmatpush.msra.mxu0 %v1255
        %1400 = vmatmul.f32.gmra.mxu0 %v1252
        %v1401 = vpop.f32.mrf.mxu0
        %v1402 = vadd.f32 %v1339, %v1401
        %1403 = vdwg.mxu0
        %1404 = vmatpush.msra.mxu0 0.0
        %1405 = vmatpush.msra.mxu0 0.0
        %1406 = vmatpush.msra.mxu0 0.0
        %1407 = vmatpush.msra.mxu0 0.0
        %1408 = vmatpush.msra.mxu0 0.0
        %1409 = vmatpush.msra.mxu0 %v1333
        %1410 = vmatpush.msra.mxu0 %v1330
        %1411 = vmatpush.msra.mxu0 %v1327
        %1412 = vmatpush.msra.mxu0 %v1324
        %1413 = vmatpush.msra.mxu0 %v1321
        %1414 = vmatpush.msra.mxu0 %v1318
        %1415 = vmatpush.msra.mxu0 %v1315
        %1416 = vmatpush.msra.mxu0 %v1312
        %1417 = vmatpush.msra.mxu0 %v1309
        %1418 = vmatpush.msra.mxu0 %v1306
        %1419 = vmatpush.msra.mxu0 %v1303
        %1420 = vmatmul.f32.gmra.mxu0 %v1342
        %v1421 = vpop.f32.mrf.mxu0
        %v1422 = vadd.f32 %v1402, %v1421
        %1423 = vdwg.mxu0
        %1424 = vmatpush.msra.mxu0 %v1301
        %1425 = vmatpush.msra.mxu0 %v1298
        %1426 = vmatpush.msra.mxu0 %v1295
        %1427 = vmatpush.msra.mxu0 %v1292
        %1428 = vmatpush.msra.mxu0 %v1289
        %1429 = vmatpush.msra.mxu0 %v1286
        %1430 = vmatpush.msra.mxu0 %v1283
        %1431 = vmatpush.msra.mxu0 %v1280
        %1432 = vmatpush.msra.mxu0 %v1277
        %1433 = vmatpush.msra.mxu0 %v1274
        %1434 = vmatpush.msra.mxu0 %v1271
        %1435 = vmatpush.msra.mxu0 %v1268
        %1436 = vmatpush.msra.mxu0 %v1265
        %1437 = vmatpush.msra.mxu0 %v1262
        %1438 = vmatpush.msra.mxu0 %v1259
        %1439 = vmatpush.msra.mxu0 %v1256
        %1440 = vmatmul.f32.gmra.mxu0 %v1252
        %v1441 = vpop.f32.mrf.mxu0
        %v1442 = vadd.f32 %v1339, %v1441
        %1443 = vdwg.mxu0
        %1444 = vmatpush.msra.mxu0 0.0
        %1445 = vmatpush.msra.mxu0 0.0
        %1446 = vmatpush.msra.mxu0 0.0
        %1447 = vmatpush.msra.mxu0 0.0
        %1448 = vmatpush.msra.mxu0 0.0
        %1449 = vmatpush.msra.mxu0 %v1334
        %1450 = vmatpush.msra.mxu0 %v1331
        %1451 = vmatpush.msra.mxu0 %v1328
        %1452 = vmatpush.msra.mxu0 %v1325
        %1453 = vmatpush.msra.mxu0 %v1322
        %1454 = vmatpush.msra.mxu0 %v1319
        %1455 = vmatpush.msra.mxu0 %v1316
        %1456 = vmatpush.msra.mxu0 %v1313
        %1457 = vmatpush.msra.mxu0 %v1310
        %1458 = vmatpush.msra.mxu0 %v1307
        %1459 = vmatpush.msra.mxu0 %v1304
        %1460 = vmatmul.f32.gmra.mxu0 %v1342
        %v1461 = vpop.f32.mrf.mxu0
        %v1462 = vadd.f32 %v1442, %v1461
        %1463 = vdwg.mxu0
        %v1464 = vmul.f32 %v1382, 0.5
        %v1465 = vmul.f32 %v1422, 0.5
        %v1466 = vmul.f32 %v1462, 0.5
        %v1467 = vmul.f32 %v1382, 0.70710677
        %v1468 = vmul.f32 %v1422, 0.70710677
        %v1469 = vmul.f32 %v1462, 0.70710677
        %v1470 = vand.u32 2147483647, %v1467
        %v1471 = vand.u32 2147483647, %v1468
        %v1472 = vand.u32 2147483647, %v1469
        %v1473 = vmul.f32 %v1470, 0.3275911
        %v1474 = vmul.f32 %v1471, 0.3275911
        %v1475 = vmul.f32 %v1472, 0.3275911
        %v1476 = vadd.f32 %v1473, 1.0
        %v1477 = vadd.f32 %v1474, 1.0
        %v1478 = vadd.f32 %v1475, 1.0
        %v1479 = vrcp.pop %v1476
        %v1480 = vmul.f32 %v1476, %v1479
        %v1481 = vsub.f32 1.0, %v1480
        %v1482 = vmul.f32 %v1479, %v1481
        %v1483 = vadd.f32 %v1479, %v1482
        %vm1484 = vweird.f32 %v1476
        %vm1485 = vweird.f32 %v1479
        %vm1486 = vmor %vm1484, %vm1485
        %v1487 = vsel %vm1486, %v1479, %v1483
        %v1488 = vand.u32 2147483647, %v1476
        %vm1489 = vcmp.eq.f32.partialorder %v1488, 8.507059e+37
        %v1490 = vand.u32 %v1476, 2147483648
        %v1491 = vor.u32 1.1754944e-38, %v1490
        %v1492 = vsel %vm1489, %v1491, %v1487
        %v1493 = vmul.f32 1.0, %v1492
        %v1494 = vrcp.pop %v1477
        %v1495 = vmul.f32 %v1477, %v1494
        %v1496 = vsub.f32 1.0, %v1495
        %v1497 = vmul.f32 %v1494, %v1496
        %v1498 = vadd.f32 %v1494, %v1497
        %vm1499 = vweird.f32 %v1477
        %vm1500 = vweird.f32 %v1494
        %vm1501 = vmor %vm1499, %vm1500
        %v1502 = vsel %vm1501, %v1494, %v1498
        %v1503 = vand.u32 2147483647, %v1477
        %vm1504 = vcmp.eq.f32.partialorder %v1503, 8.507059e+37
        %v1505 = vand.u32 %v1477, 2147483648
        %v1506 = vor.u32 1.1754944e-38, %v1505
        %v1507 = vsel %vm1504, %v1506, %v1502
        %v1508 = vmul.f32 1.0, %v1507
        %v1509 = vrcp.pop %v1478
        %v1510 = vmul.f32 %v1478, %v1509
        %v1511 = vsub.f32 1.0, %v1510
        %v1512 = vmul.f32 %v1509, %v1511
        %v1513 = vadd.f32 %v1509, %v1512
        %vm1514 = vweird.f32 %v1478
        %vm1515 = vweird.f32 %v1509
        %vm1516 = vmor %vm1514, %vm1515
        %v1517 = vsel %vm1516, %v1509, %v1513
        %v1518 = vand.u32 2147483647, %v1478
        %vm1519 = vcmp.eq.f32.partialorder %v1518, 8.507059e+37
        %v1520 = vand.u32 %v1478, 2147483648
        %v1521 = vor.u32 1.1754944e-38, %v1520
        %v1522 = vsel %vm1519, %v1521, %v1517
        %v1523 = vmul.f32 1.0, %v1522
        %v1524 = vmul.f32 %v1493, 1.0614054
        %v1525 = vmul.f32 %v1508, 1.0614054
        %v1526 = vmul.f32 %v1523, 1.0614054
        %v1527 = vadd.f32 %v1524, -1.4531521
        %v1528 = vadd.f32 %v1525, -1.4531521
        %v1529 = vadd.f32 %v1526, -1.4531521
        %v1530 = vmul.f32 %v1493, %v1527
        %v1531 = vmul.f32 %v1508, %v1528
        %v1532 = vmul.f32 %v1523, %v1529
        %v1533 = vadd.f32 %v1530, 1.4214138
        %v1534 = vadd.f32 %v1531, 1.4214138
        %v1535 = vadd.f32 %v1532, 1.4214138
        %v1536 = vmul.f32 %v1493, %v1533
        %v1537 = vmul.f32 %v1508, %v1534
        %v1538 = vmul.f32 %v1523, %v1535
        %v1539 = vadd.f32 %v1536, -0.28449672
        %v1540 = vadd.f32 %v1537, -0.28449672
        %v1541 = vadd.f32 %v1538, -0.28449672
        %v1542 = vmul.f32 %v1493, %v1539
        %v1543 = vmul.f32 %v1508, %v1540
        %v1544 = vmul.f32 %v1523, %v1541
        %v1545 = vadd.f32 %v1542, 0.2548296
        %v1546 = vadd.f32 %v1543, 0.2548296
        %v1547 = vadd.f32 %v1544, 0.2548296
        %v1548 = vmul.f32 %v1493, %v1545
        %v1549 = vmul.f32 %v1508, %v1546
        %v1550 = vmul.f32 %v1523, %v1547
        %v1551 = vsub.f32 0.0, %v1470
        %v1552 = vsub.f32 0.0, %v1471
        %v1553 = vsub.f32 0.0, %v1472
        %v1554 = vmul.f32 %v1551, %v1470
        %v1555 = vmul.f32 %v1552, %v1471
        %v1556 = vmul.f32 %v1553, %v1472
        %v1557 = vmul.f32 %v1554, 1.442695
        %v1558 = vpow.pop %v1557
        %v1559 = vmul.f32 %v1555, 1.442695
        %v1560 = vpow.pop %v1559
        %v1561 = vmul.f32 %v1556, 1.442695
        %v1562 = vpow.pop %v1561
        %v1563 = vmul.f32 %v1548, %v1558
        %v1564 = vmul.f32 %v1549, %v1560
        %v1565 = vmul.f32 %v1550, %v1562
        %v1566 = vsub.f32 1.0, %v1563
        %v1567 = vsub.f32 1.0, %v1564
        %v1568 = vsub.f32 1.0, %v1565
        %vm1569 = vcmp.ge.f32.partialorder %v1467, 0.0
        %vm1570 = vcmp.ge.f32.partialorder %v1468, 0.0
        %vm1571 = vcmp.ge.f32.partialorder %v1469, 0.0
        %v1572 = vsub.f32 0.0, %v1566
        %v1573 = vsub.f32 0.0, %v1567
        %v1574 = vsub.f32 0.0, %v1568
        %v1575 = vsel %vm1569, %v1566, %v1572
        %v1576 = vsel %vm1570, %v1567, %v1573
        %v1577 = vsel %vm1571, %v1568, %v1574
        %v1578 = vadd.f32 %v1575, 1.0
        %v1579 = vadd.f32 %v1576, 1.0
        %v1580 = vadd.f32 %v1577, 1.0
        %v1581 = vmul.f32 %v1464, %v1578
        %v1582 = vmul.f32 %v1465, %v1579
        %v1583 = vmul.f32 %v1466, %v1580
        %1584 = vst [vmem:[#allocation3 + $0x18] sm:$0xff] %v1581
        %1585 = vst [vmem:[#allocation3 + $0x20] sm:$0xff] %v1582
        %1586 = vst [vmem:[#allocation3 + $0x28] sm:$0xff] %v1583
        %s1587 = scalar_lea.vmem %s279, 128 [#allocation4]
        %v1588 = vld [vmem:[%s1587] sm:$0xff]
        %v1589 = vld [vmem:[%s1587 + $0x8] sm:$0xff]
        %v1590 = vld [vmem:[%s1587 + $0x10] sm:$0xff]
        %v1591 = vld [vmem:[%s1587 + $0x18] sm:$0xff]
        %1592 = vst [vmem:[#allocation2 + $0xd8] sm:$0xff] %v1588
        %1593 = vst [vmem:[#allocation2 + $0xe0] sm:$0xff] %v1589
        %1594 = vst [vmem:[#allocation2 + $0xe8] sm:$0xff] %v1590
        %1599 = vrot.lane.b32.xlu0 %v1588, 127
        %v1600 = vpop.permute.xlu0 %1599
        %1601 = vrot.lane.b32.xlu0 %v1589, 127
        %v1602 = vpop.permute.xlu0 %1601
        %1603 = vrot.lane.b32.xlu0 %v1590, 127
        %v1604 = vpop.permute.xlu0 %1603
        %1605 = vrot.lane.b32.xlu0 %v1591, 127
        %v1606 = vpop.permute.xlu0 %1605
        %v1607 = vsel %vm335, %v1600, %v1602
        %v1608 = vsel %vm335, %v1602, %v1604
        %v1609 = vsel %vm335, %v1604, %v1606
        %1613 = vst [vmem:[#allocation2 + $0xf0] sm:$0xff] %v1607
        %1614 = vst [vmem:[#allocation2 + $0xf8] sm:$0xff] %v1608
        %1615 = vst [vmem:[#allocation2 + $0x100] sm:$0xff] %v1609
        %1616 = vrot.lane.b32.xlu0 %v1588, 126
        %v1617 = vpop.permute.xlu0 %1616
        %1618 = vrot.lane.b32.xlu0 %v1589, 126
        %v1619 = vpop.permute.xlu0 %1618
        %1620 = vrot.lane.b32.xlu0 %v1590, 126
        %v1621 = vpop.permute.xlu0 %1620
        %1622 = vrot.lane.b32.xlu0 %v1591, 126
        %v1623 = vpop.permute.xlu0 %1622
        %v1624 = vsel %vm353, %v1617, %v1619
        %v1625 = vsel %vm353, %v1619, %v1621
        %v1626 = vsel %vm353, %v1621, %v1623
        %1630 = vst [vmem:[#allocation2 + $0x108] sm:$0xff] %v1624
        %1631 = vst [vmem:[#allocation2 + $0x110] sm:$0xff] %v1625
        %1632 = vst [vmem:[#allocation2 + $0x118] sm:$0xff] %v1626
        %1633 = vrot.lane.b32.xlu0 %v1588, 110
        %v1634 = vpop.permute.xlu0 %1633
        %1635 = vrot.lane.b32.xlu0 %v1589, 110
        %v1636 = vpop.permute.xlu0 %1635
        %1637 = vrot.lane.b32.xlu0 %v1590, 110
        %v1638 = vpop.permute.xlu0 %1637
        %1639 = vrot.lane.b32.xlu0 %v1591, 110
        %v1640 = vpop.permute.xlu0 %1639
        %v1641 = vsel %vm371, %v1634, %v1636
        %v1642 = vsel %vm371, %v1636, %v1638
        %v1643 = vsel %vm371, %v1638, %v1640
        %1647 = vst [vmem:[#allocation2 + $0x120] sm:$0xff] %v1641
        %1648 = vst [vmem:[#allocation2 + $0x128] sm:$0xff] %v1642
        %1649 = vst [vmem:[#allocation2 + $0x130] sm:$0xff] %v1643
        %1650 = vrot.lane.b32.xlu0 %v1588, 109
        %v1651 = vpop.permute.xlu0 %1650
        %1652 = vrot.lane.b32.xlu0 %v1589, 109
        %v1653 = vpop.permute.xlu0 %1652
        %1654 = vrot.lane.b32.xlu0 %v1590, 109
        %v1655 = vpop.permute.xlu0 %1654
        %1656 = vrot.lane.b32.xlu0 %v1591, 109
        %v1657 = vpop.permute.xlu0 %1656
        %v1658 = vsel %vm389, %v1651, %v1653
        %v1659 = vsel %vm389, %v1653, %v1655
        %v1660 = vsel %vm389, %v1655, %v1657
        %1664 = vst [vmem:[#allocation2 + $0x138] sm:$0xff] %v1658
        %1665 = vst [vmem:[#allocation2 + $0x140] sm:$0xff] %v1659
        %1666 = vst [vmem:[#allocation2 + $0x148] sm:$0xff] %v1660
        %1667 = vrot.lane.b32.xlu0 %v1588, 108
        %v1668 = vpop.permute.xlu0 %1667
        %1669 = vrot.lane.b32.xlu0 %v1589, 108
        %v1670 = vpop.permute.xlu0 %1669
        %1671 = vrot.lane.b32.xlu0 %v1590, 108
        %v1672 = vpop.permute.xlu0 %1671
        %1673 = vrot.lane.b32.xlu0 %v1591, 108
        %v1674 = vpop.permute.xlu0 %1673
        %v1675 = vsel %vm407, %v1668, %v1670
        %v1676 = vsel %vm407, %v1670, %v1672
        %v1677 = vsel %vm407, %v1672, %v1674
        %1681 = vst [vmem:[#allocation2 + $0x150] sm:$0xff] %v1675
        %1682 = vst [vmem:[#allocation2 + $0x158] sm:$0xff] %v1676
        %1683 = vst [vmem:[#allocation2 + $0x160] sm:$0xff] %v1677
        %1684 = vrot.lane.b32.xlu0 %v1588, 92
        %v1685 = vpop.permute.xlu0 %1684
        %1686 = vrot.lane.b32.xlu0 %v1589, 92
        %v1687 = vpop.permute.xlu0 %1686
        %1688 = vrot.lane.b32.xlu0 %v1590, 92
        %v1689 = vpop.permute.xlu0 %1688
        %1690 = vrot.lane.b32.xlu0 %v1591, 92
        %v1691 = vpop.permute.xlu0 %1690
        %v1692 = vsel %vm425, %v1685, %v1687
        %v1693 = vsel %vm425, %v1687, %v1689
        %v1694 = vsel %vm425, %v1689, %v1691
        %1698 = vst [vmem:[#allocation2 + $0x168] sm:$0xff] %v1692
        %1699 = vst [vmem:[#allocation2 + $0x170] sm:$0xff] %v1693
        %1700 = vst [vmem:[#allocation2 + $0x178] sm:$0xff] %v1694
        %1701 = vrot.lane.b32.xlu0 %v1588, 91
        %v1702 = vpop.permute.xlu0 %1701
        %1703 = vrot.lane.b32.xlu0 %v1589, 91
        %v1704 = vpop.permute.xlu0 %1703
        %1705 = vrot.lane.b32.xlu0 %v1590, 91
        %v1706 = vpop.permute.xlu0 %1705
        %1707 = vrot.lane.b32.xlu0 %v1591, 91
        %v1708 = vpop.permute.xlu0 %1707
        %v1709 = vsel %vm443, %v1702, %v1704
        %v1710 = vsel %vm443, %v1704, %v1706
        %v1711 = vsel %vm443, %v1706, %v1708
        %1715 = vst [vmem:[#allocation2 + $0x180] sm:$0xff] %v1709
        %1716 = vst [vmem:[#allocation2 + $0x188] sm:$0xff] %v1710
        %1717 = vst [vmem:[#allocation2 + $0x190] sm:$0xff] %v1711
        %1718 = vrot.lane.b32.xlu0 %v1588, 90
        %v1719 = vpop.permute.xlu0 %1718
        %1720 = vrot.lane.b32.xlu0 %v1589, 90
        %v1721 = vpop.permute.xlu0 %1720
        %1722 = vrot.lane.b32.xlu0 %v1590, 90
        %v1723 = vpop.permute.xlu0 %1722
        %1724 = vrot.lane.b32.xlu0 %v1591, 90
        %v1725 = vpop.permute.xlu0 %1724
        %v1726 = vsel %vm461, %v1719, %v1721
        %v1727 = vsel %vm461, %v1721, %v1723
        %v1728 = vsel %vm461, %v1723, %v1725
        %1732 = vst [vmem:[#allocation2 + $0x198] sm:$0xff] %v1726
        %1733 = vst [vmem:[#allocation2 + $0x1a0] sm:$0xff] %v1727
        %1734 = vst [vmem:[#allocation2 + $0x1a8] sm:$0xff] %v1728
        %s1735 = scalar_lea.vmem [#allocation7], 32
        %v1736 = vld [vmem:[%s1735] sm:$0xff]
        %v1737 = vld [vmem:[%s1735 + $0x8] sm:$0xff]
        %v1738 = vld [vmem:[#allocation2] sm:$0xff]
        %v1739 = vld [vmem:[#allocation2 + $0x8] sm:$0xff]
        %v1740 = vld [vmem:[#allocation2 + $0x10] sm:$0xff]
        %v1741 = vld [vmem:[#allocation2 + $0x18] sm:$0xff]
        %v1742 = vld [vmem:[#allocation2 + $0x20] sm:$0xff]
        %v1743 = vld [vmem:[#allocation2 + $0x28] sm:$0xff]
        %v1744 = vld [vmem:[#allocation2 + $0x30] sm:$0xff]
        %v1745 = vld [vmem:[#allocation2 + $0x38] sm:$0xff]
        %v1746 = vld [vmem:[#allocation2 + $0x40] sm:$0xff]
        %v1747 = vld [vmem:[#allocation2 + $0x48] sm:$0xff]
        %v1748 = vld [vmem:[#allocation2 + $0x50] sm:$0xff]
        %v1749 = vld [vmem:[#allocation2 + $0x58] sm:$0xff]
        %v1750 = vld [vmem:[#allocation2 + $0x60] sm:$0xff]
        %v1751 = vld [vmem:[#allocation2 + $0x68] sm:$0xff]
        %v1752 = vld [vmem:[#allocation2 + $0x70] sm:$0xff]
        %v1753 = vld [vmem:[#allocation2 + $0x78] sm:$0xff]
        %v1754 = vld [vmem:[#allocation2 + $0x80] sm:$0xff]
        %v1755 = vld [vmem:[#allocation2 + $0x88] sm:$0xff]
        %v1756 = vld [vmem:[#allocation2 + $0x90] sm:$0xff]
        %v1757 = vld [vmem:[#allocation2 + $0x98] sm:$0xff]
        %v1758 = vld [vmem:[#allocation2 + $0xa0] sm:$0xff]
        %v1759 = vld [vmem:[#allocation2 + $0xa8] sm:$0xff]
        %v1760 = vld [vmem:[#allocation2 + $0xb0] sm:$0xff]
        %v1761 = vld [vmem:[#allocation2 + $0xb8] sm:$0xff]
        %v1762 = vld [vmem:[#allocation2 + $0xc0] sm:$0xff]
        %v1763 = vld [vmem:[#allocation2 + $0xc8] sm:$0xff]
        %v1764 = vld [vmem:[#allocation2 + $0xd0] sm:$0xff]
        %v1765 = vld [vmem:[#allocation2 + $0xd8] sm:$0xff]
        %v1766 = vld [vmem:[#allocation2 + $0xe0] sm:$0xff]
        %v1767 = vld [vmem:[#allocation2 + $0xe8] sm:$0xff]
        %v1768 = vld [vmem:[#allocation2 + $0xf0] sm:$0xff]
        %v1769 = vld [vmem:[#allocation2 + $0xf8] sm:$0xff]
        %v1770 = vld [vmem:[#allocation2 + $0x100] sm:$0xff]
        %v1771 = vld [vmem:[#allocation2 + $0x108] sm:$0xff]
        %v1772 = vld [vmem:[#allocation2 + $0x110] sm:$0xff]
        %v1773 = vld [vmem:[#allocation2 + $0x118] sm:$0xff]
        %v1774 = vld [vmem:[#allocation2 + $0x120] sm:$0xff]
        %v1775 = vld [vmem:[#allocation2 + $0x128] sm:$0xff]
        %v1776 = vld [vmem:[#allocation2 + $0x130] sm:$0xff]
        %v1777 = vld [vmem:[#allocation2 + $0x138] sm:$0xff]
        %v1778 = vld [vmem:[#allocation2 + $0x140] sm:$0xff]
        %v1779 = vld [vmem:[#allocation2 + $0x148] sm:$0xff]
        %v1780 = vld [vmem:[#allocation2 + $0x150] sm:$0xff]
        %v1781 = vld [vmem:[#allocation2 + $0x158] sm:$0xff]
        %v1782 = vld [vmem:[#allocation2 + $0x160] sm:$0xff]
        %v1783 = vld [vmem:[#allocation2 + $0x168] sm:$0xff]
        %v1784 = vld [vmem:[#allocation2 + $0x170] sm:$0xff]
        %v1785 = vld [vmem:[#allocation2 + $0x178] sm:$0xff]
        %v1786 = vld [vmem:[#allocation2 + $0x180] sm:$0xff]
        %v1787 = vld [vmem:[#allocation2 + $0x188] sm:$0xff]
        %v1788 = vld [vmem:[#allocation2 + $0x190] sm:$0xff]
        %v1789 = vld [vmem:[#allocation2 + $0x198] sm:$0xff]
        %v1790 = vld [vmem:[#allocation2 + $0x1a0] sm:$0xff]
        %v1791 = vld [vmem:[#allocation2 + $0x1a8] sm:$0xff]
        %v1792 = vld [vmem:[#allocation2 + $0x1b0] sm:$0xff]
        %v1793 = vld [vmem:[#allocation2 + $0x1b8] sm:$0xff]
        %v1794 = vld [vmem:[#allocation2 + $0x1c0] sm:$0xff]
        %v1795 = vld [vmem:[#allocation2 + $0x1c8] sm:$0xff]
        %v1796 = vld [vmem:[#allocation2 + $0x1d0] sm:$0xff]
        %v1797 = vld [vmem:[#allocation2 + $0x1d8] sm:$0xff]
        %v1798 = vld [vmem:[#allocation2 + $0x1e0] sm:$0xff]
        %v1799 = vld [vmem:[#allocation2 + $0x1e8] sm:$0xff]
        %v1800 = vld [vmem:[#allocation2 + $0x1f0] sm:$0xff]
        %v1801 = vld [vmem:[#allocation2 + $0x1f8] sm:$0xff]
        %v1802 = vld [vmem:[#allocation2 + $0x200] sm:$0xff]
        %v1803 = vld [vmem:[#allocation2 + $0x208] sm:$0xff]
        %v1804 = vld [vmem:[#allocation2 + $0x210] sm:$0xff]
        %v1805 = vld [vmem:[#allocation2 + $0x218] sm:$0xff]
        %v1806 = vld [vmem:[#allocation2 + $0x220] sm:$0xff]
        %v1807 = vld [vmem:[#allocation2 + $0x228] sm:$0xff]
        %v1808 = vld [vmem:[#allocation2 + $0x230] sm:$0xff]
        %v1809 = vld [vmem:[#allocation2 + $0x238] sm:$0xff]
        %v1810 = vld [vmem:[#allocation2 + $0x240] sm:$0xff]
        %v1811 = vld [vmem:[#allocation2 + $0x248] sm:$0xff]
        %v1812 = vld [vmem:[#allocation2 + $0x250] sm:$0xff]
        %v1813 = vld [vmem:[#allocation2 + $0x258] sm:$0xff]
        %v1814 = vld [vmem:[#allocation2 + $0x260] sm:$0xff]
        %v1815 = vld [vmem:[#allocation2 + $0x268] sm:$0xff]
        %v1816 = vld [vmem:[#allocation2 + $0x270] sm:$0xff]
        %v1817 = vld [vmem:[#allocation2 + $0x278] sm:$0xff]
        %v1818 = vld [vmem:[#allocation2 + $0x280] sm:$0xff]
        %v1819 = vld [vmem:[%s2] sm:$0xff]
        %1821 = vset.pattern.permute.xlu0 0
        %1822 = vperm.xlu0 %1821, %v1819
        %v1823 = vpop.permute.xlu0 %1822
        %v1826 = vsel %vm856, %v1737, 0
        %1828 = vmatpush.msra.mxu0 %v1783
        %1829 = vmatpush.msra.mxu0 %v1780
        %1830 = vmatpush.msra.mxu0 %v1777
        %1831 = vmatpush.msra.mxu0 %v1774
        %1832 = vmatpush.msra.mxu0 %v1771
        %1833 = vmatpush.msra.mxu0 %v1768
        %1834 = vmatpush.msra.mxu0 %v1765
        %1835 = vmatpush.msra.mxu0 %v1762
        %1836 = vmatpush.msra.mxu0 %v1759
        %1837 = vmatpush.msra.mxu0 %v1756
        %1838 = vmatpush.msra.mxu0 %v1753
        %1839 = vmatpush.msra.mxu0 %v1750
        %1840 = vmatpush.msra.mxu0 %v1747
        %1841 = vmatpush.msra.mxu0 %v1744
        %1842 = vmatpush.msra.mxu0 %v1741
        %1843 = vmatpush.msra.mxu0 %v1738
        %1844 = vmatmul.f32.gmra.mxu0 %v1736
        %v1845 = vpop.f32.mrf.mxu0
        %v1846 = vadd.f32 %v1823, %v1845
        %1847 = vdwg.mxu0
        %1848 = vmatpush.msra.mxu0 0.0
        %1849 = vmatpush.msra.mxu0 0.0
        %1850 = vmatpush.msra.mxu0 0.0
        %1851 = vmatpush.msra.mxu0 0.0
        %1852 = vmatpush.msra.mxu0 0.0
        %1853 = vmatpush.msra.mxu0 %v1816
        %1854 = vmatpush.msra.mxu0 %v1813
        %1855 = vmatpush.msra.mxu0 %v1810
        %1856 = vmatpush.msra.mxu0 %v1807
        %1857 = vmatpush.msra.mxu0 %v1804
        %1858 = vmatpush.msra.mxu0 %v1801
        %1859 = vmatpush.msra.mxu0 %v1798
        %1860 = vmatpush.msra.mxu0 %v1795
        %1861 = vmatpush.msra.mxu0 %v1792
        %1862 = vmatpush.msra.mxu0 %v1789
        %1863 = vmatpush.msra.mxu0 %v1786
        %1864 = vmatmul.f32.gmra.mxu0 %v1826
        %v1865 = vpop.f32.mrf.mxu0
        %v1866 = vadd.f32 %v1846, %v1865
        %1867 = vdwg.mxu0
        %1868 = vmatpush.msra.mxu0 %v1784
        %1869 = vmatpush.msra.mxu0 %v1781
        %1870 = vmatpush.msra.mxu0 %v1778
        %1871 = vmatpush.msra.mxu0 %v1775
        %1872 = vmatpush.msra.mxu0 %v1772
        %1873 = vmatpush.msra.mxu0 %v1769
        %1874 = vmatpush.msra.mxu0 %v1766
        %1875 = vmatpush.msra.mxu0 %v1763
        %1876 = vmatpush.msra.mxu0 %v1760
        %1877 = vmatpush.msra.mxu0 %v1757
        %1878 = vmatpush.msra.mxu0 %v1754
        %1879 = vmatpush.msra.mxu0 %v1751
        %1880 = vmatpush.msra.mxu0 %v1748
        %1881 = vmatpush.msra.mxu0 %v1745
        %1882 = vmatpush.msra.mxu0 %v1742
        %1883 = vmatpush.msra.mxu0 %v1739
        %1884 = vmatmul.f32.gmra.mxu0 %v1736
        %v1885 = vpop.f32.mrf.mxu0
        %v1886 = vadd.f32 %v1823, %v1885
        %1887 = vdwg.mxu0
        %1888 = vmatpush.msra.mxu0 0.0
        %1889 = vmatpush.msra.mxu0 0.0
        %1890 = vmatpush.msra.mxu0 0.0
        %1891 = vmatpush.msra.mxu0 0.0
        %1892 = vmatpush.msra.mxu0 0.0
        %1893 = vmatpush.msra.mxu0 %v1817
        %1894 = vmatpush.msra.mxu0 %v1814
        %1895 = vmatpush.msra.mxu0 %v1811
        %1896 = vmatpush.msra.mxu0 %v1808
        %1897 = vmatpush.msra.mxu0 %v1805
        %1898 = vmatpush.msra.mxu0 %v1802
        %1899 = vmatpush.msra.mxu0 %v1799
        %1900 = vmatpush.msra.mxu0 %v1796
        %1901 = vmatpush.msra.mxu0 %v1793
        %1902 = vmatpush.msra.mxu0 %v1790
        %1903 = vmatpush.msra.mxu0 %v1787
        %1904 = vmatmul.f32.gmra.mxu0 %v1826
        %v1905 = vpop.f32.mrf.mxu0
        %v1906 = vadd.f32 %v1886, %v1905
        %1907 = vdwg.mxu0
        %1908 = vmatpush.msra.mxu0 %v1785
        %1909 = vmatpush.msra.mxu0 %v1782
        %1910 = vmatpush.msra.mxu0 %v1779
        %1911 = vmatpush.msra.mxu0 %v1776
        %1912 = vmatpush.msra.mxu0 %v1773
        %1913 = vmatpush.msra.mxu0 %v1770
        %1914 = vmatpush.msra.mxu0 %v1767
        %1915 = vmatpush.msra.mxu0 %v1764
        %1916 = vmatpush.msra.mxu0 %v1761
        %1917 = vmatpush.msra.mxu0 %v1758
        %1918 = vmatpush.msra.mxu0 %v1755
        %1919 = vmatpush.msra.mxu0 %v1752
        %1920 = vmatpush.msra.mxu0 %v1749
        %1921 = vmatpush.msra.mxu0 %v1746
        %1922 = vmatpush.msra.mxu0 %v1743
        %1923 = vmatpush.msra.mxu0 %v1740
        %1924 = vmatmul.f32.gmra.mxu0 %v1736
        %v1925 = vpop.f32.mrf.mxu0
        %v1926 = vadd.f32 %v1823, %v1925
        %1927 = vdwg.mxu0
        %1928 = vmatpush.msra.mxu0 0.0
        %1929 = vmatpush.msra.mxu0 0.0
        %1930 = vmatpush.msra.mxu0 0.0
        %1931 = vmatpush.msra.mxu0 0.0
        %1932 = vmatpush.msra.mxu0 0.0
        %1933 = vmatpush.msra.mxu0 %v1818
        %1934 = vmatpush.msra.mxu0 %v1815
        %1935 = vmatpush.msra.mxu0 %v1812
        %1936 = vmatpush.msra.mxu0 %v1809
        %1937 = vmatpush.msra.mxu0 %v1806
        %1938 = vmatpush.msra.mxu0 %v1803
        %1939 = vmatpush.msra.mxu0 %v1800
        %1940 = vmatpush.msra.mxu0 %v1797
        %1941 = vmatpush.msra.mxu0 %v1794
        %1942 = vmatpush.msra.mxu0 %v1791
        %1943 = vmatpush.msra.mxu0 %v1788
        %1944 = vmatmul.f32.gmra.mxu0 %v1826
        %v1945 = vpop.f32.mrf.mxu0
        %v1946 = vadd.f32 %v1926, %v1945
        %1947 = vdwg.mxu0
        %v1948 = vmul.f32 %v1866, 0.5
        %v1949 = vmul.f32 %v1906, 0.5
        %v1950 = vmul.f32 %v1946, 0.5
        %v1951 = vmul.f32 %v1866, 0.70710677
        %v1952 = vmul.f32 %v1906, 0.70710677
        %v1953 = vmul.f32 %v1946, 0.70710677
        %v1954 = vand.u32 2147483647, %v1951
        %v1955 = vand.u32 2147483647, %v1952
        %v1956 = vand.u32 2147483647, %v1953
        %v1957 = vmul.f32 %v1954, 0.3275911
        %v1958 = vmul.f32 %v1955, 0.3275911
        %v1959 = vmul.f32 %v1956, 0.3275911
        %v1960 = vadd.f32 %v1957, 1.0
        %v1961 = vadd.f32 %v1958, 1.0
        %v1962 = vadd.f32 %v1959, 1.0
        %v1963 = vrcp.pop %v1960
        %v1964 = vmul.f32 %v1960, %v1963
        %v1965 = vsub.f32 1.0, %v1964
        %v1966 = vmul.f32 %v1963, %v1965
        %v1967 = vadd.f32 %v1963, %v1966
        %vm1968 = vweird.f32 %v1960
        %vm1969 = vweird.f32 %v1963
        %vm1970 = vmor %vm1968, %vm1969
        %v1971 = vsel %vm1970, %v1963, %v1967
        %v1972 = vand.u32 2147483647, %v1960
        %vm1973 = vcmp.eq.f32.partialorder %v1972, 8.507059e+37
        %v1974 = vand.u32 %v1960, 2147483648
        %v1975 = vor.u32 1.1754944e-38, %v1974
        %v1976 = vsel %vm1973, %v1975, %v1971
        %v1977 = vmul.f32 1.0, %v1976
        %v1978 = vrcp.pop %v1961
        %v1979 = vmul.f32 %v1961, %v1978
        %v1980 = vsub.f32 1.0, %v1979
        %v1981 = vmul.f32 %v1978, %v1980
        %v1982 = vadd.f32 %v1978, %v1981
        %vm1983 = vweird.f32 %v1961
        %vm1984 = vweird.f32 %v1978
        %vm1985 = vmor %vm1983, %vm1984
        %v1986 = vsel %vm1985, %v1978, %v1982
        %v1987 = vand.u32 2147483647, %v1961
        %vm1988 = vcmp.eq.f32.partialorder %v1987, 8.507059e+37
        %v1989 = vand.u32 %v1961, 2147483648
        %v1990 = vor.u32 1.1754944e-38, %v1989
        %v1991 = vsel %vm1988, %v1990, %v1986
        %v1992 = vmul.f32 1.0, %v1991
        %v1993 = vrcp.pop %v1962
        %v1994 = vmul.f32 %v1962, %v1993
        %v1995 = vsub.f32 1.0, %v1994
        %v1996 = vmul.f32 %v1993, %v1995
        %v1997 = vadd.f32 %v1993, %v1996
        %vm1998 = vweird.f32 %v1962
        %vm1999 = vweird.f32 %v1993
        %vm2000 = vmor %vm1998, %vm1999
        %v2001 = vsel %vm2000, %v1993, %v1997
        %v2002 = vand.u32 2147483647, %v1962
        %vm2003 = vcmp.eq.f32.partialorder %v2002, 8.507059e+37
        %v2004 = vand.u32 %v1962, 2147483648
        %v2005 = vor.u32 1.1754944e-38, %v2004
        %v2006 = vsel %vm2003, %v2005, %v2001
        %v2007 = vmul.f32 1.0, %v2006
        %v2008 = vmul.f32 %v1977, 1.0614054
        %v2009 = vmul.f32 %v1992, 1.0614054
        %v2010 = vmul.f32 %v2007, 1.0614054
        %v2011 = vadd.f32 %v2008, -1.4531521
        %v2012 = vadd.f32 %v2009, -1.4531521
        %v2013 = vadd.f32 %v2010, -1.4531521
        %v2014 = vmul.f32 %v1977, %v2011
        %v2015 = vmul.f32 %v1992, %v2012
        %v2016 = vmul.f32 %v2007, %v2013
        %v2017 = vadd.f32 %v2014, 1.4214138
        %v2018 = vadd.f32 %v2015, 1.4214138
        %v2019 = vadd.f32 %v2016, 1.4214138
        %v2020 = vmul.f32 %v1977, %v2017
        %v2021 = vmul.f32 %v1992, %v2018
        %v2022 = vmul.f32 %v2007, %v2019
        %v2023 = vadd.f32 %v2020, -0.28449672
        %v2024 = vadd.f32 %v2021, -0.28449672
        %v2025 = vadd.f32 %v2022, -0.28449672
        %v2026 = vmul.f32 %v1977, %v2023
        %v2027 = vmul.f32 %v1992, %v2024
        %v2028 = vmul.f32 %v2007, %v2025
        %v2029 = vadd.f32 %v2026, 0.2548296
        %v2030 = vadd.f32 %v2027, 0.2548296
        %v2031 = vadd.f32 %v2028, 0.2548296
        %v2032 = vmul.f32 %v1977, %v2029
        %v2033 = vmul.f32 %v1992, %v2030
        %v2034 = vmul.f32 %v2007, %v2031
        %v2035 = vsub.f32 0.0, %v1954
        %v2036 = vsub.f32 0.0, %v1955
        %v2037 = vsub.f32 0.0, %v1956
        %v2038 = vmul.f32 %v2035, %v1954
        %v2039 = vmul.f32 %v2036, %v1955
        %v2040 = vmul.f32 %v2037, %v1956
        %v2041 = vmul.f32 %v2038, 1.442695
        %v2042 = vpow.pop %v2041
        %v2043 = vmul.f32 %v2039, 1.442695
        %v2044 = vpow.pop %v2043
        %v2045 = vmul.f32 %v2040, 1.442695
        %v2046 = vpow.pop %v2045
        %v2047 = vmul.f32 %v2032, %v2042
        %v2048 = vmul.f32 %v2033, %v2044
        %v2049 = vmul.f32 %v2034, %v2046
        %v2050 = vsub.f32 1.0, %v2047
        %v2051 = vsub.f32 1.0, %v2048
        %v2052 = vsub.f32 1.0, %v2049
        %vm2053 = vcmp.ge.f32.partialorder %v1951, 0.0
        %vm2054 = vcmp.ge.f32.partialorder %v1952, 0.0
        %vm2055 = vcmp.ge.f32.partialorder %v1953, 0.0
        %v2056 = vsub.f32 0.0, %v2050
        %v2057 = vsub.f32 0.0, %v2051
        %v2058 = vsub.f32 0.0, %v2052
        %v2059 = vsel %vm2053, %v2050, %v2056
        %v2060 = vsel %vm2054, %v2051, %v2057
        %v2061 = vsel %vm2055, %v2052, %v2058
        %v2062 = vadd.f32 %v2059, 1.0
        %v2063 = vadd.f32 %v2060, 1.0
        %v2064 = vadd.f32 %v2061, 1.0
        %v2065 = vmul.f32 %v1948, %v2062
        %v2066 = vmul.f32 %v1949, %v2063
        %v2067 = vmul.f32 %v1950, %v2064
        %2068 = vst [vmem:[#allocation3 + $0x30] sm:$0xff] %v2065
        %2069 = vst [vmem:[#allocation3 + $0x38] sm:$0xff] %v2066
        %2070 = vst [vmem:[#allocation3 + $0x40] sm:$0xff] %v2067
        %s2071 = scalar_lea.vmem %s279, 160 [#allocation4]
        %v2072 = vld [vmem:[%s2071] sm:$0xff]
        %v2073 = vld [vmem:[%s2071 + $0x8] sm:$0xff]
        %v2074 = vld [vmem:[%s2071 + $0x10] sm:$0xff]
        %v2075 = vld [vmem:[%s2071 + $0x18] sm:$0xff]
        %2076 = vst [vmem:[#allocation2 + $0x1b0] sm:$0xff] %v2072
        %2077 = vst [vmem:[#allocation2 + $0x1b8] sm:$0xff] %v2073
        %2078 = vst [vmem:[#allocation2 + $0x1c0] sm:$0xff] %v2074
        %2083 = vrot.lane.b32.xlu0 %v2072, 127
        %v2084 = vpop.permute.xlu0 %2083
        %2085 = vrot.lane.b32.xlu0 %v2073, 127
        %v2086 = vpop.permute.xlu0 %2085
        %2087 = vrot.lane.b32.xlu0 %v2074, 127
        %v2088 = vpop.permute.xlu0 %2087
        %2089 = vrot.lane.b32.xlu0 %v2075, 127
        %v2090 = vpop.permute.xlu0 %2089
        %v2091 = vsel %vm335, %v2084, %v2086
        %v2092 = vsel %vm335, %v2086, %v2088
        %v2093 = vsel %vm335, %v2088, %v2090
        %2097 = vst [vmem:[#allocation2 + $0x1c8] sm:$0xff] %v2091
        %2098 = vst [vmem:[#allocation2 + $0x1d0] sm:$0xff] %v2092
        %2099 = vst [vmem:[#allocation2 + $0x1d8] sm:$0xff] %v2093
        %2100 = vrot.lane.b32.xlu0 %v2072, 126
        %v2101 = vpop.permute.xlu0 %2100
        %2102 = vrot.lane.b32.xlu0 %v2073, 126
        %v2103 = vpop.permute.xlu0 %2102
        %2104 = vrot.lane.b32.xlu0 %v2074, 126
        %v2105 = vpop.permute.xlu0 %2104
        %2106 = vrot.lane.b32.xlu0 %v2075, 126
        %v2107 = vpop.permute.xlu0 %2106
        %v2108 = vsel %vm353, %v2101, %v2103
        %v2109 = vsel %vm353, %v2103, %v2105
        %v2110 = vsel %vm353, %v2105, %v2107
        %2114 = vst [vmem:[#allocation2 + $0x1e0] sm:$0xff] %v2108
        %2115 = vst [vmem:[#allocation2 + $0x1e8] sm:$0xff] %v2109
        %2116 = vst [vmem:[#allocation2 + $0x1f0] sm:$0xff] %v2110
        %2117 = vrot.lane.b32.xlu0 %v2072, 110
        %v2118 = vpop.permute.xlu0 %2117
        %2119 = vrot.lane.b32.xlu0 %v2073, 110
        %v2120 = vpop.permute.xlu0 %2119
        %2121 = vrot.lane.b32.xlu0 %v2074, 110
        %v2122 = vpop.permute.xlu0 %2121
        %2123 = vrot.lane.b32.xlu0 %v2075, 110
        %v2124 = vpop.permute.xlu0 %2123
        %v2125 = vsel %vm371, %v2118, %v2120
        %v2126 = vsel %vm371, %v2120, %v2122
        %v2127 = vsel %vm371, %v2122, %v2124
        %2131 = vst [vmem:[#allocation2 + $0x1f8] sm:$0xff] %v2125
        %2132 = vst [vmem:[#allocation2 + $0x200] sm:$0xff] %v2126
        %2133 = vst [vmem:[#allocation2 + $0x208] sm:$0xff] %v2127
        %2134 = vrot.lane.b32.xlu0 %v2072, 109
        %v2135 = vpop.permute.xlu0 %2134
        %2136 = vrot.lane.b32.xlu0 %v2073, 109
        %v2137 = vpop.permute.xlu0 %2136
        %2138 = vrot.lane.b32.xlu0 %v2074, 109
        %v2139 = vpop.permute.xlu0 %2138
        %2140 = vrot.lane.b32.xlu0 %v2075, 109
        %v2141 = vpop.permute.xlu0 %2140
        %v2142 = vsel %vm389, %v2135, %v2137
        %v2143 = vsel %vm389, %v2137, %v2139
        %v2144 = vsel %vm389, %v2139, %v2141
        %2148 = vst [vmem:[#allocation2 + $0x210] sm:$0xff] %v2142
        %2149 = vst [vmem:[#allocation2 + $0x218] sm:$0xff] %v2143
        %2150 = vst [vmem:[#allocation2 + $0x220] sm:$0xff] %v2144
        %2151 = vrot.lane.b32.xlu0 %v2072, 108
        %v2152 = vpop.permute.xlu0 %2151
        %2153 = vrot.lane.b32.xlu0 %v2073, 108
        %v2154 = vpop.permute.xlu0 %2153
        %2155 = vrot.lane.b32.xlu0 %v2074, 108
        %v2156 = vpop.permute.xlu0 %2155
        %2157 = vrot.lane.b32.xlu0 %v2075, 108
        %v2158 = vpop.permute.xlu0 %2157
        %v2159 = vsel %vm407, %v2152, %v2154
        %v2160 = vsel %vm407, %v2154, %v2156
        %v2161 = vsel %vm407, %v2156, %v2158
        %2165 = vst [vmem:[#allocation2 + $0x228] sm:$0xff] %v2159
        %2166 = vst [vmem:[#allocation2 + $0x230] sm:$0xff] %v2160
        %2167 = vst [vmem:[#allocation2 + $0x238] sm:$0xff] %v2161
        %2168 = vrot.lane.b32.xlu0 %v2072, 92
        %v2169 = vpop.permute.xlu0 %2168
        %2170 = vrot.lane.b32.xlu0 %v2073, 92
        %v2171 = vpop.permute.xlu0 %2170
        %2172 = vrot.lane.b32.xlu0 %v2074, 92
        %v2173 = vpop.permute.xlu0 %2172
        %2174 = vrot.lane.b32.xlu0 %v2075, 92
        %v2175 = vpop.permute.xlu0 %2174
        %v2176 = vsel %vm425, %v2169, %v2171
        %v2177 = vsel %vm425, %v2171, %v2173
        %v2178 = vsel %vm425, %v2173, %v2175
        %2182 = vst [vmem:[#allocation2 + $0x240] sm:$0xff] %v2176
        %2183 = vst [vmem:[#allocation2 + $0x248] sm:$0xff] %v2177
        %2184 = vst [vmem:[#allocation2 + $0x250] sm:$0xff] %v2178
        %2185 = vrot.lane.b32.xlu0 %v2072, 91
        %v2186 = vpop.permute.xlu0 %2185
        %2187 = vrot.lane.b32.xlu0 %v2073, 91
        %v2188 = vpop.permute.xlu0 %2187
        %2189 = vrot.lane.b32.xlu0 %v2074, 91
        %v2190 = vpop.permute.xlu0 %2189
        %2191 = vrot.lane.b32.xlu0 %v2075, 91
        %v2192 = vpop.permute.xlu0 %2191
        %v2193 = vsel %vm443, %v2186, %v2188
        %v2194 = vsel %vm443, %v2188, %v2190
        %v2195 = vsel %vm443, %v2190, %v2192
        %2199 = vst [vmem:[#allocation2 + $0x258] sm:$0xff] %v2193
        %2200 = vst [vmem:[#allocation2 + $0x260] sm:$0xff] %v2194
        %2201 = vst [vmem:[#allocation2 + $0x268] sm:$0xff] %v2195
        %2202 = vrot.lane.b32.xlu0 %v2072, 90
        %v2203 = vpop.permute.xlu0 %2202
        %2204 = vrot.lane.b32.xlu0 %v2073, 90
        %v2205 = vpop.permute.xlu0 %2204
        %2206 = vrot.lane.b32.xlu0 %v2074, 90
        %v2207 = vpop.permute.xlu0 %2206
        %2208 = vrot.lane.b32.xlu0 %v2075, 90
        %v2209 = vpop.permute.xlu0 %2208
        %v2210 = vsel %vm461, %v2203, %v2205
        %v2211 = vsel %vm461, %v2205, %v2207
        %v2212 = vsel %vm461, %v2207, %v2209
        %2216 = vst [vmem:[#allocation2 + $0x270] sm:$0xff] %v2210
        %2217 = vst [vmem:[#allocation2 + $0x278] sm:$0xff] %v2211
        %2218 = vst [vmem:[#allocation2 + $0x280] sm:$0xff] %v2212
        %v2219 = vld [vmem:[#allocation7] sm:$0xff]
        %v2220 = vld [vmem:[#allocation7 + $0x8] sm:$0xff]
        %v2221 = vld [vmem:[#allocation2] sm:$0xff]
        %v2222 = vld [vmem:[#allocation2 + $0x8] sm:$0xff]
        %v2223 = vld [vmem:[#allocation2 + $0x10] sm:$0xff]
        %v2224 = vld [vmem:[#allocation2 + $0x18] sm:$0xff]
        %v2225 = vld [vmem:[#allocation2 + $0x20] sm:$0xff]
        %v2226 = vld [vmem:[#allocation2 + $0x28] sm:$0xff]
        %v2227 = vld [vmem:[#allocation2 + $0x30] sm:$0xff]
        %v2228 = vld [vmem:[#allocation2 + $0x38] sm:$0xff]
        %v2229 = vld [vmem:[#allocation2 + $0x40] sm:$0xff]
        %v2230 = vld [vmem:[#allocation2 + $0x48] sm:$0xff]
        %v2231 = vld [vmem:[#allocation2 + $0x50] sm:$0xff]
        %v2232 = vld [vmem:[#allocation2 + $0x58] sm:$0xff]
        %v2233 = vld [vmem:[#allocation2 + $0x60] sm:$0xff]
        %v2234 = vld [vmem:[#allocation2 + $0x68] sm:$0xff]
        %v2235 = vld [vmem:[#allocation2 + $0x70] sm:$0xff]
        %v2236 = vld [vmem:[#allocation2 + $0x78] sm:$0xff]
        %v2237 = vld [vmem:[#allocation2 + $0x80] sm:$0xff]
        %v2238 = vld [vmem:[#allocation2 + $0x88] sm:$0xff]
        %v2239 = vld [vmem:[#allocation2 + $0x90] sm:$0xff]
        %v2240 = vld [vmem:[#allocation2 + $0x98] sm:$0xff]
        %v2241 = vld [vmem:[#allocation2 + $0xa0] sm:$0xff]
        %v2242 = vld [vmem:[#allocation2 + $0xa8] sm:$0xff]
        %v2243 = vld [vmem:[#allocation2 + $0xb0] sm:$0xff]
        %v2244 = vld [vmem:[#allocation2 + $0xb8] sm:$0xff]
        %v2245 = vld [vmem:[#allocation2 + $0xc0] sm:$0xff]
        %v2246 = vld [vmem:[#allocation2 + $0xc8] sm:$0xff]
        %v2247 = vld [vmem:[#allocation2 + $0xd0] sm:$0xff]
        %v2248 = vld [vmem:[#allocation2 + $0xd8] sm:$0xff]
        %v2249 = vld [vmem:[#allocation2 + $0xe0] sm:$0xff]
        %v2250 = vld [vmem:[#allocation2 + $0xe8] sm:$0xff]
        %v2251 = vld [vmem:[#allocation2 + $0xf0] sm:$0xff]
        %v2252 = vld [vmem:[#allocation2 + $0xf8] sm:$0xff]
        %v2253 = vld [vmem:[#allocation2 + $0x100] sm:$0xff]
        %v2254 = vld [vmem:[#allocation2 + $0x108] sm:$0xff]
        %v2255 = vld [vmem:[#allocation2 + $0x110] sm:$0xff]
        %v2256 = vld [vmem:[#allocation2 + $0x118] sm:$0xff]
        %v2257 = vld [vmem:[#allocation2 + $0x120] sm:$0xff]
        %v2258 = vld [vmem:[#allocation2 + $0x128] sm:$0xff]
        %v2259 = vld [vmem:[#allocation2 + $0x130] sm:$0xff]
        %v2260 = vld [vmem:[#allocation2 + $0x138] sm:$0xff]
        %v2261 = vld [vmem:[#allocation2 + $0x140] sm:$0xff]
        %v2262 = vld [vmem:[#allocation2 + $0x148] sm:$0xff]
        %v2263 = vld [vmem:[#allocation2 + $0x150] sm:$0xff]
        %v2264 = vld [vmem:[#allocation2 + $0x158] sm:$0xff]
        %v2265 = vld [vmem:[#allocation2 + $0x160] sm:$0xff]
        %v2266 = vld [vmem:[#allocation2 + $0x168] sm:$0xff]
        %v2267 = vld [vmem:[#allocation2 + $0x170] sm:$0xff]
        %v2268 = vld [vmem:[#allocation2 + $0x178] sm:$0xff]
        %v2269 = vld [vmem:[#allocation2 + $0x180] sm:$0xff]
        %v2270 = vld [vmem:[#allocation2 + $0x188] sm:$0xff]
        %v2271 = vld [vmem:[#allocation2 + $0x190] sm:$0xff]
        %v2272 = vld [vmem:[#allocation2 + $0x198] sm:$0xff]
        %v2273 = vld [vmem:[#allocation2 + $0x1a0] sm:$0xff]
        %v2274 = vld [vmem:[#allocation2 + $0x1a8] sm:$0xff]
        %v2275 = vld [vmem:[#allocation2 + $0x1b0] sm:$0xff]
        %v2276 = vld [vmem:[#allocation2 + $0x1b8] sm:$0xff]
        %v2277 = vld [vmem:[#allocation2 + $0x1c0] sm:$0xff]
        %v2278 = vld [vmem:[#allocation2 + $0x1c8] sm:$0xff]
        %v2279 = vld [vmem:[#allocation2 + $0x1d0] sm:$0xff]
        %v2280 = vld [vmem:[#allocation2 + $0x1d8] sm:$0xff]
        %v2281 = vld [vmem:[#allocation2 + $0x1e0] sm:$0xff]
        %v2282 = vld [vmem:[#allocation2 + $0x1e8] sm:$0xff]
        %v2283 = vld [vmem:[#allocation2 + $0x1f0] sm:$0xff]
        %v2284 = vld [vmem:[#allocation2 + $0x1f8] sm:$0xff]
        %v2285 = vld [vmem:[#allocation2 + $0x200] sm:$0xff]
        %v2286 = vld [vmem:[#allocation2 + $0x208] sm:$0xff]
        %v2287 = vld [vmem:[#allocation2 + $0x210] sm:$0xff]
        %v2288 = vld [vmem:[#allocation2 + $0x218] sm:$0xff]
        %v2289 = vld [vmem:[#allocation2 + $0x220] sm:$0xff]
        %v2290 = vld [vmem:[#allocation2 + $0x228] sm:$0xff]
        %v2291 = vld [vmem:[#allocation2 + $0x230] sm:$0xff]
        %v2292 = vld [vmem:[#allocation2 + $0x238] sm:$0xff]
        %v2293 = vld [vmem:[#allocation2 + $0x240] sm:$0xff]
        %v2294 = vld [vmem:[#allocation2 + $0x248] sm:$0xff]
        %v2295 = vld [vmem:[#allocation2 + $0x250] sm:$0xff]
        %v2296 = vld [vmem:[#allocation2 + $0x258] sm:$0xff]
        %v2297 = vld [vmem:[#allocation2 + $0x260] sm:$0xff]
        %v2298 = vld [vmem:[#allocation2 + $0x268] sm:$0xff]
        %v2299 = vld [vmem:[#allocation2 + $0x270] sm:$0xff]
        %v2300 = vld [vmem:[#allocation2 + $0x278] sm:$0xff]
        %v2301 = vld [vmem:[#allocation2 + $0x280] sm:$0xff]
        %v2302 = vld [vmem:[%s2] sm:$0xff]
        %2304 = vset.pattern.permute.xlu0 0
        %2305 = vperm.xlu0 %2304, %v2302
        %v2306 = vpop.permute.xlu0 %2305
        %v2309 = vsel %vm856, %v2220, 0
        %2311 = vmatpush.msra.mxu0 %v2266
        %2312 = vmatpush.msra.mxu0 %v2263
        %2313 = vmatpush.msra.mxu0 %v2260
        %2314 = vmatpush.msra.mxu0 %v2257
        %2315 = vmatpush.msra.mxu0 %v2254
        %2316 = vmatpush.msra.mxu0 %v2251
        %2317 = vmatpush.msra.mxu0 %v2248
        %2318 = vmatpush.msra.mxu0 %v2245
        %2319 = vmatpush.msra.mxu0 %v2242
        %2320 = vmatpush.msra.mxu0 %v2239
        %2321 = vmatpush.msra.mxu0 %v2236
        %2322 = vmatpush.msra.mxu0 %v2233
        %2323 = vmatpush.msra.mxu0 %v2230
        %2324 = vmatpush.msra.mxu0 %v2227
        %2325 = vmatpush.msra.mxu0 %v2224
        %2326 = vmatpush.msra.mxu0 %v2221
        %2327 = vmatmul.f32.gmra.mxu0 %v2219
        %v2328 = vpop.f32.mrf.mxu0
        %v2329 = vadd.f32 %v2306, %v2328
        %2330 = vdwg.mxu0
        %2331 = vmatpush.msra.mxu0 0.0
        %2332 = vmatpush.msra.mxu0 0.0
        %2333 = vmatpush.msra.mxu0 0.0
        %2334 = vmatpush.msra.mxu0 0.0
        %2335 = vmatpush.msra.mxu0 0.0
        %2336 = vmatpush.msra.mxu0 %v2299
        %2337 = vmatpush.msra.mxu0 %v2296
        %2338 = vmatpush.msra.mxu0 %v2293
        %2339 = vmatpush.msra.mxu0 %v2290
        %2340 = vmatpush.msra.mxu0 %v2287
        %2341 = vmatpush.msra.mxu0 %v2284
        %2342 = vmatpush.msra.mxu0 %v2281
        %2343 = vmatpush.msra.mxu0 %v2278
        %2344 = vmatpush.msra.mxu0 %v2275
        %2345 = vmatpush.msra.mxu0 %v2272
        %2346 = vmatpush.msra.mxu0 %v2269
        %2347 = vmatmul.f32.gmra.mxu0 %v2309
        %v2348 = vpop.f32.mrf.mxu0
        %v2349 = vadd.f32 %v2329, %v2348
        %2350 = vdwg.mxu0
        %2351 = vmatpush.msra.mxu0 %v2267
        %2352 = vmatpush.msra.mxu0 %v2264
        %2353 = vmatpush.msra.mxu0 %v2261
        %2354 = vmatpush.msra.mxu0 %v2258
        %2355 = vmatpush.msra.mxu0 %v2255
        %2356 = vmatpush.msra.mxu0 %v2252
        %2357 = vmatpush.msra.mxu0 %v2249
        %2358 = vmatpush.msra.mxu0 %v2246
        %2359 = vmatpush.msra.mxu0 %v2243
        %2360 = vmatpush.msra.mxu0 %v2240
        %2361 = vmatpush.msra.mxu0 %v2237
        %2362 = vmatpush.msra.mxu0 %v2234
        %2363 = vmatpush.msra.mxu0 %v2231
        %2364 = vmatpush.msra.mxu0 %v2228
        %2365 = vmatpush.msra.mxu0 %v2225
        %2366 = vmatpush.msra.mxu0 %v2222
        %2367 = vmatmul.f32.gmra.mxu0 %v2219
        %v2368 = vpop.f32.mrf.mxu0
        %v2369 = vadd.f32 %v2306, %v2368
        %2370 = vdwg.mxu0
        %2371 = vmatpush.msra.mxu0 0.0
        %2372 = vmatpush.msra.mxu0 0.0
        %2373 = vmatpush.msra.mxu0 0.0
        %2374 = vmatpush.msra.mxu0 0.0
        %2375 = vmatpush.msra.mxu0 0.0
        %2376 = vmatpush.msra.mxu0 %v2300
        %2377 = vmatpush.msra.mxu0 %v2297
        %2378 = vmatpush.msra.mxu0 %v2294
        %2379 = vmatpush.msra.mxu0 %v2291
        %2380 = vmatpush.msra.mxu0 %v2288
        %2381 = vmatpush.msra.mxu0 %v2285
        %2382 = vmatpush.msra.mxu0 %v2282
        %2383 = vmatpush.msra.mxu0 %v2279
        %2384 = vmatpush.msra.mxu0 %v2276
        %2385 = vmatpush.msra.mxu0 %v2273
        %2386 = vmatpush.msra.mxu0 %v2270
        %2387 = vmatmul.f32.gmra.mxu0 %v2309
        %v2388 = vpop.f32.mrf.mxu0
        %v2389 = vadd.f32 %v2369, %v2388
        %2390 = vdwg.mxu0
        %2391 = vmatpush.msra.mxu0 %v2268
        %2392 = vmatpush.msra.mxu0 %v2265
        %2393 = vmatpush.msra.mxu0 %v2262
        %2394 = vmatpush.msra.mxu0 %v2259
        %2395 = vmatpush.msra.mxu0 %v2256
        %2396 = vmatpush.msra.mxu0 %v2253
        %2397 = vmatpush.msra.mxu0 %v2250
        %2398 = vmatpush.msra.mxu0 %v2247
        %2399 = vmatpush.msra.mxu0 %v2244
        %2400 = vmatpush.msra.mxu0 %v2241
        %2401 = vmatpush.msra.mxu0 %v2238
        %2402 = vmatpush.msra.mxu0 %v2235
        %2403 = vmatpush.msra.mxu0 %v2232
        %2404 = vmatpush.msra.mxu0 %v2229
        %2405 = vmatpush.msra.mxu0 %v2226
        %2406 = vmatpush.msra.mxu0 %v2223
        %2407 = vmatmul.f32.gmra.mxu0 %v2219
        %v2408 = vpop.f32.mrf.mxu0
        %v2409 = vadd.f32 %v2306, %v2408
        %2410 = vdwg.mxu0
        %2411 = vmatpush.msra.mxu0 0.0
        %2412 = vmatpush.msra.mxu0 0.0
        %2413 = vmatpush.msra.mxu0 0.0
        %2414 = vmatpush.msra.mxu0 0.0
        %2415 = vmatpush.msra.mxu0 0.0
        %2416 = vmatpush.msra.mxu0 %v2301
        %2417 = vmatpush.msra.mxu0 %v2298
        %2418 = vmatpush.msra.mxu0 %v2295
        %2419 = vmatpush.msra.mxu0 %v2292
        %2420 = vmatpush.msra.mxu0 %v2289
        %2421 = vmatpush.msra.mxu0 %v2286
        %2422 = vmatpush.msra.mxu0 %v2283
        %2423 = vmatpush.msra.mxu0 %v2280
        %2424 = vmatpush.msra.mxu0 %v2277
        %2425 = vmatpush.msra.mxu0 %v2274
        %2426 = vmatpush.msra.mxu0 %v2271
        %2427 = vmatmul.f32.gmra.mxu0 %v2309
        %v2428 = vpop.f32.mrf.mxu0
        %v2429 = vadd.f32 %v2409, %v2428
        %2430 = vdwg.mxu0
        %v2431 = vmul.f32 %v2349, 0.5
        %v2432 = vmul.f32 %v2389, 0.5
        %v2433 = vmul.f32 %v2429, 0.5
        %v2434 = vmul.f32 %v2349, 0.70710677
        %v2435 = vmul.f32 %v2389, 0.70710677
        %v2436 = vmul.f32 %v2429, 0.70710677
        %v2437 = vand.u32 2147483647, %v2434
        %v2438 = vand.u32 2147483647, %v2435
        %v2439 = vand.u32 2147483647, %v2436
        %v2440 = vmul.f32 %v2437, 0.3275911
        %v2441 = vmul.f32 %v2438, 0.3275911
        %v2442 = vmul.f32 %v2439, 0.3275911
        %v2443 = vadd.f32 %v2440, 1.0
        %v2444 = vadd.f32 %v2441, 1.0
        %v2445 = vadd.f32 %v2442, 1.0
        %v2446 = vrcp.pop %v2443
        %v2447 = vmul.f32 %v2443, %v2446
        %v2448 = vsub.f32 1.0, %v2447
        %v2449 = vmul.f32 %v2446, %v2448
        %v2450 = vadd.f32 %v2446, %v2449
        %vm2451 = vweird.f32 %v2443
        %vm2452 = vweird.f32 %v2446
        %vm2453 = vmor %vm2451, %vm2452
        %v2454 = vsel %vm2453, %v2446, %v2450
        %v2455 = vand.u32 2147483647, %v2443
        %vm2456 = vcmp.eq.f32.partialorder %v2455, 8.507059e+37
        %v2457 = vand.u32 %v2443, 2147483648
        %v2458 = vor.u32 1.1754944e-38, %v2457
        %v2459 = vsel %vm2456, %v2458, %v2454
        %v2460 = vmul.f32 1.0, %v2459
        %v2461 = vrcp.pop %v2444
        %v2462 = vmul.f32 %v2444, %v2461
        %v2463 = vsub.f32 1.0, %v2462
        %v2464 = vmul.f32 %v2461, %v2463
        %v2465 = vadd.f32 %v2461, %v2464
        %vm2466 = vweird.f32 %v2444
        %vm2467 = vweird.f32 %v2461
        %vm2468 = vmor %vm2466, %vm2467
        %v2469 = vsel %vm2468, %v2461, %v2465
        %v2470 = vand.u32 2147483647, %v2444
        %vm2471 = vcmp.eq.f32.partialorder %v2470, 8.507059e+37
        %v2472 = vand.u32 %v2444, 2147483648
        %v2473 = vor.u32 1.1754944e-38, %v2472
        %v2474 = vsel %vm2471, %v2473, %v2469
        %v2475 = vmul.f32 1.0, %v2474
        %v2476 = vrcp.pop %v2445
        %v2477 = vmul.f32 %v2445, %v2476
        %v2478 = vsub.f32 1.0, %v2477
        %v2479 = vmul.f32 %v2476, %v2478
        %v2480 = vadd.f32 %v2476, %v2479
        %vm2481 = vweird.f32 %v2445
        %vm2482 = vweird.f32 %v2476
        %vm2483 = vmor %vm2481, %vm2482
        %v2484 = vsel %vm2483, %v2476, %v2480
        %v2485 = vand.u32 2147483647, %v2445
        %vm2486 = vcmp.eq.f32.partialorder %v2485, 8.507059e+37
        %v2487 = vand.u32 %v2445, 2147483648
        %v2488 = vor.u32 1.1754944e-38, %v2487
        %v2489 = vsel %vm2486, %v2488, %v2484
        %v2490 = vmul.f32 1.0, %v2489
        %v2491 = vmul.f32 %v2460, 1.0614054
        %v2492 = vmul.f32 %v2475, 1.0614054
        %v2493 = vmul.f32 %v2490, 1.0614054
        %v2494 = vadd.f32 %v2491, -1.4531521
        %v2495 = vadd.f32 %v2492, -1.4531521
        %v2496 = vadd.f32 %v2493, -1.4531521
        %v2497 = vmul.f32 %v2460, %v2494
        %v2498 = vmul.f32 %v2475, %v2495
        %v2499 = vmul.f32 %v2490, %v2496
        %v2500 = vadd.f32 %v2497, 1.4214138
        %v2501 = vadd.f32 %v2498, 1.4214138
        %v2502 = vadd.f32 %v2499, 1.4214138
        %v2503 = vmul.f32 %v2460, %v2500
        %v2504 = vmul.f32 %v2475, %v2501
        %v2505 = vmul.f32 %v2490, %v2502
        %v2506 = vadd.f32 %v2503, -0.28449672
        %v2507 = vadd.f32 %v2504, -0.28449672
        %v2508 = vadd.f32 %v2505, -0.28449672
        %v2509 = vmul.f32 %v2460, %v2506
        %v2510 = vmul.f32 %v2475, %v2507
        %v2511 = vmul.f32 %v2490, %v2508
        %v2512 = vadd.f32 %v2509, 0.2548296
        %v2513 = vadd.f32 %v2510, 0.2548296
        %v2514 = vadd.f32 %v2511, 0.2548296
        %v2515 = vmul.f32 %v2460, %v2512
        %v2516 = vmul.f32 %v2475, %v2513
        %v2517 = vmul.f32 %v2490, %v2514
        %v2518 = vsub.f32 0.0, %v2437
        %v2519 = vsub.f32 0.0, %v2438
        %v2520 = vsub.f32 0.0, %v2439
        %v2521 = vmul.f32 %v2518, %v2437
        %v2522 = vmul.f32 %v2519, %v2438
        %v2523 = vmul.f32 %v2520, %v2439
        %v2524 = vmul.f32 %v2521, 1.442695
        %v2525 = vpow.pop %v2524
        %v2526 = vmul.f32 %v2522, 1.442695
        %v2527 = vpow.pop %v2526
        %v2528 = vmul.f32 %v2523, 1.442695
        %v2529 = vpow.pop %v2528
        %v2530 = vmul.f32 %v2515, %v2525
        %v2531 = vmul.f32 %v2516, %v2527
        %v2532 = vmul.f32 %v2517, %v2529
        %v2533 = vsub.f32 1.0, %v2530
        %v2534 = vsub.f32 1.0, %v2531
        %v2535 = vsub.f32 1.0, %v2532
        %vm2536 = vcmp.ge.f32.partialorder %v2434, 0.0
        %vm2537 = vcmp.ge.f32.partialorder %v2435, 0.0
        %vm2538 = vcmp.ge.f32.partialorder %v2436, 0.0
        %v2539 = vsub.f32 0.0, %v2533
        %v2540 = vsub.f32 0.0, %v2534
        %v2541 = vsub.f32 0.0, %v2535
        %v2542 = vsel %vm2536, %v2533, %v2539
        %v2543 = vsel %vm2537, %v2534, %v2540
        %v2544 = vsel %vm2538, %v2535, %v2541
        %v2545 = vadd.f32 %v2542, 1.0
        %v2546 = vadd.f32 %v2543, 1.0
        %v2547 = vadd.f32 %v2544, 1.0
        %v2548 = vmul.f32 %v2431, %v2545
        %v2549 = vmul.f32 %v2432, %v2546
        %v2550 = vmul.f32 %v2433, %v2547
        %2551 = vst [vmem:[#allocation3 + $0x48] sm:$0xff] %v2548
        %2552 = vst [vmem:[#allocation3 + $0x50] sm:$0xff] %v2549
        %2553 = vst [vmem:[#allocation3 + $0x58] sm:$0xff] %v2550
        %v2554 = vld [vmem:[#allocation3] sm:$0xff]
        %v2555 = vld [vmem:[#allocation3 + $0x8] sm:$0xff]
        %v2556 = vld [vmem:[#allocation3 + $0x10] sm:$0xff]
        %v2557 = vld [vmem:[#allocation3 + $0x18] sm:$0xff]
        %v2558 = vld [vmem:[#allocation3 + $0x20] sm:$0xff]
        %v2559 = vld [vmem:[#allocation3 + $0x28] sm:$0xff]
        %v2560 = vld [vmem:[#allocation3 + $0x30] sm:$0xff]
        %v2561 = vld [vmem:[#allocation3 + $0x38] sm:$0xff]
        %v2562 = vld [vmem:[#allocation3 + $0x40] sm:$0xff]
        %v2563 = vld [vmem:[#allocation3 + $0x48] sm:$0xff]
        %v2564 = vld [vmem:[#allocation3 + $0x50] sm:$0xff]
        %v2565 = vld [vmem:[#allocation3 + $0x58] sm:$0xff]
        %v2566 = vld [vmem:[%s3] sm:$0xff]
        %v2567 = vld [vmem:[%s3 + $0x8] sm:$0xff]
        %v2568 = vld [vmem:[%s4] sm:$0xff]
        %v2569 = vld [vmem:[%s4 + $0x8] sm:$0xff]
        %2571 = vset.pattern.permute.xlu0 0
        %2572 = vperm.xlu0 %2571, %v2568
        %v2573 = vpop.permute.xlu0 %2572
        %2576 = vset.pattern.permute.xlu0 0
        %2577 = vperm.xlu0 %2576, %v2569
        %v2578 = vpop.permute.xlu0 %2577
        %vm2580 = vcmask 64512
        %v2582 = vsel %vm2580, %v2566, 0
        %v2585 = vsel %vm2580, %v2567, 0
        %2587 = vmatpush.msra.mxu0 0.0
        %2588 = vmatpush.msra.mxu0 0.0
        %2589 = vmatpush.msra.mxu0 0.0
        %2590 = vmatpush.msra.mxu0 0.0
        %2591 = vmatpush.msra.mxu0 0.0
        %2592 = vmatpush.msra.mxu0 0.0
        %2593 = vmatpush.msra.mxu0 0.0
        %2594 = vmatpush.msra.mxu0 0.0
        %2595 = vmatpush.msra.mxu0 0.0
        %2596 = vmatpush.msra.mxu0 0.0
        %2597 = vmatpush.msra.mxu0 0.0
        %2598 = vmatpush.msra.mxu0 0.0
        %2599 = vmatpush.msra.mxu0 0.0
        %2600 = vmatpush.msra.mxu0 0.0
        %2601 = vmatpush.msra.mxu0 0.0
        %2602 = vmatpush.msra.mxu0 %v2554
        %2603 = vmatmul.f32.gmra.mxu0 %v2582
        %v2604 = vpop.f32.mrf.mxu0
        %v2605 = vadd.f32 %v2573, %v2604
        %2606 = vmatmul.f32.gmra.mxu0 %v2585
        %v2607 = vpop.f32.mrf.mxu0
        %v2608 = vadd.f32 %v2578, %v2607
        %2609 = vdwg.mxu0
        %2610 = vmatpush.msra.mxu0 0.0
        %2611 = vmatpush.msra.mxu0 0.0
        %2612 = vmatpush.msra.mxu0 0.0
        %2613 = vmatpush.msra.mxu0 0.0
        %2614 = vmatpush.msra.mxu0 0.0
        %2615 = vmatpush.msra.mxu0 0.0
        %2616 = vmatpush.msra.mxu0 0.0
        %2617 = vmatpush.msra.mxu0 0.0
        %2618 = vmatpush.msra.mxu0 0.0
        %2619 = vmatpush.msra.mxu0 0.0
        %2620 = vmatpush.msra.mxu0 0.0
        %2621 = vmatpush.msra.mxu0 0.0
        %2622 = vmatpush.msra.mxu0 0.0
        %2623 = vmatpush.msra.mxu0 0.0
        %2624 = vmatpush.msra.mxu0 0.0
        %2625 = vmatpush.msra.mxu0 %v2555
        %2626 = vmatmul.f32.gmra.mxu0 %v2582
        %v2627 = vpop.f32.mrf.mxu0
        %v2628 = vadd.f32 %v2573, %v2627
        %2629 = vmatmul.f32.gmra.mxu0 %v2585
        %v2630 = vpop.f32.mrf.mxu0
        %v2631 = vadd.f32 %v2578, %v2630
        %2632 = vdwg.mxu0
        %2633 = vmatpush.msra.mxu0 0.0
        %2634 = vmatpush.msra.mxu0 0.0
        %2635 = vmatpush.msra.mxu0 0.0
        %2636 = vmatpush.msra.mxu0 0.0
        %2637 = vmatpush.msra.mxu0 0.0
        %2638 = vmatpush.msra.mxu0 0.0
        %2639 = vmatpush.msra.mxu0 0.0
        %2640 = vmatpush.msra.mxu0 0.0
        %2641 = vmatpush.msra.mxu0 0.0
        %2642 = vmatpush.msra.mxu0 0.0
        %2643 = vmatpush.msra.mxu0 0.0
        %2644 = vmatpush.msra.mxu0 0.0
        %2645 = vmatpush.msra.mxu0 0.0
        %2646 = vmatpush.msra.mxu0 0.0
        %2647 = vmatpush.msra.mxu0 0.0
        %2648 = vmatpush.msra.mxu0 %v2556
        %2649 = vmatmul.f32.gmra.mxu0 %v2582
        %v2650 = vpop.f32.mrf.mxu0
        %v2651 = vadd.f32 %v2573, %v2650
        %2652 = vmatmul.f32.gmra.mxu0 %v2585
        %v2653 = vpop.f32.mrf.mxu0
        %v2654 = vadd.f32 %v2578, %v2653
        %2655 = vdwg.mxu0
        %2656 = vmatpush.msra.mxu0 0.0
        %2657 = vmatpush.msra.mxu0 0.0
        %2658 = vmatpush.msra.mxu0 0.0
        %2659 = vmatpush.msra.mxu0 0.0
        %2660 = vmatpush.msra.mxu0 0.0
        %2661 = vmatpush.msra.mxu0 0.0
        %2662 = vmatpush.msra.mxu0 0.0
        %2663 = vmatpush.msra.mxu0 0.0
        %2664 = vmatpush.msra.mxu0 0.0
        %2665 = vmatpush.msra.mxu0 0.0
        %2666 = vmatpush.msra.mxu0 0.0
        %2667 = vmatpush.msra.mxu0 0.0
        %2668 = vmatpush.msra.mxu0 0.0
        %2669 = vmatpush.msra.mxu0 0.0
        %2670 = vmatpush.msra.mxu0 0.0
        %2671 = vmatpush.msra.mxu0 %v2557
        %2672 = vmatmul.f32.gmra.mxu0 %v2582
        %v2673 = vpop.f32.mrf.mxu0
        %v2674 = vadd.f32 %v2573, %v2673
        %2675 = vmatmul.f32.gmra.mxu0 %v2585
        %v2676 = vpop.f32.mrf.mxu0
        %v2677 = vadd.f32 %v2578, %v2676
        %2678 = vdwg.mxu0
        %2679 = vmatpush.msra.mxu0 0.0
        %2680 = vmatpush.msra.mxu0 0.0
        %2681 = vmatpush.msra.mxu0 0.0
        %2682 = vmatpush.msra.mxu0 0.0
        %2683 = vmatpush.msra.mxu0 0.0
        %2684 = vmatpush.msra.mxu0 0.0
        %2685 = vmatpush.msra.mxu0 0.0
        %2686 = vmatpush.msra.mxu0 0.0
        %2687 = vmatpush.msra.mxu0 0.0
        %2688 = vmatpush.msra.mxu0 0.0
        %2689 = vmatpush.msra.mxu0 0.0
        %2690 = vmatpush.msra.mxu0 0.0
        %2691 = vmatpush.msra.mxu0 0.0
        %2692 = vmatpush.msra.mxu0 0.0
        %2693 = vmatpush.msra.mxu0 0.0
        %2694 = vmatpush.msra.mxu0 %v2558
        %2695 = vmatmul.f32.gmra.mxu0 %v2582
        %v2696 = vpop.f32.mrf.mxu0
        %v2697 = vadd.f32 %v2573, %v2696
        %2698 = vmatmul.f32.gmra.mxu0 %v2585
        %v2699 = vpop.f32.mrf.mxu0
        %v2700 = vadd.f32 %v2578, %v2699
        %2701 = vdwg.mxu0
        %2702 = vmatpush.msra.mxu0 0.0
        %2703 = vmatpush.msra.mxu0 0.0
        %2704 = vmatpush.msra.mxu0 0.0
        %2705 = vmatpush.msra.mxu0 0.0
        %2706 = vmatpush.msra.mxu0 0.0
        %2707 = vmatpush.msra.mxu0 0.0
        %2708 = vmatpush.msra.mxu0 0.0
        %2709 = vmatpush.msra.mxu0 0.0
        %2710 = vmatpush.msra.mxu0 0.0
        %2711 = vmatpush.msra.mxu0 0.0
        %2712 = vmatpush.msra.mxu0 0.0
        %2713 = vmatpush.msra.mxu0 0.0
        %2714 = vmatpush.msra.mxu0 0.0
        %2715 = vmatpush.msra.mxu0 0.0
        %2716 = vmatpush.msra.mxu0 0.0
        %2717 = vmatpush.msra.mxu0 %v2559
        %2718 = vmatmul.f32.gmra.mxu0 %v2582
        %v2719 = vpop.f32.mrf.mxu0
        %v2720 = vadd.f32 %v2573, %v2719
        %2721 = vmatmul.f32.gmra.mxu0 %v2585
        %v2722 = vpop.f32.mrf.mxu0
        %v2723 = vadd.f32 %v2578, %v2722
        %2724 = vdwg.mxu0
        %2725 = vmatpush.msra.mxu0 0.0
        %2726 = vmatpush.msra.mxu0 0.0
        %2727 = vmatpush.msra.mxu0 0.0
        %2728 = vmatpush.msra.mxu0 0.0
        %2729 = vmatpush.msra.mxu0 0.0
        %2730 = vmatpush.msra.mxu0 0.0
        %2731 = vmatpush.msra.mxu0 0.0
        %2732 = vmatpush.msra.mxu0 0.0
        %2733 = vmatpush.msra.mxu0 0.0
        %2734 = vmatpush.msra.mxu0 0.0
        %2735 = vmatpush.msra.mxu0 0.0
        %2736 = vmatpush.msra.mxu0 0.0
        %2737 = vmatpush.msra.mxu0 0.0
        %2738 = vmatpush.msra.mxu0 0.0
        %2739 = vmatpush.msra.mxu0 0.0
        %2740 = vmatpush.msra.mxu0 %v2560
        %2741 = vmatmul.f32.gmra.mxu0 %v2582
        %v2742 = vpop.f32.mrf.mxu0
        %v2743 = vadd.f32 %v2573, %v2742
        %2744 = vmatmul.f32.gmra.mxu0 %v2585
        %v2745 = vpop.f32.mrf.mxu0
        %v2746 = vadd.f32 %v2578, %v2745
        %2747 = vdwg.mxu0
        %2748 = vmatpush.msra.mxu0 0.0
        %2749 = vmatpush.msra.mxu0 0.0
        %2750 = vmatpush.msra.mxu0 0.0
        %2751 = vmatpush.msra.mxu0 0.0
        %2752 = vmatpush.msra.mxu0 0.0
        %2753 = vmatpush.msra.mxu0 0.0
        %2754 = vmatpush.msra.mxu0 0.0
        %2755 = vmatpush.msra.mxu0 0.0
        %2756 = vmatpush.msra.mxu0 0.0
        %2757 = vmatpush.msra.mxu0 0.0
        %2758 = vmatpush.msra.mxu0 0.0
        %2759 = vmatpush.msra.mxu0 0.0
        %2760 = vmatpush.msra.mxu0 0.0
        %2761 = vmatpush.msra.mxu0 0.0
        %2762 = vmatpush.msra.mxu0 0.0
        %2763 = vmatpush.msra.mxu0 %v2561
        %2764 = vmatmul.f32.gmra.mxu0 %v2582
        %v2765 = vpop.f32.mrf.mxu0
        %v2766 = vadd.f32 %v2573, %v2765
        %2767 = vmatmul.f32.gmra.mxu0 %v2585
        %v2768 = vpop.f32.mrf.mxu0
        %v2769 = vadd.f32 %v2578, %v2768
        %2770 = vdwg.mxu0
        %2771 = vmatpush.msra.mxu0 0.0
        %2772 = vmatpush.msra.mxu0 0.0
        %2773 = vmatpush.msra.mxu0 0.0
        %2774 = vmatpush.msra.mxu0 0.0
        %2775 = vmatpush.msra.mxu0 0.0
        %2776 = vmatpush.msra.mxu0 0.0
        %2777 = vmatpush.msra.mxu0 0.0
        %2778 = vmatpush.msra.mxu0 0.0
        %2779 = vmatpush.msra.mxu0 0.0
        %2780 = vmatpush.msra.mxu0 0.0
        %2781 = vmatpush.msra.mxu0 0.0
        %2782 = vmatpush.msra.mxu0 0.0
        %2783 = vmatpush.msra.mxu0 0.0
        %2784 = vmatpush.msra.mxu0 0.0
        %2785 = vmatpush.msra.mxu0 0.0
        %2786 = vmatpush.msra.mxu0 %v2562
        %2787 = vmatmul.f32.gmra.mxu0 %v2582
        %v2788 = vpop.f32.mrf.mxu0
        %v2789 = vadd.f32 %v2573, %v2788
        %2790 = vmatmul.f32.gmra.mxu0 %v2585
        %v2791 = vpop.f32.mrf.mxu0
        %v2792 = vadd.f32 %v2578, %v2791
        %2793 = vdwg.mxu0
        %2794 = vmatpush.msra.mxu0 0.0
        %2795 = vmatpush.msra.mxu0 0.0
        %2796 = vmatpush.msra.mxu0 0.0
        %2797 = vmatpush.msra.mxu0 0.0
        %2798 = vmatpush.msra.mxu0 0.0
        %2799 = vmatpush.msra.mxu0 0.0
        %2800 = vmatpush.msra.mxu0 0.0
        %2801 = vmatpush.msra.mxu0 0.0
        %2802 = vmatpush.msra.mxu0 0.0
        %2803 = vmatpush.msra.mxu0 0.0
        %2804 = vmatpush.msra.mxu0 0.0
        %2805 = vmatpush.msra.mxu0 0.0
        %2806 = vmatpush.msra.mxu0 0.0
        %2807 = vmatpush.msra.mxu0 0.0
        %2808 = vmatpush.msra.mxu0 0.0
        %2809 = vmatpush.msra.mxu0 %v2563
        %2810 = vmatmul.f32.gmra.mxu0 %v2582
        %v2811 = vpop.f32.mrf.mxu0
        %v2812 = vadd.f32 %v2573, %v2811
        %2813 = vmatmul.f32.gmra.mxu0 %v2585
        %v2814 = vpop.f32.mrf.mxu0
        %v2815 = vadd.f32 %v2578, %v2814
        %2816 = vdwg.mxu0
        %2817 = vmatpush.msra.mxu0 0.0
        %2818 = vmatpush.msra.mxu0 0.0
        %2819 = vmatpush.msra.mxu0 0.0
        %2820 = vmatpush.msra.mxu0 0.0
        %2821 = vmatpush.msra.mxu0 0.0
        %2822 = vmatpush.msra.mxu0 0.0
        %2823 = vmatpush.msra.mxu0 0.0
        %2824 = vmatpush.msra.mxu0 0.0
        %2825 = vmatpush.msra.mxu0 0.0
        %2826 = vmatpush.msra.mxu0 0.0
        %2827 = vmatpush.msra.mxu0 0.0
        %2828 = vmatpush.msra.mxu0 0.0
        %2829 = vmatpush.msra.mxu0 0.0
        %2830 = vmatpush.msra.mxu0 0.0
        %2831 = vmatpush.msra.mxu0 0.0
        %2832 = vmatpush.msra.mxu0 %v2564
        %2833 = vmatmul.f32.gmra.mxu0 %v2582
        %v2834 = vpop.f32.mrf.mxu0
        %v2835 = vadd.f32 %v2573, %v2834
        %2836 = vmatmul.f32.gmra.mxu0 %v2585
        %v2837 = vpop.f32.mrf.mxu0
        %v2838 = vadd.f32 %v2578, %v2837
        %2839 = vdwg.mxu0
        %2840 = vmatpush.msra.mxu0 0.0
        %2841 = vmatpush.msra.mxu0 0.0
        %2842 = vmatpush.msra.mxu0 0.0
        %2843 = vmatpush.msra.mxu0 0.0
        %2844 = vmatpush.msra.mxu0 0.0
        %2845 = vmatpush.msra.mxu0 0.0
        %2846 = vmatpush.msra.mxu0 0.0
        %2847 = vmatpush.msra.mxu0 0.0
        %2848 = vmatpush.msra.mxu0 0.0
        %2849 = vmatpush.msra.mxu0 0.0
        %2850 = vmatpush.msra.mxu0 0.0
        %2851 = vmatpush.msra.mxu0 0.0
        %2852 = vmatpush.msra.mxu0 0.0
        %2853 = vmatpush.msra.mxu0 0.0
        %2854 = vmatpush.msra.mxu0 0.0
        %2855 = vmatpush.msra.mxu0 %v2565
        %2856 = vmatmul.f32.gmra.mxu0 %v2582
        %v2857 = vpop.f32.mrf.mxu0
        %v2858 = vadd.f32 %v2573, %v2857
        %2859 = vmatmul.f32.gmra.mxu0 %v2585
        %v2860 = vpop.f32.mrf.mxu0
        %v2861 = vadd.f32 %v2578, %v2860
        %2862 = vdwg.mxu0
        %v2863 = vmul.f32 %v2605, 0.5
        %v2864 = vmul.f32 %v2628, 0.5
        %v2865 = vmul.f32 %v2651, 0.5
        %v2866 = vmul.f32 %v2674, 0.5
        %v2867 = vmul.f32 %v2697, 0.5
        %v2868 = vmul.f32 %v2720, 0.5
        %v2869 = vmul.f32 %v2743, 0.5
        %v2870 = vmul.f32 %v2766, 0.5
        %v2871 = vmul.f32 %v2789, 0.5
        %v2872 = vmul.f32 %v2812, 0.5
        %v2873 = vmul.f32 %v2835, 0.5
        %v2874 = vmul.f32 %v2858, 0.5
        %v2875 = vmul.f32 %v2608, 0.5
        %v2876 = vmul.f32 %v2631, 0.5
        %v2877 = vmul.f32 %v2654, 0.5
        %v2878 = vmul.f32 %v2677, 0.5
        %v2879 = vmul.f32 %v2700, 0.5
        %v2880 = vmul.f32 %v2723, 0.5
        %v2881 = vmul.f32 %v2746, 0.5
        %v2882 = vmul.f32 %v2769, 0.5
        %v2883 = vmul.f32 %v2792, 0.5
        %v2884 = vmul.f32 %v2815, 0.5
        %v2885 = vmul.f32 %v2838, 0.5
        %v2886 = vmul.f32 %v2861, 0.5
        %v2887 = vmul.f32 %v2605, 0.70710677
        %v2888 = vmul.f32 %v2628, 0.70710677
        %v2889 = vmul.f32 %v2651, 0.70710677
        %v2890 = vmul.f32 %v2674, 0.70710677
        %v2891 = vmul.f32 %v2697, 0.70710677
        %v2892 = vmul.f32 %v2720, 0.70710677
        %v2893 = vmul.f32 %v2743, 0.70710677
        %v2894 = vmul.f32 %v2766, 0.70710677
        %v2895 = vmul.f32 %v2789, 0.70710677
        %v2896 = vmul.f32 %v2812, 0.70710677
        %v2897 = vmul.f32 %v2835, 0.70710677
        %v2898 = vmul.f32 %v2858, 0.70710677
        %v2899 = vmul.f32 %v2608, 0.70710677
        %v2900 = vmul.f32 %v2631, 0.70710677
        %v2901 = vmul.f32 %v2654, 0.70710677
        %v2902 = vmul.f32 %v2677, 0.70710677
        %v2903 = vmul.f32 %v2700, 0.70710677
        %v2904 = vmul.f32 %v2723, 0.70710677
        %v2905 = vmul.f32 %v2746, 0.70710677
        %v2906 = vmul.f32 %v2769, 0.70710677
        %v2907 = vmul.f32 %v2792, 0.70710677
        %v2908 = vmul.f32 %v2815, 0.70710677
        %v2909 = vmul.f32 %v2838, 0.70710677
        %v2910 = vmul.f32 %v2861, 0.70710677
        %v2911 = vand.u32 2147483647, %v2887
        %v2912 = vand.u32 2147483647, %v2888
        %v2913 = vand.u32 2147483647, %v2889
        %v2914 = vand.u32 2147483647, %v2890
        %v2915 = vand.u32 2147483647, %v2891
        %v2916 = vand.u32 2147483647, %v2892
        %v2917 = vand.u32 2147483647, %v2893
        %v2918 = vand.u32 2147483647, %v2894
        %v2919 = vand.u32 2147483647, %v2895
        %v2920 = vand.u32 2147483647, %v2896
        %v2921 = vand.u32 2147483647, %v2897
        %v2922 = vand.u32 2147483647, %v2898
        %v2923 = vand.u32 2147483647, %v2899
        %v2924 = vand.u32 2147483647, %v2900
        %v2925 = vand.u32 2147483647, %v2901
        %v2926 = vand.u32 2147483647, %v2902
        %v2927 = vand.u32 2147483647, %v2903
        %v2928 = vand.u32 2147483647, %v2904
        %v2929 = vand.u32 2147483647, %v2905
        %v2930 = vand.u32 2147483647, %v2906
        %v2931 = vand.u32 2147483647, %v2907
        %v2932 = vand.u32 2147483647, %v2908
        %v2933 = vand.u32 2147483647, %v2909
        %v2934 = vand.u32 2147483647, %v2910
        %v2935 = vmul.f32 %v2911, 0.3275911
        %v2936 = vmul.f32 %v2912, 0.3275911
        %v2937 = vmul.f32 %v2913, 0.3275911
        %v2938 = vmul.f32 %v2914, 0.3275911
        %v2939 = vmul.f32 %v2915, 0.3275911
        %v2940 = vmul.f32 %v2916, 0.3275911
        %v2941 = vmul.f32 %v2917, 0.3275911
        %v2942 = vmul.f32 %v2918, 0.3275911
        %v2943 = vmul.f32 %v2919, 0.3275911
        %v2944 = vmul.f32 %v2920, 0.3275911
        %v2945 = vmul.f32 %v2921, 0.3275911
        %v2946 = vmul.f32 %v2922, 0.3275911
        %v2947 = vmul.f32 %v2923, 0.3275911
        %v2948 = vmul.f32 %v2924, 0.3275911
        %v2949 = vmul.f32 %v2925, 0.3275911
        %v2950 = vmul.f32 %v2926, 0.3275911
        %v2951 = vmul.f32 %v2927, 0.3275911
        %v2952 = vmul.f32 %v2928, 0.3275911
        %v2953 = vmul.f32 %v2929, 0.3275911
        %v2954 = vmul.f32 %v2930, 0.3275911
        %v2955 = vmul.f32 %v2931, 0.3275911
        %v2956 = vmul.f32 %v2932, 0.3275911
        %v2957 = vmul.f32 %v2933, 0.3275911
        %v2958 = vmul.f32 %v2934, 0.3275911
        %v2959 = vadd.f32 %v2935, 1.0
        %v2960 = vadd.f32 %v2936, 1.0
        %v2961 = vadd.f32 %v2937, 1.0
        %v2962 = vadd.f32 %v2938, 1.0
        %v2963 = vadd.f32 %v2939, 1.0
        %v2964 = vadd.f32 %v2940, 1.0
        %v2965 = vadd.f32 %v2941, 1.0
        %v2966 = vadd.f32 %v2942, 1.0
        %v2967 = vadd.f32 %v2943, 1.0
        %v2968 = vadd.f32 %v2944, 1.0
        %v2969 = vadd.f32 %v2945, 1.0
        %v2970 = vadd.f32 %v2946, 1.0
        %v2971 = vadd.f32 %v2947, 1.0
        %v2972 = vadd.f32 %v2948, 1.0
        %v2973 = vadd.f32 %v2949, 1.0
        %v2974 = vadd.f32 %v2950, 1.0
        %v2975 = vadd.f32 %v2951, 1.0
        %v2976 = vadd.f32 %v2952, 1.0
        %v2977 = vadd.f32 %v2953, 1.0
        %v2978 = vadd.f32 %v2954, 1.0
        %v2979 = vadd.f32 %v2955, 1.0
        %v2980 = vadd.f32 %v2956, 1.0
        %v2981 = vadd.f32 %v2957, 1.0
        %v2982 = vadd.f32 %v2958, 1.0
        %v2983 = vrcp.pop %v2959
        %v2984 = vmul.f32 %v2959, %v2983
        %v2985 = vsub.f32 1.0, %v2984
        %v2986 = vmul.f32 %v2983, %v2985
        %v2987 = vadd.f32 %v2983, %v2986
        %vm2988 = vweird.f32 %v2959
        %vm2989 = vweird.f32 %v2983
        %vm2990 = vmor %vm2988, %vm2989
        %v2991 = vsel %vm2990, %v2983, %v2987
        %v2992 = vand.u32 2147483647, %v2959
        %vm2993 = vcmp.eq.f32.partialorder %v2992, 8.507059e+37
        %v2994 = vand.u32 %v2959, 2147483648
        %v2995 = vor.u32 1.1754944e-38, %v2994
        %v2996 = vsel %vm2993, %v2995, %v2991
        %v2997 = vmul.f32 1.0, %v2996
        %v2998 = vrcp.pop %v2960
        %v2999 = vmul.f32 %v2960, %v2998
        %v3000 = vsub.f32 1.0, %v2999
        %v3001 = vmul.f32 %v2998, %v3000
        %v3002 = vadd.f32 %v2998, %v3001
        %vm3003 = vweird.f32 %v2960
        %vm3004 = vweird.f32 %v2998
        %vm3005 = vmor %vm3003, %vm3004
        %v3006 = vsel %vm3005, %v2998, %v3002
        %v3007 = vand.u32 2147483647, %v2960
        %vm3008 = vcmp.eq.f32.partialorder %v3007, 8.507059e+37
        %v3009 = vand.u32 %v2960, 2147483648
        %v3010 = vor.u32 1.1754944e-38, %v3009
        %v3011 = vsel %vm3008, %v3010, %v3006
        %v3012 = vmul.f32 1.0, %v3011
        %v3013 = vrcp.pop %v2961
        %v3014 = vmul.f32 %v2961, %v3013
        %v3015 = vsub.f32 1.0, %v3014
        %v3016 = vmul.f32 %v3013, %v3015
        %v3017 = vadd.f32 %v3013, %v3016
        %vm3018 = vweird.f32 %v2961
        %vm3019 = vweird.f32 %v3013
        %vm3020 = vmor %vm3018, %vm3019
        %v3021 = vsel %vm3020, %v3013, %v3017
        %v3022 = vand.u32 2147483647, %v2961
        %vm3023 = vcmp.eq.f32.partialorder %v3022, 8.507059e+37
        %v3024 = vand.u32 %v2961, 2147483648
        %v3025 = vor.u32 1.1754944e-38, %v3024
        %v3026 = vsel %vm3023, %v3025, %v3021
        %v3027 = vmul.f32 1.0, %v3026
        %v3028 = vrcp.pop %v2962
        %v3029 = vmul.f32 %v2962, %v3028
        %v3030 = vsub.f32 1.0, %v3029
        %v3031 = vmul.f32 %v3028, %v3030
        %v3032 = vadd.f32 %v3028, %v3031
        %vm3033 = vweird.f32 %v2962
        %vm3034 = vweird.f32 %v3028
        %vm3035 = vmor %vm3033, %vm3034
        %v3036 = vsel %vm3035, %v3028, %v3032
        %v3037 = vand.u32 2147483647, %v2962
        %vm3038 = vcmp.eq.f32.partialorder %v3037, 8.507059e+37
        %v3039 = vand.u32 %v2962, 2147483648
        %v3040 = vor.u32 1.1754944e-38, %v3039
        %v3041 = vsel %vm3038, %v3040, %v3036
        %v3042 = vmul.f32 1.0, %v3041
        %v3043 = vrcp.pop %v2963
        %v3044 = vmul.f32 %v2963, %v3043
        %v3045 = vsub.f32 1.0, %v3044
        %v3046 = vmul.f32 %v3043, %v3045
        %v3047 = vadd.f32 %v3043, %v3046
        %vm3048 = vweird.f32 %v2963
        %vm3049 = vweird.f32 %v3043
        %vm3050 = vmor %vm3048, %vm3049
        %v3051 = vsel %vm3050, %v3043, %v3047
        %v3052 = vand.u32 2147483647, %v2963
        %vm3053 = vcmp.eq.f32.partialorder %v3052, 8.507059e+37
        %v3054 = vand.u32 %v2963, 2147483648
        %v3055 = vor.u32 1.1754944e-38, %v3054
        %v3056 = vsel %vm3053, %v3055, %v3051
        %v3057 = vmul.f32 1.0, %v3056
        %v3058 = vrcp.pop %v2964
        %v3059 = vmul.f32 %v2964, %v3058
        %v3060 = vsub.f32 1.0, %v3059
        %v3061 = vmul.f32 %v3058, %v3060
        %v3062 = vadd.f32 %v3058, %v3061
        %vm3063 = vweird.f32 %v2964
        %vm3064 = vweird.f32 %v3058
        %vm3065 = vmor %vm3063, %vm3064
        %v3066 = vsel %vm3065, %v3058, %v3062
        %v3067 = vand.u32 2147483647, %v2964
        %vm3068 = vcmp.eq.f32.partialorder %v3067, 8.507059e+37
        %v3069 = vand.u32 %v2964, 2147483648
        %v3070 = vor.u32 1.1754944e-38, %v3069
        %v3071 = vsel %vm3068, %v3070, %v3066
        %v3072 = vmul.f32 1.0, %v3071
        %v3073 = vrcp.pop %v2965
        %v3074 = vmul.f32 %v2965, %v3073
        %v3075 = vsub.f32 1.0, %v3074
        %v3076 = vmul.f32 %v3073, %v3075
        %v3077 = vadd.f32 %v3073, %v3076
        %vm3078 = vweird.f32 %v2965
        %vm3079 = vweird.f32 %v3073
        %vm3080 = vmor %vm3078, %vm3079
        %v3081 = vsel %vm3080, %v3073, %v3077
        %v3082 = vand.u32 2147483647, %v2965
        %vm3083 = vcmp.eq.f32.partialorder %v3082, 8.507059e+37
        %v3084 = vand.u32 %v2965, 2147483648
        %v3085 = vor.u32 1.1754944e-38, %v3084
        %v3086 = vsel %vm3083, %v3085, %v3081
        %v3087 = vmul.f32 1.0, %v3086
        %v3088 = vrcp.pop %v2966
        %v3089 = vmul.f32 %v2966, %v3088
        %v3090 = vsub.f32 1.0, %v3089
        %v3091 = vmul.f32 %v3088, %v3090
        %v3092 = vadd.f32 %v3088, %v3091
        %vm3093 = vweird.f32 %v2966
        %vm3094 = vweird.f32 %v3088
        %vm3095 = vmor %vm3093, %vm3094
        %v3096 = vsel %vm3095, %v3088, %v3092
        %v3097 = vand.u32 2147483647, %v2966
        %vm3098 = vcmp.eq.f32.partialorder %v3097, 8.507059e+37
        %v3099 = vand.u32 %v2966, 2147483648
        %v3100 = vor.u32 1.1754944e-38, %v3099
        %v3101 = vsel %vm3098, %v3100, %v3096
        %v3102 = vmul.f32 1.0, %v3101
        %v3103 = vrcp.pop %v2967
        %v3104 = vmul.f32 %v2967, %v3103
        %v3105 = vsub.f32 1.0, %v3104
        %v3106 = vmul.f32 %v3103, %v3105
        %v3107 = vadd.f32 %v3103, %v3106
        %vm3108 = vweird.f32 %v2967
        %vm3109 = vweird.f32 %v3103
        %vm3110 = vmor %vm3108, %vm3109
        %v3111 = vsel %vm3110, %v3103, %v3107
        %v3112 = vand.u32 2147483647, %v2967
        %vm3113 = vcmp.eq.f32.partialorder %v3112, 8.507059e+37
        %v3114 = vand.u32 %v2967, 2147483648
        %v3115 = vor.u32 1.1754944e-38, %v3114
        %v3116 = vsel %vm3113, %v3115, %v3111
        %v3117 = vmul.f32 1.0, %v3116
        %v3118 = vrcp.pop %v2968
        %v3119 = vmul.f32 %v2968, %v3118
        %v3120 = vsub.f32 1.0, %v3119
        %v3121 = vmul.f32 %v3118, %v3120
        %v3122 = vadd.f32 %v3118, %v3121
        %vm3123 = vweird.f32 %v2968
        %vm3124 = vweird.f32 %v3118
        %vm3125 = vmor %vm3123, %vm3124
        %v3126 = vsel %vm3125, %v3118, %v3122
        %v3127 = vand.u32 2147483647, %v2968
        %vm3128 = vcmp.eq.f32.partialorder %v3127, 8.507059e+37
        %v3129 = vand.u32 %v2968, 2147483648
        %v3130 = vor.u32 1.1754944e-38, %v3129
        %v3131 = vsel %vm3128, %v3130, %v3126
        %v3132 = vmul.f32 1.0, %v3131
        %v3133 = vrcp.pop %v2969
        %v3134 = vmul.f32 %v2969, %v3133
        %v3135 = vsub.f32 1.0, %v3134
        %v3136 = vmul.f32 %v3133, %v3135
        %v3137 = vadd.f32 %v3133, %v3136
        %vm3138 = vweird.f32 %v2969
        %vm3139 = vweird.f32 %v3133
        %vm3140 = vmor %vm3138, %vm3139
        %v3141 = vsel %vm3140, %v3133, %v3137
        %v3142 = vand.u32 2147483647, %v2969
        %vm3143 = vcmp.eq.f32.partialorder %v3142, 8.507059e+37
        %v3144 = vand.u32 %v2969, 2147483648
        %v3145 = vor.u32 1.1754944e-38, %v3144
        %v3146 = vsel %vm3143, %v3145, %v3141
        %v3147 = vmul.f32 1.0, %v3146
        %v3148 = vrcp.pop %v2970
        %v3149 = vmul.f32 %v2970, %v3148
        %v3150 = vsub.f32 1.0, %v3149
        %v3151 = vmul.f32 %v3148, %v3150
        %v3152 = vadd.f32 %v3148, %v3151
        %vm3153 = vweird.f32 %v2970
        %vm3154 = vweird.f32 %v3148
        %vm3155 = vmor %vm3153, %vm3154
        %v3156 = vsel %vm3155, %v3148, %v3152
        %v3157 = vand.u32 2147483647, %v2970
        %vm3158 = vcmp.eq.f32.partialorder %v3157, 8.507059e+37
        %v3159 = vand.u32 %v2970, 2147483648
        %v3160 = vor.u32 1.1754944e-38, %v3159
        %v3161 = vsel %vm3158, %v3160, %v3156
        %v3162 = vmul.f32 1.0, %v3161
        %v3163 = vrcp.pop %v2971
        %v3164 = vmul.f32 %v2971, %v3163
        %v3165 = vsub.f32 1.0, %v3164
        %v3166 = vmul.f32 %v3163, %v3165
        %v3167 = vadd.f32 %v3163, %v3166
        %vm3168 = vweird.f32 %v2971
        %vm3169 = vweird.f32 %v3163
        %vm3170 = vmor %vm3168, %vm3169
        %v3171 = vsel %vm3170, %v3163, %v3167
        %v3172 = vand.u32 2147483647, %v2971
        %vm3173 = vcmp.eq.f32.partialorder %v3172, 8.507059e+37
        %v3174 = vand.u32 %v2971, 2147483648
        %v3175 = vor.u32 1.1754944e-38, %v3174
        %v3176 = vsel %vm3173, %v3175, %v3171
        %v3177 = vmul.f32 1.0, %v3176
        %v3178 = vrcp.pop %v2972
        %v3179 = vmul.f32 %v2972, %v3178
        %v3180 = vsub.f32 1.0, %v3179
        %v3181 = vmul.f32 %v3178, %v3180
        %v3182 = vadd.f32 %v3178, %v3181
        %vm3183 = vweird.f32 %v2972
        %vm3184 = vweird.f32 %v3178
        %vm3185 = vmor %vm3183, %vm3184
        %v3186 = vsel %vm3185, %v3178, %v3182
        %v3187 = vand.u32 2147483647, %v2972
        %vm3188 = vcmp.eq.f32.partialorder %v3187, 8.507059e+37
        %v3189 = vand.u32 %v2972, 2147483648
        %v3190 = vor.u32 1.1754944e-38, %v3189
        %v3191 = vsel %vm3188, %v3190, %v3186
        %v3192 = vmul.f32 1.0, %v3191
        %v3193 = vrcp.pop %v2973
        %v3194 = vmul.f32 %v2973, %v3193
        %v3195 = vsub.f32 1.0, %v3194
        %v3196 = vmul.f32 %v3193, %v3195
        %v3197 = vadd.f32 %v3193, %v3196
        %vm3198 = vweird.f32 %v2973
        %vm3199 = vweird.f32 %v3193
        %vm3200 = vmor %vm3198, %vm3199
        %v3201 = vsel %vm3200, %v3193, %v3197
        %v3202 = vand.u32 2147483647, %v2973
        %vm3203 = vcmp.eq.f32.partialorder %v3202, 8.507059e+37
        %v3204 = vand.u32 %v2973, 2147483648
        %v3205 = vor.u32 1.1754944e-38, %v3204
        %v3206 = vsel %vm3203, %v3205, %v3201
        %v3207 = vmul.f32 1.0, %v3206
        %v3208 = vrcp.pop %v2974
        %v3209 = vmul.f32 %v2974, %v3208
        %v3210 = vsub.f32 1.0, %v3209
        %v3211 = vmul.f32 %v3208, %v3210
        %v3212 = vadd.f32 %v3208, %v3211
        %vm3213 = vweird.f32 %v2974
        %vm3214 = vweird.f32 %v3208
        %vm3215 = vmor %vm3213, %vm3214
        %v3216 = vsel %vm3215, %v3208, %v3212
        %v3217 = vand.u32 2147483647, %v2974
        %vm3218 = vcmp.eq.f32.partialorder %v3217, 8.507059e+37
        %v3219 = vand.u32 %v2974, 2147483648
        %v3220 = vor.u32 1.1754944e-38, %v3219
        %v3221 = vsel %vm3218, %v3220, %v3216
        %v3222 = vmul.f32 1.0, %v3221
        %v3223 = vrcp.pop %v2975
        %v3224 = vmul.f32 %v2975, %v3223
        %v3225 = vsub.f32 1.0, %v3224
        %v3226 = vmul.f32 %v3223, %v3225
        %v3227 = vadd.f32 %v3223, %v3226
        %vm3228 = vweird.f32 %v2975
        %vm3229 = vweird.f32 %v3223
        %vm3230 = vmor %vm3228, %vm3229
        %v3231 = vsel %vm3230, %v3223, %v3227
        %v3232 = vand.u32 2147483647, %v2975
        %vm3233 = vcmp.eq.f32.partialorder %v3232, 8.507059e+37
        %v3234 = vand.u32 %v2975, 2147483648
        %v3235 = vor.u32 1.1754944e-38, %v3234
        %v3236 = vsel %vm3233, %v3235, %v3231
        %v3237 = vmul.f32 1.0, %v3236
        %v3238 = vrcp.pop %v2976
        %v3239 = vmul.f32 %v2976, %v3238
        %v3240 = vsub.f32 1.0, %v3239
        %v3241 = vmul.f32 %v3238, %v3240
        %v3242 = vadd.f32 %v3238, %v3241
        %vm3243 = vweird.f32 %v2976
        %vm3244 = vweird.f32 %v3238
        %vm3245 = vmor %vm3243, %vm3244
        %v3246 = vsel %vm3245, %v3238, %v3242
        %v3247 = vand.u32 2147483647, %v2976
        %vm3248 = vcmp.eq.f32.partialorder %v3247, 8.507059e+37
        %v3249 = vand.u32 %v2976, 2147483648
        %v3250 = vor.u32 1.1754944e-38, %v3249
        %v3251 = vsel %vm3248, %v3250, %v3246
        %v3252 = vmul.f32 1.0, %v3251
        %v3253 = vrcp.pop %v2977
        %v3254 = vmul.f32 %v2977, %v3253
        %v3255 = vsub.f32 1.0, %v3254
        %v3256 = vmul.f32 %v3253, %v3255
        %v3257 = vadd.f32 %v3253, %v3256
        %vm3258 = vweird.f32 %v2977
        %vm3259 = vweird.f32 %v3253
        %vm3260 = vmor %vm3258, %vm3259
        %v3261 = vsel %vm3260, %v3253, %v3257
        %v3262 = vand.u32 2147483647, %v2977
        %vm3263 = vcmp.eq.f32.partialorder %v3262, 8.507059e+37
        %v3264 = vand.u32 %v2977, 2147483648
        %v3265 = vor.u32 1.1754944e-38, %v3264
        %v3266 = vsel %vm3263, %v3265, %v3261
        %v3267 = vmul.f32 1.0, %v3266
        %v3268 = vrcp.pop %v2978
        %v3269 = vmul.f32 %v2978, %v3268
        %v3270 = vsub.f32 1.0, %v3269
        %v3271 = vmul.f32 %v3268, %v3270
        %v3272 = vadd.f32 %v3268, %v3271
        %vm3273 = vweird.f32 %v2978
        %vm3274 = vweird.f32 %v3268
        %vm3275 = vmor %vm3273, %vm3274
        %v3276 = vsel %vm3275, %v3268, %v3272
        %v3277 = vand.u32 2147483647, %v2978
        %vm3278 = vcmp.eq.f32.partialorder %v3277, 8.507059e+37
        %v3279 = vand.u32 %v2978, 2147483648
        %v3280 = vor.u32 1.1754944e-38, %v3279
        %v3281 = vsel %vm3278, %v3280, %v3276
        %v3282 = vmul.f32 1.0, %v3281
        %v3283 = vrcp.pop %v2979
        %v3284 = vmul.f32 %v2979, %v3283
        %v3285 = vsub.f32 1.0, %v3284
        %v3286 = vmul.f32 %v3283, %v3285
        %v3287 = vadd.f32 %v3283, %v3286
        %vm3288 = vweird.f32 %v2979
        %vm3289 = vweird.f32 %v3283
        %vm3290 = vmor %vm3288, %vm3289
        %v3291 = vsel %vm3290, %v3283, %v3287
        %v3292 = vand.u32 2147483647, %v2979
        %vm3293 = vcmp.eq.f32.partialorder %v3292, 8.507059e+37
        %v3294 = vand.u32 %v2979, 2147483648
        %v3295 = vor.u32 1.1754944e-38, %v3294
        %v3296 = vsel %vm3293, %v3295, %v3291
        %v3297 = vmul.f32 1.0, %v3296
        %v3298 = vrcp.pop %v2980
        %v3299 = vmul.f32 %v2980, %v3298
        %v3300 = vsub.f32 1.0, %v3299
        %v3301 = vmul.f32 %v3298, %v3300
        %v3302 = vadd.f32 %v3298, %v3301
        %vm3303 = vweird.f32 %v2980
        %vm3304 = vweird.f32 %v3298
        %vm3305 = vmor %vm3303, %vm3304
        %v3306 = vsel %vm3305, %v3298, %v3302
        %v3307 = vand.u32 2147483647, %v2980
        %vm3308 = vcmp.eq.f32.partialorder %v3307, 8.507059e+37
        %v3309 = vand.u32 %v2980, 2147483648
        %v3310 = vor.u32 1.1754944e-38, %v3309
        %v3311 = vsel %vm3308, %v3310, %v3306
        %v3312 = vmul.f32 1.0, %v3311
        %v3313 = vrcp.pop %v2981
        %v3314 = vmul.f32 %v2981, %v3313
        %v3315 = vsub.f32 1.0, %v3314
        %v3316 = vmul.f32 %v3313, %v3315
        %v3317 = vadd.f32 %v3313, %v3316
        %vm3318 = vweird.f32 %v2981
        %vm3319 = vweird.f32 %v3313
        %vm3320 = vmor %vm3318, %vm3319
        %v3321 = vsel %vm3320, %v3313, %v3317
        %v3322 = vand.u32 2147483647, %v2981
        %vm3323 = vcmp.eq.f32.partialorder %v3322, 8.507059e+37
        %v3324 = vand.u32 %v2981, 2147483648
        %v3325 = vor.u32 1.1754944e-38, %v3324
        %v3326 = vsel %vm3323, %v3325, %v3321
        %v3327 = vmul.f32 1.0, %v3326
        %v3328 = vrcp.pop %v2982
        %v3329 = vmul.f32 %v2982, %v3328
        %v3330 = vsub.f32 1.0, %v3329
        %v3331 = vmul.f32 %v3328, %v3330
        %v3332 = vadd.f32 %v3328, %v3331
        %vm3333 = vweird.f32 %v2982
        %vm3334 = vweird.f32 %v3328
        %vm3335 = vmor %vm3333, %vm3334
        %v3336 = vsel %vm3335, %v3328, %v3332
        %v3337 = vand.u32 2147483647, %v2982
        %vm3338 = vcmp.eq.f32.partialorder %v3337, 8.507059e+37
        %v3339 = vand.u32 %v2982, 2147483648
        %v3340 = vor.u32 1.1754944e-38, %v3339
        %v3341 = vsel %vm3338, %v3340, %v3336
        %v3342 = vmul.f32 1.0, %v3341
        %v3343 = vmul.f32 %v2997, 1.0614054
        %v3344 = vmul.f32 %v3012, 1.0614054
        %v3345 = vmul.f32 %v3027, 1.0614054
        %v3346 = vmul.f32 %v3042, 1.0614054
        %v3347 = vmul.f32 %v3057, 1.0614054
        %v3348 = vmul.f32 %v3072, 1.0614054
        %v3349 = vmul.f32 %v3087, 1.0614054
        %v3350 = vmul.f32 %v3102, 1.0614054
        %v3351 = vmul.f32 %v3117, 1.0614054
        %v3352 = vmul.f32 %v3132, 1.0614054
        %v3353 = vmul.f32 %v3147, 1.0614054
        %v3354 = vmul.f32 %v3162, 1.0614054
        %v3355 = vmul.f32 %v3177, 1.0614054
        %v3356 = vmul.f32 %v3192, 1.0614054
        %v3357 = vmul.f32 %v3207, 1.0614054
        %v3358 = vmul.f32 %v3222, 1.0614054
        %v3359 = vmul.f32 %v3237, 1.0614054
        %v3360 = vmul.f32 %v3252, 1.0614054
        %v3361 = vmul.f32 %v3267, 1.0614054
        %v3362 = vmul.f32 %v3282, 1.0614054
        %v3363 = vmul.f32 %v3297, 1.0614054
        %v3364 = vmul.f32 %v3312, 1.0614054
        %v3365 = vmul.f32 %v3327, 1.0614054
        %v3366 = vmul.f32 %v3342, 1.0614054
        %v3367 = vadd.f32 %v3343, -1.4531521
        %v3368 = vadd.f32 %v3344, -1.4531521
        %v3369 = vadd.f32 %v3345, -1.4531521
        %v3370 = vadd.f32 %v3346, -1.4531521
        %v3371 = vadd.f32 %v3347, -1.4531521
        %v3372 = vadd.f32 %v3348, -1.4531521
        %v3373 = vadd.f32 %v3349, -1.4531521
        %v3374 = vadd.f32 %v3350, -1.4531521
        %v3375 = vadd.f32 %v3351, -1.4531521
        %v3376 = vadd.f32 %v3352, -1.4531521
        %v3377 = vadd.f32 %v3353, -1.4531521
        %v3378 = vadd.f32 %v3354, -1.4531521
        %v3379 = vadd.f32 %v3355, -1.4531521
        %v3380 = vadd.f32 %v3356, -1.4531521
        %v3381 = vadd.f32 %v3357, -1.4531521
        %v3382 = vadd.f32 %v3358, -1.4531521
        %v3383 = vadd.f32 %v3359, -1.4531521
        %v3384 = vadd.f32 %v3360, -1.4531521
        %v3385 = vadd.f32 %v3361, -1.4531521
        %v3386 = vadd.f32 %v3362, -1.4531521
        %v3387 = vadd.f32 %v3363, -1.4531521
        %v3388 = vadd.f32 %v3364, -1.4531521
        %v3389 = vadd.f32 %v3365, -1.4531521
        %v3390 = vadd.f32 %v3366, -1.4531521
        %v3391 = vmul.f32 %v2997, %v3367
        %v3392 = vmul.f32 %v3012, %v3368
        %v3393 = vmul.f32 %v3027, %v3369
        %v3394 = vmul.f32 %v3042, %v3370
        %v3395 = vmul.f32 %v3057, %v3371
        %v3396 = vmul.f32 %v3072, %v3372
        %v3397 = vmul.f32 %v3087, %v3373
        %v3398 = vmul.f32 %v3102, %v3374
        %v3399 = vmul.f32 %v3117, %v3375
        %v3400 = vmul.f32 %v3132, %v3376
        %v3401 = vmul.f32 %v3147, %v3377
        %v3402 = vmul.f32 %v3162, %v3378
        %v3403 = vmul.f32 %v3177, %v3379
        %v3404 = vmul.f32 %v3192, %v3380
        %v3405 = vmul.f32 %v3207, %v3381
        %v3406 = vmul.f32 %v3222, %v3382
        %v3407 = vmul.f32 %v3237, %v3383
        %v3408 = vmul.f32 %v3252, %v3384
        %v3409 = vmul.f32 %v3267, %v3385
        %v3410 = vmul.f32 %v3282, %v3386
        %v3411 = vmul.f32 %v3297, %v3387
        %v3412 = vmul.f32 %v3312, %v3388
        %v3413 = vmul.f32 %v3327, %v3389
        %v3414 = vmul.f32 %v3342, %v3390
        %v3415 = vadd.f32 %v3391, 1.4214138
        %v3416 = vadd.f32 %v3392, 1.4214138
        %v3417 = vadd.f32 %v3393, 1.4214138
        %v3418 = vadd.f32 %v3394, 1.4214138
        %v3419 = vadd.f32 %v3395, 1.4214138
        %v3420 = vadd.f32 %v3396, 1.4214138
        %v3421 = vadd.f32 %v3397, 1.4214138
        %v3422 = vadd.f32 %v3398, 1.4214138
        %v3423 = vadd.f32 %v3399, 1.4214138
        %v3424 = vadd.f32 %v3400, 1.4214138
        %v3425 = vadd.f32 %v3401, 1.4214138
        %v3426 = vadd.f32 %v3402, 1.4214138
        %v3427 = vadd.f32 %v3403, 1.4214138
        %v3428 = vadd.f32 %v3404, 1.4214138
        %v3429 = vadd.f32 %v3405, 1.4214138
        %v3430 = vadd.f32 %v3406, 1.4214138
        %v3431 = vadd.f32 %v3407, 1.4214138
        %v3432 = vadd.f32 %v3408, 1.4214138
        %v3433 = vadd.f32 %v3409, 1.4214138
        %v3434 = vadd.f32 %v3410, 1.4214138
        %v3435 = vadd.f32 %v3411, 1.4214138
        %v3436 = vadd.f32 %v3412, 1.4214138
        %v3437 = vadd.f32 %v3413, 1.4214138
        %v3438 = vadd.f32 %v3414, 1.4214138
        %v3439 = vmul.f32 %v2997, %v3415
        %v3440 = vmul.f32 %v3012, %v3416
        %v3441 = vmul.f32 %v3027, %v3417
        %v3442 = vmul.f32 %v3042, %v3418
        %v3443 = vmul.f32 %v3057, %v3419
        %v3444 = vmul.f32 %v3072, %v3420
        %v3445 = vmul.f32 %v3087, %v3421
        %v3446 = vmul.f32 %v3102, %v3422
        %v3447 = vmul.f32 %v3117, %v3423
        %v3448 = vmul.f32 %v3132, %v3424
        %v3449 = vmul.f32 %v3147, %v3425
        %v3450 = vmul.f32 %v3162, %v3426
        %v3451 = vmul.f32 %v3177, %v3427
        %v3452 = vmul.f32 %v3192, %v3428
        %v3453 = vmul.f32 %v3207, %v3429
        %v3454 = vmul.f32 %v3222, %v3430
        %v3455 = vmul.f32 %v3237, %v3431
        %v3456 = vmul.f32 %v3252, %v3432
        %v3457 = vmul.f32 %v3267, %v3433
        %v3458 = vmul.f32 %v3282, %v3434
        %v3459 = vmul.f32 %v3297, %v3435
        %v3460 = vmul.f32 %v3312, %v3436
        %v3461 = vmul.f32 %v3327, %v3437
        %v3462 = vmul.f32 %v3342, %v3438
        %v3463 = vadd.f32 %v3439, -0.28449672
        %v3464 = vadd.f32 %v3440, -0.28449672
        %v3465 = vadd.f32 %v3441, -0.28449672
        %v3466 = vadd.f32 %v3442, -0.28449672
        %v3467 = vadd.f32 %v3443, -0.28449672
        %v3468 = vadd.f32 %v3444, -0.28449672
        %v3469 = vadd.f32 %v3445, -0.28449672
        %v3470 = vadd.f32 %v3446, -0.28449672
        %v3471 = vadd.f32 %v3447, -0.28449672
        %v3472 = vadd.f32 %v3448, -0.28449672
        %v3473 = vadd.f32 %v3449, -0.28449672
        %v3474 = vadd.f32 %v3450, -0.28449672
        %v3475 = vadd.f32 %v3451, -0.28449672
        %v3476 = vadd.f32 %v3452, -0.28449672
        %v3477 = vadd.f32 %v3453, -0.28449672
        %v3478 = vadd.f32 %v3454, -0.28449672
        %v3479 = vadd.f32 %v3455, -0.28449672
        %v3480 = vadd.f32 %v3456, -0.28449672
        %v3481 = vadd.f32 %v3457, -0.28449672
        %v3482 = vadd.f32 %v3458, -0.28449672
        %v3483 = vadd.f32 %v3459, -0.28449672
        %v3484 = vadd.f32 %v3460, -0.28449672
        %v3485 = vadd.f32 %v3461, -0.28449672
        %v3486 = vadd.f32 %v3462, -0.28449672
        %v3487 = vmul.f32 %v2997, %v3463
        %v3488 = vmul.f32 %v3012, %v3464
        %v3489 = vmul.f32 %v3027, %v3465
        %v3490 = vmul.f32 %v3042, %v3466
        %v3491 = vmul.f32 %v3057, %v3467
        %v3492 = vmul.f32 %v3072, %v3468
        %v3493 = vmul.f32 %v3087, %v3469
        %v3494 = vmul.f32 %v3102, %v3470
        %v3495 = vmul.f32 %v3117, %v3471
        %v3496 = vmul.f32 %v3132, %v3472
        %v3497 = vmul.f32 %v3147, %v3473
        %v3498 = vmul.f32 %v3162, %v3474
        %v3499 = vmul.f32 %v3177, %v3475
        %v3500 = vmul.f32 %v3192, %v3476
        %v3501 = vmul.f32 %v3207, %v3477
        %v3502 = vmul.f32 %v3222, %v3478
        %v3503 = vmul.f32 %v3237, %v3479
        %v3504 = vmul.f32 %v3252, %v3480
        %v3505 = vmul.f32 %v3267, %v3481
        %v3506 = vmul.f32 %v3282, %v3482
        %v3507 = vmul.f32 %v3297, %v3483
        %v3508 = vmul.f32 %v3312, %v3484
        %v3509 = vmul.f32 %v3327, %v3485
        %v3510 = vmul.f32 %v3342, %v3486
        %v3511 = vadd.f32 %v3487, 0.2548296
        %v3512 = vadd.f32 %v3488, 0.2548296
        %v3513 = vadd.f32 %v3489, 0.2548296
        %v3514 = vadd.f32 %v3490, 0.2548296
        %v3515 = vadd.f32 %v3491, 0.2548296
        %v3516 = vadd.f32 %v3492, 0.2548296
        %v3517 = vadd.f32 %v3493, 0.2548296
        %v3518 = vadd.f32 %v3494, 0.2548296
        %v3519 = vadd.f32 %v3495, 0.2548296
        %v3520 = vadd.f32 %v3496, 0.2548296
        %v3521 = vadd.f32 %v3497, 0.2548296
        %v3522 = vadd.f32 %v3498, 0.2548296
        %v3523 = vadd.f32 %v3499, 0.2548296
        %v3524 = vadd.f32 %v3500, 0.2548296
        %v3525 = vadd.f32 %v3501, 0.2548296
        %v3526 = vadd.f32 %v3502, 0.2548296
        %v3527 = vadd.f32 %v3503, 0.2548296
        %v3528 = vadd.f32 %v3504, 0.2548296
        %v3529 = vadd.f32 %v3505, 0.2548296
        %v3530 = vadd.f32 %v3506, 0.2548296
        %v3531 = vadd.f32 %v3507, 0.2548296
        %v3532 = vadd.f32 %v3508, 0.2548296
        %v3533 = vadd.f32 %v3509, 0.2548296
        %v3534 = vadd.f32 %v3510, 0.2548296
        %v3535 = vmul.f32 %v2997, %v3511
        %v3536 = vmul.f32 %v3012, %v3512
        %v3537 = vmul.f32 %v3027, %v3513
        %v3538 = vmul.f32 %v3042, %v3514
        %v3539 = vmul.f32 %v3057, %v3515
        %v3540 = vmul.f32 %v3072, %v3516
        %v3541 = vmul.f32 %v3087, %v3517
        %v3542 = vmul.f32 %v3102, %v3518
        %v3543 = vmul.f32 %v3117, %v3519
        %v3544 = vmul.f32 %v3132, %v3520
        %v3545 = vmul.f32 %v3147, %v3521
        %v3546 = vmul.f32 %v3162, %v3522
        %v3547 = vmul.f32 %v3177, %v3523
        %v3548 = vmul.f32 %v3192, %v3524
        %v3549 = vmul.f32 %v3207, %v3525
        %v3550 = vmul.f32 %v3222, %v3526
        %v3551 = vmul.f32 %v3237, %v3527
        %v3552 = vmul.f32 %v3252, %v3528
        %v3553 = vmul.f32 %v3267, %v3529
        %v3554 = vmul.f32 %v3282, %v3530
        %v3555 = vmul.f32 %v3297, %v3531
        %v3556 = vmul.f32 %v3312, %v3532
        %v3557 = vmul.f32 %v3327, %v3533
        %v3558 = vmul.f32 %v3342, %v3534
        %v3559 = vsub.f32 0.0, %v2911
        %v3560 = vsub.f32 0.0, %v2912
        %v3561 = vsub.f32 0.0, %v2913
        %v3562 = vsub.f32 0.0, %v2914
        %v3563 = vsub.f32 0.0, %v2915
        %v3564 = vsub.f32 0.0, %v2916
        %v3565 = vsub.f32 0.0, %v2917
        %v3566 = vsub.f32 0.0, %v2918
        %v3567 = vsub.f32 0.0, %v2919
        %v3568 = vsub.f32 0.0, %v2920
        %v3569 = vsub.f32 0.0, %v2921
        %v3570 = vsub.f32 0.0, %v2922
        %v3571 = vsub.f32 0.0, %v2923
        %v3572 = vsub.f32 0.0, %v2924
        %v3573 = vsub.f32 0.0, %v2925
        %v3574 = vsub.f32 0.0, %v2926
        %v3575 = vsub.f32 0.0, %v2927
        %v3576 = vsub.f32 0.0, %v2928
        %v3577 = vsub.f32 0.0, %v2929
        %v3578 = vsub.f32 0.0, %v2930
        %v3579 = vsub.f32 0.0, %v2931
        %v3580 = vsub.f32 0.0, %v2932
        %v3581 = vsub.f32 0.0, %v2933
        %v3582 = vsub.f32 0.0, %v2934
        %v3583 = vmul.f32 %v3559, %v2911
        %v3584 = vmul.f32 %v3560, %v2912
        %v3585 = vmul.f32 %v3561, %v2913
        %v3586 = vmul.f32 %v3562, %v2914
        %v3587 = vmul.f32 %v3563, %v2915
        %v3588 = vmul.f32 %v3564, %v2916
        %v3589 = vmul.f32 %v3565, %v2917
        %v3590 = vmul.f32 %v3566, %v2918
        %v3591 = vmul.f32 %v3567, %v2919
        %v3592 = vmul.f32 %v3568, %v2920
        %v3593 = vmul.f32 %v3569, %v2921
        %v3594 = vmul.f32 %v3570, %v2922
        %v3595 = vmul.f32 %v3571, %v2923
        %v3596 = vmul.f32 %v3572, %v2924
        %v3597 = vmul.f32 %v3573, %v2925
        %v3598 = vmul.f32 %v3574, %v2926
        %v3599 = vmul.f32 %v3575, %v2927
        %v3600 = vmul.f32 %v3576, %v2928
        %v3601 = vmul.f32 %v3577, %v2929
        %v3602 = vmul.f32 %v3578, %v2930
        %v3603 = vmul.f32 %v3579, %v2931
        %v3604 = vmul.f32 %v3580, %v2932
        %v3605 = vmul.f32 %v3581, %v2933
        %v3606 = vmul.f32 %v3582, %v2934
        %v3607 = vmul.f32 %v3583, 1.442695
        %v3608 = vpow.pop %v3607
        %v3609 = vmul.f32 %v3584, 1.442695
        %v3610 = vpow.pop %v3609
        %v3611 = vmul.f32 %v3585, 1.442695
        %v3612 = vpow.pop %v3611
        %v3613 = vmul.f32 %v3586, 1.442695
        %v3614 = vpow.pop %v3613
        %v3615 = vmul.f32 %v3587, 1.442695
        %v3616 = vpow.pop %v3615
        %v3617 = vmul.f32 %v3588, 1.442695
        %v3618 = vpow.pop %v3617
        %v3619 = vmul.f32 %v3589, 1.442695
        %v3620 = vpow.pop %v3619
        %v3621 = vmul.f32 %v3590, 1.442695
        %v3622 = vpow.pop %v3621
        %v3623 = vmul.f32 %v3591, 1.442695
        %v3624 = vpow.pop %v3623
        %v3625 = vmul.f32 %v3592, 1.442695
        %v3626 = vpow.pop %v3625
        %v3627 = vmul.f32 %v3593, 1.442695
        %v3628 = vpow.pop %v3627
        %v3629 = vmul.f32 %v3594, 1.442695
        %v3630 = vpow.pop %v3629
        %v3631 = vmul.f32 %v3595, 1.442695
        %v3632 = vpow.pop %v3631
        %v3633 = vmul.f32 %v3596, 1.442695
        %v3634 = vpow.pop %v3633
        %v3635 = vmul.f32 %v3597, 1.442695
        %v3636 = vpow.pop %v3635
        %v3637 = vmul.f32 %v3598, 1.442695
        %v3638 = vpow.pop %v3637
        %v3639 = vmul.f32 %v3599, 1.442695
        %v3640 = vpow.pop %v3639
        %v3641 = vmul.f32 %v3600, 1.442695
        %v3642 = vpow.pop %v3641
        %v3643 = vmul.f32 %v3601, 1.442695
        %v3644 = vpow.pop %v3643
        %v3645 = vmul.f32 %v3602, 1.442695
        %v3646 = vpow.pop %v3645
        %v3647 = vmul.f32 %v3603, 1.442695
        %v3648 = vpow.pop %v3647
        %v3649 = vmul.f32 %v3604, 1.442695
        %v3650 = vpow.pop %v3649
        %v3651 = vmul.f32 %v3605, 1.442695
        %v3652 = vpow.pop %v3651
        %v3653 = vmul.f32 %v3606, 1.442695
        %v3654 = vpow.pop %v3653
        %v3655 = vmul.f32 %v3535, %v3608
        %v3656 = vmul.f32 %v3536, %v3610
        %v3657 = vmul.f32 %v3537, %v3612
        %v3658 = vmul.f32 %v3538, %v3614
        %v3659 = vmul.f32 %v3539, %v3616
        %v3660 = vmul.f32 %v3540, %v3618
        %v3661 = vmul.f32 %v3541, %v3620
        %v3662 = vmul.f32 %v3542, %v3622
        %v3663 = vmul.f32 %v3543, %v3624
        %v3664 = vmul.f32 %v3544, %v3626
        %v3665 = vmul.f32 %v3545, %v3628
        %v3666 = vmul.f32 %v3546, %v3630
        %v3667 = vmul.f32 %v3547, %v3632
        %v3668 = vmul.f32 %v3548, %v3634
        %v3669 = vmul.f32 %v3549, %v3636
        %v3670 = vmul.f32 %v3550, %v3638
        %v3671 = vmul.f32 %v3551, %v3640
        %v3672 = vmul.f32 %v3552, %v3642
        %v3673 = vmul.f32 %v3553, %v3644
        %v3674 = vmul.f32 %v3554, %v3646
        %v3675 = vmul.f32 %v3555, %v3648
        %v3676 = vmul.f32 %v3556, %v3650
        %v3677 = vmul.f32 %v3557, %v3652
        %v3678 = vmul.f32 %v3558, %v3654
        %v3679 = vsub.f32 1.0, %v3655
        %v3680 = vsub.f32 1.0, %v3656
        %v3681 = vsub.f32 1.0, %v3657
        %v3682 = vsub.f32 1.0, %v3658
        %v3683 = vsub.f32 1.0, %v3659
        %v3684 = vsub.f32 1.0, %v3660
        %v3685 = vsub.f32 1.0, %v3661
        %v3686 = vsub.f32 1.0, %v3662
        %v3687 = vsub.f32 1.0, %v3663
        %v3688 = vsub.f32 1.0, %v3664
        %v3689 = vsub.f32 1.0, %v3665
        %v3690 = vsub.f32 1.0, %v3666
        %v3691 = vsub.f32 1.0, %v3667
        %v3692 = vsub.f32 1.0, %v3668
        %v3693 = vsub.f32 1.0, %v3669
        %v3694 = vsub.f32 1.0, %v3670
        %v3695 = vsub.f32 1.0, %v3671
        %v3696 = vsub.f32 1.0, %v3672
        %v3697 = vsub.f32 1.0, %v3673
        %v3698 = vsub.f32 1.0, %v3674
        %v3699 = vsub.f32 1.0, %v3675
        %v3700 = vsub.f32 1.0, %v3676
        %v3701 = vsub.f32 1.0, %v3677
        %v3702 = vsub.f32 1.0, %v3678
        %vm3703 = vcmp.ge.f32.partialorder %v2887, 0.0
        %vm3704 = vcmp.ge.f32.partialorder %v2888, 0.0
        %vm3705 = vcmp.ge.f32.partialorder %v2889, 0.0
        %vm3706 = vcmp.ge.f32.partialorder %v2890, 0.0
        %vm3707 = vcmp.ge.f32.partialorder %v2891, 0.0
        %vm3708 = vcmp.ge.f32.partialorder %v2892, 0.0
        %vm3709 = vcmp.ge.f32.partialorder %v2893, 0.0
        %vm3710 = vcmp.ge.f32.partialorder %v2894, 0.0
        %vm3711 = vcmp.ge.f32.partialorder %v2895, 0.0
        %vm3712 = vcmp.ge.f32.partialorder %v2896, 0.0
        %vm3713 = vcmp.ge.f32.partialorder %v2897, 0.0
        %vm3714 = vcmp.ge.f32.partialorder %v2898, 0.0
        %vm3715 = vcmp.ge.f32.partialorder %v2899, 0.0
        %vm3716 = vcmp.ge.f32.partialorder %v2900, 0.0
        %vm3717 = vcmp.ge.f32.partialorder %v2901, 0.0
        %vm3718 = vcmp.ge.f32.partialorder %v2902, 0.0
        %vm3719 = vcmp.ge.f32.partialorder %v2903, 0.0
        %vm3720 = vcmp.ge.f32.partialorder %v2904, 0.0
        %vm3721 = vcmp.ge.f32.partialorder %v2905, 0.0
        %vm3722 = vcmp.ge.f32.partialorder %v2906, 0.0
        %vm3723 = vcmp.ge.f32.partialorder %v2907, 0.0
        %vm3724 = vcmp.ge.f32.partialorder %v2908, 0.0
        %vm3725 = vcmp.ge.f32.partialorder %v2909, 0.0
        %vm3726 = vcmp.ge.f32.partialorder %v2910, 0.0
        %v3727 = vsub.f32 0.0, %v3679
        %v3728 = vsub.f32 0.0, %v3680
        %v3729 = vsub.f32 0.0, %v3681
        %v3730 = vsub.f32 0.0, %v3682
        %v3731 = vsub.f32 0.0, %v3683
        %v3732 = vsub.f32 0.0, %v3684
        %v3733 = vsub.f32 0.0, %v3685
        %v3734 = vsub.f32 0.0, %v3686
        %v3735 = vsub.f32 0.0, %v3687
        %v3736 = vsub.f32 0.0, %v3688
        %v3737 = vsub.f32 0.0, %v3689
        %v3738 = vsub.f32 0.0, %v3690
        %v3739 = vsub.f32 0.0, %v3691
        %v3740 = vsub.f32 0.0, %v3692
        %v3741 = vsub.f32 0.0, %v3693
        %v3742 = vsub.f32 0.0, %v3694
        %v3743 = vsub.f32 0.0, %v3695
        %v3744 = vsub.f32 0.0, %v3696
        %v3745 = vsub.f32 0.0, %v3697
        %v3746 = vsub.f32 0.0, %v3698
        %v3747 = vsub.f32 0.0, %v3699
        %v3748 = vsub.f32 0.0, %v3700
        %v3749 = vsub.f32 0.0, %v3701
        %v3750 = vsub.f32 0.0, %v3702
        %v3751 = vsel %vm3703, %v3679, %v3727
        %v3752 = vsel %vm3704, %v3680, %v3728
        %v3753 = vsel %vm3705, %v3681, %v3729
        %v3754 = vsel %vm3706, %v3682, %v3730
        %v3755 = vsel %vm3707, %v3683, %v3731
        %v3756 = vsel %vm3708, %v3684, %v3732
        %v3757 = vsel %vm3709, %v3685, %v3733
        %v3758 = vsel %vm3710, %v3686, %v3734
        %v3759 = vsel %vm3711, %v3687, %v3735
        %v3760 = vsel %vm3712, %v3688, %v3736
        %v3761 = vsel %vm3713, %v3689, %v3737
        %v3762 = vsel %vm3714, %v3690, %v3738
        %v3763 = vsel %vm3715, %v3691, %v3739
        %v3764 = vsel %vm3716, %v3692, %v3740
        %v3765 = vsel %vm3717, %v3693, %v3741
        %v3766 = vsel %vm3718, %v3694, %v3742
        %v3767 = vsel %vm3719, %v3695, %v3743
        %v3768 = vsel %vm3720, %v3696, %v3744
        %v3769 = vsel %vm3721, %v3697, %v3745
        %v3770 = vsel %vm3722, %v3698, %v3746
        %v3771 = vsel %vm3723, %v3699, %v3747
        %v3772 = vsel %vm3724, %v3700, %v3748
        %v3773 = vsel %vm3725, %v3701, %v3749
        %v3774 = vsel %vm3726, %v3702, %v3750
        %v3775 = vadd.f32 %v3751, 1.0
        %v3776 = vadd.f32 %v3752, 1.0
        %v3777 = vadd.f32 %v3753, 1.0
        %v3778 = vadd.f32 %v3754, 1.0
        %v3779 = vadd.f32 %v3755, 1.0
        %v3780 = vadd.f32 %v3756, 1.0
        %v3781 = vadd.f32 %v3757, 1.0
        %v3782 = vadd.f32 %v3758, 1.0
        %v3783 = vadd.f32 %v3759, 1.0
        %v3784 = vadd.f32 %v3760, 1.0
        %v3785 = vadd.f32 %v3761, 1.0
        %v3786 = vadd.f32 %v3762, 1.0
        %v3787 = vadd.f32 %v3763, 1.0
        %v3788 = vadd.f32 %v3764, 1.0
        %v3789 = vadd.f32 %v3765, 1.0
        %v3790 = vadd.f32 %v3766, 1.0
        %v3791 = vadd.f32 %v3767, 1.0
        %v3792 = vadd.f32 %v3768, 1.0
        %v3793 = vadd.f32 %v3769, 1.0
        %v3794 = vadd.f32 %v3770, 1.0
        %v3795 = vadd.f32 %v3771, 1.0
        %v3796 = vadd.f32 %v3772, 1.0
        %v3797 = vadd.f32 %v3773, 1.0
        %v3798 = vadd.f32 %v3774, 1.0
        %v3799 = vmul.f32 %v2863, %v3775
        %v3800 = vmul.f32 %v2864, %v3776
        %v3801 = vmul.f32 %v2865, %v3777
        %v3802 = vmul.f32 %v2866, %v3778
        %v3803 = vmul.f32 %v2867, %v3779
        %v3804 = vmul.f32 %v2868, %v3780
        %v3805 = vmul.f32 %v2869, %v3781
        %v3806 = vmul.f32 %v2870, %v3782
        %v3807 = vmul.f32 %v2871, %v3783
        %v3808 = vmul.f32 %v2872, %v3784
        %v3809 = vmul.f32 %v2873, %v3785
        %v3810 = vmul.f32 %v2874, %v3786
        %v3811 = vmul.f32 %v2875, %v3787
        %v3812 = vmul.f32 %v2876, %v3788
        %v3813 = vmul.f32 %v2877, %v3789
        %v3814 = vmul.f32 %v2878, %v3790
        %v3815 = vmul.f32 %v2879, %v3791
        %v3816 = vmul.f32 %v2880, %v3792
        %v3817 = vmul.f32 %v2881, %v3793
        %v3818 = vmul.f32 %v2882, %v3794
        %v3819 = vmul.f32 %v2883, %v3795
        %v3820 = vmul.f32 %v2884, %v3796
        %v3821 = vmul.f32 %v2885, %v3797
        %v3822 = vmul.f32 %v2886, %v3798
        %v3823 = vld [vmem:[%s5] sm:$0xff]
        %v3824 = vld [vmem:[%s6] sm:$0xff]
        %3826 = vset.pattern.permute.xlu0 0
        %3827 = vperm.xlu0 %3826, %v3824
        %v3828 = vpop.permute.xlu0 %3827
        %vm3830 = vcmask 130048
        %v3832 = vsel %vm3830, %v3823, 0
        %3834 = vmatpush.msra.mxu0 0.0
        %3835 = vmatpush.msra.mxu0 0.0
        %3836 = vmatpush.msra.mxu0 0.0
        %3837 = vmatpush.msra.mxu0 0.0
        %3838 = vmatpush.msra.mxu0 0.0
        %3839 = vmatpush.msra.mxu0 0.0
        %3840 = vmatpush.msra.mxu0 0.0
        %3841 = vmatpush.msra.mxu0 0.0
        %3842 = vmatpush.msra.mxu0 0.0
        %3843 = vmatpush.msra.mxu0 0.0
        %3844 = vmatpush.msra.mxu0 0.0
        %3845 = vmatpush.msra.mxu0 0.0
        %3846 = vmatpush.msra.mxu0 0.0
        %3847 = vmatpush.msra.mxu0 0.0
        %3848 = vmatpush.msra.mxu0 %v3811
        %3849 = vmatpush.msra.mxu0 %v3799
        %3850 = vmatmul.f32.gmra.mxu0 %v3832
        %v3851 = vpop.f32.mrf.mxu0
        %v3852 = vadd.f32 %v3828, %v3851
        %3853 = vdwg.mxu0
        %3854 = vmatpush.msra.mxu0 0.0
        %3855 = vmatpush.msra.mxu0 0.0
        %3856 = vmatpush.msra.mxu0 0.0
        %3857 = vmatpush.msra.mxu0 0.0
        %3858 = vmatpush.msra.mxu0 0.0
        %3859 = vmatpush.msra.mxu0 0.0
        %3860 = vmatpush.msra.mxu0 0.0
        %3861 = vmatpush.msra.mxu0 0.0
        %3862 = vmatpush.msra.mxu0 0.0
        %3863 = vmatpush.msra.mxu0 0.0
        %3864 = vmatpush.msra.mxu0 0.0
        %3865 = vmatpush.msra.mxu0 0.0
        %3866 = vmatpush.msra.mxu0 0.0
        %3867 = vmatpush.msra.mxu0 0.0
        %3868 = vmatpush.msra.mxu0 %v3812
        %3869 = vmatpush.msra.mxu0 %v3800
        %3870 = vmatmul.f32.gmra.mxu0 %v3832
        %v3871 = vpop.f32.mrf.mxu0
        %v3872 = vadd.f32 %v3828, %v3871
        %3873 = vdwg.mxu0
        %3874 = vmatpush.msra.mxu0 0.0
        %3875 = vmatpush.msra.mxu0 0.0
        %3876 = vmatpush.msra.mxu0 0.0
        %3877 = vmatpush.msra.mxu0 0.0
        %3878 = vmatpush.msra.mxu0 0.0
        %3879 = vmatpush.msra.mxu0 0.0
        %3880 = vmatpush.msra.mxu0 0.0
        %3881 = vmatpush.msra.mxu0 0.0
        %3882 = vmatpush.msra.mxu0 0.0
        %3883 = vmatpush.msra.mxu0 0.0
        %3884 = vmatpush.msra.mxu0 0.0
        %3885 = vmatpush.msra.mxu0 0.0
        %3886 = vmatpush.msra.mxu0 0.0
        %3887 = vmatpush.msra.mxu0 0.0
        %3888 = vmatpush.msra.mxu0 %v3813
        %3889 = vmatpush.msra.mxu0 %v3801
        %3890 = vmatmul.f32.gmra.mxu0 %v3832
        %v3891 = vpop.f32.mrf.mxu0
        %v3892 = vadd.f32 %v3828, %v3891
        %3893 = vdwg.mxu0
        %3894 = vmatpush.msra.mxu0 0.0
        %3895 = vmatpush.msra.mxu0 0.0
        %3896 = vmatpush.msra.mxu0 0.0
        %3897 = vmatpush.msra.mxu0 0.0
        %3898 = vmatpush.msra.mxu0 0.0
        %3899 = vmatpush.msra.mxu0 0.0
        %3900 = vmatpush.msra.mxu0 0.0
        %3901 = vmatpush.msra.mxu0 0.0
        %3902 = vmatpush.msra.mxu0 0.0
        %3903 = vmatpush.msra.mxu0 0.0
        %3904 = vmatpush.msra.mxu0 0.0
        %3905 = vmatpush.msra.mxu0 0.0
        %3906 = vmatpush.msra.mxu0 0.0
        %3907 = vmatpush.msra.mxu0 0.0
        %3908 = vmatpush.msra.mxu0 %v3814
        %3909 = vmatpush.msra.mxu0 %v3802
        %3910 = vmatmul.f32.gmra.mxu0 %v3832
        %v3911 = vpop.f32.mrf.mxu0
        %v3912 = vadd.f32 %v3828, %v3911
        %3913 = vdwg.mxu0
        %3914 = vmatpush.msra.mxu0 0.0
        %3915 = vmatpush.msra.mxu0 0.0
        %3916 = vmatpush.msra.mxu0 0.0
        %3917 = vmatpush.msra.mxu0 0.0
        %3918 = vmatpush.msra.mxu0 0.0
        %3919 = vmatpush.msra.mxu0 0.0
        %3920 = vmatpush.msra.mxu0 0.0
        %3921 = vmatpush.msra.mxu0 0.0
        %3922 = vmatpush.msra.mxu0 0.0
        %3923 = vmatpush.msra.mxu0 0.0
        %3924 = vmatpush.msra.mxu0 0.0
        %3925 = vmatpush.msra.mxu0 0.0
        %3926 = vmatpush.msra.mxu0 0.0
        %3927 = vmatpush.msra.mxu0 0.0
        %3928 = vmatpush.msra.mxu0 %v3815
        %3929 = vmatpush.msra.mxu0 %v3803
        %3930 = vmatmul.f32.gmra.mxu0 %v3832
        %v3931 = vpop.f32.mrf.mxu0
        %v3932 = vadd.f32 %v3828, %v3931
        %3933 = vdwg.mxu0
        %3934 = vmatpush.msra.mxu0 0.0
        %3935 = vmatpush.msra.mxu0 0.0
        %3936 = vmatpush.msra.mxu0 0.0
        %3937 = vmatpush.msra.mxu0 0.0
        %3938 = vmatpush.msra.mxu0 0.0
        %3939 = vmatpush.msra.mxu0 0.0
        %3940 = vmatpush.msra.mxu0 0.0
        %3941 = vmatpush.msra.mxu0 0.0
        %3942 = vmatpush.msra.mxu0 0.0
        %3943 = vmatpush.msra.mxu0 0.0
        %3944 = vmatpush.msra.mxu0 0.0
        %3945 = vmatpush.msra.mxu0 0.0
        %3946 = vmatpush.msra.mxu0 0.0
        %3947 = vmatpush.msra.mxu0 0.0
        %3948 = vmatpush.msra.mxu0 %v3816
        %3949 = vmatpush.msra.mxu0 %v3804
        %3950 = vmatmul.f32.gmra.mxu0 %v3832
        %v3951 = vpop.f32.mrf.mxu0
        %v3952 = vadd.f32 %v3828, %v3951
        %3953 = vdwg.mxu0
        %3954 = vmatpush.msra.mxu0 0.0
        %3955 = vmatpush.msra.mxu0 0.0
        %3956 = vmatpush.msra.mxu0 0.0
        %3957 = vmatpush.msra.mxu0 0.0
        %3958 = vmatpush.msra.mxu0 0.0
        %3959 = vmatpush.msra.mxu0 0.0
        %3960 = vmatpush.msra.mxu0 0.0
        %3961 = vmatpush.msra.mxu0 0.0
        %3962 = vmatpush.msra.mxu0 0.0
        %3963 = vmatpush.msra.mxu0 0.0
        %3964 = vmatpush.msra.mxu0 0.0
        %3965 = vmatpush.msra.mxu0 0.0
        %3966 = vmatpush.msra.mxu0 0.0
        %3967 = vmatpush.msra.mxu0 0.0
        %3968 = vmatpush.msra.mxu0 %v3817
        %3969 = vmatpush.msra.mxu0 %v3805
        %3970 = vmatmul.f32.gmra.mxu0 %v3832
        %v3971 = vpop.f32.mrf.mxu0
        %v3972 = vadd.f32 %v3828, %v3971
        %3973 = vdwg.mxu0
        %3974 = vmatpush.msra.mxu0 0.0
        %3975 = vmatpush.msra.mxu0 0.0
        %3976 = vmatpush.msra.mxu0 0.0
        %3977 = vmatpush.msra.mxu0 0.0
        %3978 = vmatpush.msra.mxu0 0.0
        %3979 = vmatpush.msra.mxu0 0.0
        %3980 = vmatpush.msra.mxu0 0.0
        %3981 = vmatpush.msra.mxu0 0.0
        %3982 = vmatpush.msra.mxu0 0.0
        %3983 = vmatpush.msra.mxu0 0.0
        %3984 = vmatpush.msra.mxu0 0.0
        %3985 = vmatpush.msra.mxu0 0.0
        %3986 = vmatpush.msra.mxu0 0.0
        %3987 = vmatpush.msra.mxu0 0.0
        %3988 = vmatpush.msra.mxu0 %v3818
        %3989 = vmatpush.msra.mxu0 %v3806
        %3990 = vmatmul.f32.gmra.mxu0 %v3832
        %v3991 = vpop.f32.mrf.mxu0
        %v3992 = vadd.f32 %v3828, %v3991
        %3993 = vdwg.mxu0
        %3994 = vmatpush.msra.mxu0 0.0
        %3995 = vmatpush.msra.mxu0 0.0
        %3996 = vmatpush.msra.mxu0 0.0
        %3997 = vmatpush.msra.mxu0 0.0
        %3998 = vmatpush.msra.mxu0 0.0
        %3999 = vmatpush.msra.mxu0 0.0
        %4000 = vmatpush.msra.mxu0 0.0
        %4001 = vmatpush.msra.mxu0 0.0
        %4002 = vmatpush.msra.mxu0 0.0
        %4003 = vmatpush.msra.mxu0 0.0
        %4004 = vmatpush.msra.mxu0 0.0
        %4005 = vmatpush.msra.mxu0 0.0
        %4006 = vmatpush.msra.mxu0 0.0
        %4007 = vmatpush.msra.mxu0 0.0
        %4008 = vmatpush.msra.mxu0 %v3819
        %4009 = vmatpush.msra.mxu0 %v3807
        %4010 = vmatmul.f32.gmra.mxu0 %v3832
        %v4011 = vpop.f32.mrf.mxu0
        %v4012 = vadd.f32 %v3828, %v4011
        %4013 = vdwg.mxu0
        %4014 = vmatpush.msra.mxu0 0.0
        %4015 = vmatpush.msra.mxu0 0.0
        %4016 = vmatpush.msra.mxu0 0.0
        %4017 = vmatpush.msra.mxu0 0.0
        %4018 = vmatpush.msra.mxu0 0.0
        %4019 = vmatpush.msra.mxu0 0.0
        %4020 = vmatpush.msra.mxu0 0.0
        %4021 = vmatpush.msra.mxu0 0.0
        %4022 = vmatpush.msra.mxu0 0.0
        %4023 = vmatpush.msra.mxu0 0.0
        %4024 = vmatpush.msra.mxu0 0.0
        %4025 = vmatpush.msra.mxu0 0.0
        %4026 = vmatpush.msra.mxu0 0.0
        %4027 = vmatpush.msra.mxu0 0.0
        %4028 = vmatpush.msra.mxu0 %v3820
        %4029 = vmatpush.msra.mxu0 %v3808
        %4030 = vmatmul.f32.gmra.mxu0 %v3832
        %v4031 = vpop.f32.mrf.mxu0
        %v4032 = vadd.f32 %v3828, %v4031
        %4033 = vdwg.mxu0
        %4034 = vmatpush.msra.mxu0 0.0
        %4035 = vmatpush.msra.mxu0 0.0
        %4036 = vmatpush.msra.mxu0 0.0
        %4037 = vmatpush.msra.mxu0 0.0
        %4038 = vmatpush.msra.mxu0 0.0
        %4039 = vmatpush.msra.mxu0 0.0
        %4040 = vmatpush.msra.mxu0 0.0
        %4041 = vmatpush.msra.mxu0 0.0
        %4042 = vmatpush.msra.mxu0 0.0
        %4043 = vmatpush.msra.mxu0 0.0
        %4044 = vmatpush.msra.mxu0 0.0
        %4045 = vmatpush.msra.mxu0 0.0
        %4046 = vmatpush.msra.mxu0 0.0
        %4047 = vmatpush.msra.mxu0 0.0
        %4048 = vmatpush.msra.mxu0 %v3821
        %4049 = vmatpush.msra.mxu0 %v3809
        %4050 = vmatmul.f32.gmra.mxu0 %v3832
        %v4051 = vpop.f32.mrf.mxu0
        %v4052 = vadd.f32 %v3828, %v4051
        %4053 = vdwg.mxu0
        %4054 = vmatpush.msra.mxu0 0.0
        %4055 = vmatpush.msra.mxu0 0.0
        %4056 = vmatpush.msra.mxu0 0.0
        %4057 = vmatpush.msra.mxu0 0.0
        %4058 = vmatpush.msra.mxu0 0.0
        %4059 = vmatpush.msra.mxu0 0.0
        %4060 = vmatpush.msra.mxu0 0.0
        %4061 = vmatpush.msra.mxu0 0.0
        %4062 = vmatpush.msra.mxu0 0.0
        %4063 = vmatpush.msra.mxu0 0.0
        %4064 = vmatpush.msra.mxu0 0.0
        %4065 = vmatpush.msra.mxu0 0.0
        %4066 = vmatpush.msra.mxu0 0.0
        %4067 = vmatpush.msra.mxu0 0.0
        %4068 = vmatpush.msra.mxu0 %v3822
        %4069 = vmatpush.msra.mxu0 %v3810
        %4070 = vmatmul.f32.gmra.mxu0 %v3832
        %v4071 = vpop.f32.mrf.mxu0
        %v4072 = vadd.f32 %v3828, %v4071
        %4073 = vdwg.mxu0
        %v4074 = vmul.f32 %v3852, 0.5
        %v4075 = vmul.f32 %v3872, 0.5
        %v4076 = vmul.f32 %v3892, 0.5
        %v4077 = vmul.f32 %v3912, 0.5
        %v4078 = vmul.f32 %v3932, 0.5
        %v4079 = vmul.f32 %v3952, 0.5
        %v4080 = vmul.f32 %v3972, 0.5
        %v4081 = vmul.f32 %v3992, 0.5
        %v4082 = vmul.f32 %v4012, 0.5
        %v4083 = vmul.f32 %v4032, 0.5
        %v4084 = vmul.f32 %v4052, 0.5
        %v4085 = vmul.f32 %v4072, 0.5
        %v4086 = vmul.f32 %v3852, 0.70710677
        %v4087 = vmul.f32 %v3872, 0.70710677
        %v4088 = vmul.f32 %v3892, 0.70710677
        %v4089 = vmul.f32 %v3912, 0.70710677
        %v4090 = vmul.f32 %v3932, 0.70710677
        %v4091 = vmul.f32 %v3952, 0.70710677
        %v4092 = vmul.f32 %v3972, 0.70710677
        %v4093 = vmul.f32 %v3992, 0.70710677
        %v4094 = vmul.f32 %v4012, 0.70710677
        %v4095 = vmul.f32 %v4032, 0.70710677
        %v4096 = vmul.f32 %v4052, 0.70710677
        %v4097 = vmul.f32 %v4072, 0.70710677
        %v4098 = vand.u32 2147483647, %v4086
        %v4099 = vand.u32 2147483647, %v4087
        %v4100 = vand.u32 2147483647, %v4088
        %v4101 = vand.u32 2147483647, %v4089
        %v4102 = vand.u32 2147483647, %v4090
        %v4103 = vand.u32 2147483647, %v4091
        %v4104 = vand.u32 2147483647, %v4092
        %v4105 = vand.u32 2147483647, %v4093
        %v4106 = vand.u32 2147483647, %v4094
        %v4107 = vand.u32 2147483647, %v4095
        %v4108 = vand.u32 2147483647, %v4096
        %v4109 = vand.u32 2147483647, %v4097
        %v4110 = vmul.f32 %v4098, 0.3275911
        %v4111 = vmul.f32 %v4099, 0.3275911
        %v4112 = vmul.f32 %v4100, 0.3275911
        %v4113 = vmul.f32 %v4101, 0.3275911
        %v4114 = vmul.f32 %v4102, 0.3275911
        %v4115 = vmul.f32 %v4103, 0.3275911
        %v4116 = vmul.f32 %v4104, 0.3275911
        %v4117 = vmul.f32 %v4105, 0.3275911
        %v4118 = vmul.f32 %v4106, 0.3275911
        %v4119 = vmul.f32 %v4107, 0.3275911
        %v4120 = vmul.f32 %v4108, 0.3275911
        %v4121 = vmul.f32 %v4109, 0.3275911
        %v4122 = vadd.f32 %v4110, 1.0
        %v4123 = vadd.f32 %v4111, 1.0
        %v4124 = vadd.f32 %v4112, 1.0
        %v4125 = vadd.f32 %v4113, 1.0
        %v4126 = vadd.f32 %v4114, 1.0
        %v4127 = vadd.f32 %v4115, 1.0
        %v4128 = vadd.f32 %v4116, 1.0
        %v4129 = vadd.f32 %v4117, 1.0
        %v4130 = vadd.f32 %v4118, 1.0
        %v4131 = vadd.f32 %v4119, 1.0
        %v4132 = vadd.f32 %v4120, 1.0
        %v4133 = vadd.f32 %v4121, 1.0
        %v4134 = vrcp.pop %v4122
        %v4135 = vmul.f32 %v4122, %v4134
        %v4136 = vsub.f32 1.0, %v4135
        %v4137 = vmul.f32 %v4134, %v4136
        %v4138 = vadd.f32 %v4134, %v4137
        %vm4139 = vweird.f32 %v4122
        %vm4140 = vweird.f32 %v4134
        %vm4141 = vmor %vm4139, %vm4140
        %v4142 = vsel %vm4141, %v4134, %v4138
        %v4143 = vand.u32 2147483647, %v4122
        %vm4144 = vcmp.eq.f32.partialorder %v4143, 8.507059e+37
        %v4145 = vand.u32 %v4122, 2147483648
        %v4146 = vor.u32 1.1754944e-38, %v4145
        %v4147 = vsel %vm4144, %v4146, %v4142
        %v4148 = vmul.f32 1.0, %v4147
        %v4149 = vrcp.pop %v4123
        %v4150 = vmul.f32 %v4123, %v4149
        %v4151 = vsub.f32 1.0, %v4150
        %v4152 = vmul.f32 %v4149, %v4151
        %v4153 = vadd.f32 %v4149, %v4152
        %vm4154 = vweird.f32 %v4123
        %vm4155 = vweird.f32 %v4149
        %vm4156 = vmor %vm4154, %vm4155
        %v4157 = vsel %vm4156, %v4149, %v4153
        %v4158 = vand.u32 2147483647, %v4123
        %vm4159 = vcmp.eq.f32.partialorder %v4158, 8.507059e+37
        %v4160 = vand.u32 %v4123, 2147483648
        %v4161 = vor.u32 1.1754944e-38, %v4160
        %v4162 = vsel %vm4159, %v4161, %v4157
        %v4163 = vmul.f32 1.0, %v4162
        %v4164 = vrcp.pop %v4124
        %v4165 = vmul.f32 %v4124, %v4164
        %v4166 = vsub.f32 1.0, %v4165
        %v4167 = vmul.f32 %v4164, %v4166
        %v4168 = vadd.f32 %v4164, %v4167
        %vm4169 = vweird.f32 %v4124
        %vm4170 = vweird.f32 %v4164
        %vm4171 = vmor %vm4169, %vm4170
        %v4172 = vsel %vm4171, %v4164, %v4168
        %v4173 = vand.u32 2147483647, %v4124
        %vm4174 = vcmp.eq.f32.partialorder %v4173, 8.507059e+37
        %v4175 = vand.u32 %v4124, 2147483648
        %v4176 = vor.u32 1.1754944e-38, %v4175
        %v4177 = vsel %vm4174, %v4176, %v4172
        %v4178 = vmul.f32 1.0, %v4177
        %v4179 = vrcp.pop %v4125
        %v4180 = vmul.f32 %v4125, %v4179
        %v4181 = vsub.f32 1.0, %v4180
        %v4182 = vmul.f32 %v4179, %v4181
        %v4183 = vadd.f32 %v4179, %v4182
        %vm4184 = vweird.f32 %v4125
        %vm4185 = vweird.f32 %v4179
        %vm4186 = vmor %vm4184, %vm4185
        %v4187 = vsel %vm4186, %v4179, %v4183
        %v4188 = vand.u32 2147483647, %v4125
        %vm4189 = vcmp.eq.f32.partialorder %v4188, 8.507059e+37
        %v4190 = vand.u32 %v4125, 2147483648
        %v4191 = vor.u32 1.1754944e-38, %v4190
        %v4192 = vsel %vm4189, %v4191, %v4187
        %v4193 = vmul.f32 1.0, %v4192
        %v4194 = vrcp.pop %v4126
        %v4195 = vmul.f32 %v4126, %v4194
        %v4196 = vsub.f32 1.0, %v4195
        %v4197 = vmul.f32 %v4194, %v4196
        %v4198 = vadd.f32 %v4194, %v4197
        %vm4199 = vweird.f32 %v4126
        %vm4200 = vweird.f32 %v4194
        %vm4201 = vmor %vm4199, %vm4200
        %v4202 = vsel %vm4201, %v4194, %v4198
        %v4203 = vand.u32 2147483647, %v4126
        %vm4204 = vcmp.eq.f32.partialorder %v4203, 8.507059e+37
        %v4205 = vand.u32 %v4126, 2147483648
        %v4206 = vor.u32 1.1754944e-38, %v4205
        %v4207 = vsel %vm4204, %v4206, %v4202
        %v4208 = vmul.f32 1.0, %v4207
        %v4209 = vrcp.pop %v4127
        %v4210 = vmul.f32 %v4127, %v4209
        %v4211 = vsub.f32 1.0, %v4210
        %v4212 = vmul.f32 %v4209, %v4211
        %v4213 = vadd.f32 %v4209, %v4212
        %vm4214 = vweird.f32 %v4127
        %vm4215 = vweird.f32 %v4209
        %vm4216 = vmor %vm4214, %vm4215
        %v4217 = vsel %vm4216, %v4209, %v4213
        %v4218 = vand.u32 2147483647, %v4127
        %vm4219 = vcmp.eq.f32.partialorder %v4218, 8.507059e+37
        %v4220 = vand.u32 %v4127, 2147483648
        %v4221 = vor.u32 1.1754944e-38, %v4220
        %v4222 = vsel %vm4219, %v4221, %v4217
        %v4223 = vmul.f32 1.0, %v4222
        %v4224 = vrcp.pop %v4128
        %v4225 = vmul.f32 %v4128, %v4224
        %v4226 = vsub.f32 1.0, %v4225
        %v4227 = vmul.f32 %v4224, %v4226
        %v4228 = vadd.f32 %v4224, %v4227
        %vm4229 = vweird.f32 %v4128
        %vm4230 = vweird.f32 %v4224
        %vm4231 = vmor %vm4229, %vm4230
        %v4232 = vsel %vm4231, %v4224, %v4228
        %v4233 = vand.u32 2147483647, %v4128
        %vm4234 = vcmp.eq.f32.partialorder %v4233, 8.507059e+37
        %v4235 = vand.u32 %v4128, 2147483648
        %v4236 = vor.u32 1.1754944e-38, %v4235
        %v4237 = vsel %vm4234, %v4236, %v4232
        %v4238 = vmul.f32 1.0, %v4237
        %v4239 = vrcp.pop %v4129
        %v4240 = vmul.f32 %v4129, %v4239
        %v4241 = vsub.f32 1.0, %v4240
        %v4242 = vmul.f32 %v4239, %v4241
        %v4243 = vadd.f32 %v4239, %v4242
        %vm4244 = vweird.f32 %v4129
        %vm4245 = vweird.f32 %v4239
        %vm4246 = vmor %vm4244, %vm4245
        %v4247 = vsel %vm4246, %v4239, %v4243
        %v4248 = vand.u32 2147483647, %v4129
        %vm4249 = vcmp.eq.f32.partialorder %v4248, 8.507059e+37
        %v4250 = vand.u32 %v4129, 2147483648
        %v4251 = vor.u32 1.1754944e-38, %v4250
        %v4252 = vsel %vm4249, %v4251, %v4247
        %v4253 = vmul.f32 1.0, %v4252
        %v4254 = vrcp.pop %v4130
        %v4255 = vmul.f32 %v4130, %v4254
        %v4256 = vsub.f32 1.0, %v4255
        %v4257 = vmul.f32 %v4254, %v4256
        %v4258 = vadd.f32 %v4254, %v4257
        %vm4259 = vweird.f32 %v4130
        %vm4260 = vweird.f32 %v4254
        %vm4261 = vmor %vm4259, %vm4260
        %v4262 = vsel %vm4261, %v4254, %v4258
        %v4263 = vand.u32 2147483647, %v4130
        %vm4264 = vcmp.eq.f32.partialorder %v4263, 8.507059e+37
        %v4265 = vand.u32 %v4130, 2147483648
        %v4266 = vor.u32 1.1754944e-38, %v4265
        %v4267 = vsel %vm4264, %v4266, %v4262
        %v4268 = vmul.f32 1.0, %v4267
        %v4269 = vrcp.pop %v4131
        %v4270 = vmul.f32 %v4131, %v4269
        %v4271 = vsub.f32 1.0, %v4270
        %v4272 = vmul.f32 %v4269, %v4271
        %v4273 = vadd.f32 %v4269, %v4272
        %vm4274 = vweird.f32 %v4131
        %vm4275 = vweird.f32 %v4269
        %vm4276 = vmor %vm4274, %vm4275
        %v4277 = vsel %vm4276, %v4269, %v4273
        %v4278 = vand.u32 2147483647, %v4131
        %vm4279 = vcmp.eq.f32.partialorder %v4278, 8.507059e+37
        %v4280 = vand.u32 %v4131, 2147483648
        %v4281 = vor.u32 1.1754944e-38, %v4280
        %v4282 = vsel %vm4279, %v4281, %v4277
        %v4283 = vmul.f32 1.0, %v4282
        %v4284 = vrcp.pop %v4132
        %v4285 = vmul.f32 %v4132, %v4284
        %v4286 = vsub.f32 1.0, %v4285
        %v4287 = vmul.f32 %v4284, %v4286
        %v4288 = vadd.f32 %v4284, %v4287
        %vm4289 = vweird.f32 %v4132
        %vm4290 = vweird.f32 %v4284
        %vm4291 = vmor %vm4289, %vm4290
        %v4292 = vsel %vm4291, %v4284, %v4288
        %v4293 = vand.u32 2147483647, %v4132
        %vm4294 = vcmp.eq.f32.partialorder %v4293, 8.507059e+37
        %v4295 = vand.u32 %v4132, 2147483648
        %v4296 = vor.u32 1.1754944e-38, %v4295
        %v4297 = vsel %vm4294, %v4296, %v4292
        %v4298 = vmul.f32 1.0, %v4297
        %v4299 = vrcp.pop %v4133
        %v4300 = vmul.f32 %v4133, %v4299
        %v4301 = vsub.f32 1.0, %v4300
        %v4302 = vmul.f32 %v4299, %v4301
        %v4303 = vadd.f32 %v4299, %v4302
        %vm4304 = vweird.f32 %v4133
        %vm4305 = vweird.f32 %v4299
        %vm4306 = vmor %vm4304, %vm4305
        %v4307 = vsel %vm4306, %v4299, %v4303
        %v4308 = vand.u32 2147483647, %v4133
        %vm4309 = vcmp.eq.f32.partialorder %v4308, 8.507059e+37
        %v4310 = vand.u32 %v4133, 2147483648
        %v4311 = vor.u32 1.1754944e-38, %v4310
        %v4312 = vsel %vm4309, %v4311, %v4307
        %v4313 = vmul.f32 1.0, %v4312
        %v4314 = vmul.f32 %v4148, 1.0614054
        %v4315 = vmul.f32 %v4163, 1.0614054
        %v4316 = vmul.f32 %v4178, 1.0614054
        %v4317 = vmul.f32 %v4193, 1.0614054
        %v4318 = vmul.f32 %v4208, 1.0614054
        %v4319 = vmul.f32 %v4223, 1.0614054
        %v4320 = vmul.f32 %v4238, 1.0614054
        %v4321 = vmul.f32 %v4253, 1.0614054
        %v4322 = vmul.f32 %v4268, 1.0614054
        %v4323 = vmul.f32 %v4283, 1.0614054
        %v4324 = vmul.f32 %v4298, 1.0614054
        %v4325 = vmul.f32 %v4313, 1.0614054
        %v4326 = vadd.f32 %v4314, -1.4531521
        %v4327 = vadd.f32 %v4315, -1.4531521
        %v4328 = vadd.f32 %v4316, -1.4531521
        %v4329 = vadd.f32 %v4317, -1.4531521
        %v4330 = vadd.f32 %v4318, -1.4531521
        %v4331 = vadd.f32 %v4319, -1.4531521
        %v4332 = vadd.f32 %v4320, -1.4531521
        %v4333 = vadd.f32 %v4321, -1.4531521
        %v4334 = vadd.f32 %v4322, -1.4531521
        %v4335 = vadd.f32 %v4323, -1.4531521
        %v4336 = vadd.f32 %v4324, -1.4531521
        %v4337 = vadd.f32 %v4325, -1.4531521
        %v4338 = vmul.f32 %v4148, %v4326
        %v4339 = vmul.f32 %v4163, %v4327
        %v4340 = vmul.f32 %v4178, %v4328
        %v4341 = vmul.f32 %v4193, %v4329
        %v4342 = vmul.f32 %v4208, %v4330
        %v4343 = vmul.f32 %v4223, %v4331
        %v4344 = vmul.f32 %v4238, %v4332
        %v4345 = vmul.f32 %v4253, %v4333
        %v4346 = vmul.f32 %v4268, %v4334
        %v4347 = vmul.f32 %v4283, %v4335
        %v4348 = vmul.f32 %v4298, %v4336
        %v4349 = vmul.f32 %v4313, %v4337
        %v4350 = vadd.f32 %v4338, 1.4214138
        %v4351 = vadd.f32 %v4339, 1.4214138
        %v4352 = vadd.f32 %v4340, 1.4214138
        %v4353 = vadd.f32 %v4341, 1.4214138
        %v4354 = vadd.f32 %v4342, 1.4214138
        %v4355 = vadd.f32 %v4343, 1.4214138
        %v4356 = vadd.f32 %v4344, 1.4214138
        %v4357 = vadd.f32 %v4345, 1.4214138
        %v4358 = vadd.f32 %v4346, 1.4214138
        %v4359 = vadd.f32 %v4347, 1.4214138
        %v4360 = vadd.f32 %v4348, 1.4214138
        %v4361 = vadd.f32 %v4349, 1.4214138
        %v4362 = vmul.f32 %v4148, %v4350
        %v4363 = vmul.f32 %v4163, %v4351
        %v4364 = vmul.f32 %v4178, %v4352
        %v4365 = vmul.f32 %v4193, %v4353
        %v4366 = vmul.f32 %v4208, %v4354
        %v4367 = vmul.f32 %v4223, %v4355
        %v4368 = vmul.f32 %v4238, %v4356
        %v4369 = vmul.f32 %v4253, %v4357
        %v4370 = vmul.f32 %v4268, %v4358
        %v4371 = vmul.f32 %v4283, %v4359
        %v4372 = vmul.f32 %v4298, %v4360
        %v4373 = vmul.f32 %v4313, %v4361
        %v4374 = vadd.f32 %v4362, -0.28449672
        %v4375 = vadd.f32 %v4363, -0.28449672
        %v4376 = vadd.f32 %v4364, -0.28449672
        %v4377 = vadd.f32 %v4365, -0.28449672
        %v4378 = vadd.f32 %v4366, -0.28449672
        %v4379 = vadd.f32 %v4367, -0.28449672
        %v4380 = vadd.f32 %v4368, -0.28449672
        %v4381 = vadd.f32 %v4369, -0.28449672
        %v4382 = vadd.f32 %v4370, -0.28449672
        %v4383 = vadd.f32 %v4371, -0.28449672
        %v4384 = vadd.f32 %v4372, -0.28449672
        %v4385 = vadd.f32 %v4373, -0.28449672
        %v4386 = vmul.f32 %v4148, %v4374
        %v4387 = vmul.f32 %v4163, %v4375
        %v4388 = vmul.f32 %v4178, %v4376
        %v4389 = vmul.f32 %v4193, %v4377
        %v4390 = vmul.f32 %v4208, %v4378
        %v4391 = vmul.f32 %v4223, %v4379
        %v4392 = vmul.f32 %v4238, %v4380
        %v4393 = vmul.f32 %v4253, %v4381
        %v4394 = vmul.f32 %v4268, %v4382
        %v4395 = vmul.f32 %v4283, %v4383
        %v4396 = vmul.f32 %v4298, %v4384
        %v4397 = vmul.f32 %v4313, %v4385
        %v4398 = vadd.f32 %v4386, 0.2548296
        %v4399 = vadd.f32 %v4387, 0.2548296
        %v4400 = vadd.f32 %v4388, 0.2548296
        %v4401 = vadd.f32 %v4389, 0.2548296
        %v4402 = vadd.f32 %v4390, 0.2548296
        %v4403 = vadd.f32 %v4391, 0.2548296
        %v4404 = vadd.f32 %v4392, 0.2548296
        %v4405 = vadd.f32 %v4393, 0.2548296
        %v4406 = vadd.f32 %v4394, 0.2548296
        %v4407 = vadd.f32 %v4395, 0.2548296
        %v4408 = vadd.f32 %v4396, 0.2548296
        %v4409 = vadd.f32 %v4397, 0.2548296
        %v4410 = vmul.f32 %v4148, %v4398
        %v4411 = vmul.f32 %v4163, %v4399
        %v4412 = vmul.f32 %v4178, %v4400
        %v4413 = vmul.f32 %v4193, %v4401
        %v4414 = vmul.f32 %v4208, %v4402
        %v4415 = vmul.f32 %v4223, %v4403
        %v4416 = vmul.f32 %v4238, %v4404
        %v4417 = vmul.f32 %v4253, %v4405
        %v4418 = vmul.f32 %v4268, %v4406
        %v4419 = vmul.f32 %v4283, %v4407
        %v4420 = vmul.f32 %v4298, %v4408
        %v4421 = vmul.f32 %v4313, %v4409
        %v4422 = vsub.f32 0.0, %v4098
        %v4423 = vsub.f32 0.0, %v4099
        %v4424 = vsub.f32 0.0, %v4100
        %v4425 = vsub.f32 0.0, %v4101
        %v4426 = vsub.f32 0.0, %v4102
        %v4427 = vsub.f32 0.0, %v4103
        %v4428 = vsub.f32 0.0, %v4104
        %v4429 = vsub.f32 0.0, %v4105
        %v4430 = vsub.f32 0.0, %v4106
        %v4431 = vsub.f32 0.0, %v4107
        %v4432 = vsub.f32 0.0, %v4108
        %v4433 = vsub.f32 0.0, %v4109
        %v4434 = vmul.f32 %v4422, %v4098
        %v4435 = vmul.f32 %v4423, %v4099
        %v4436 = vmul.f32 %v4424, %v4100
        %v4437 = vmul.f32 %v4425, %v4101
        %v4438 = vmul.f32 %v4426, %v4102
        %v4439 = vmul.f32 %v4427, %v4103
        %v4440 = vmul.f32 %v4428, %v4104
        %v4441 = vmul.f32 %v4429, %v4105
        %v4442 = vmul.f32 %v4430, %v4106
        %v4443 = vmul.f32 %v4431, %v4107
        %v4444 = vmul.f32 %v4432, %v4108
        %v4445 = vmul.f32 %v4433, %v4109
        %v4446 = vmul.f32 %v4434, 1.442695
        %v4447 = vpow.pop %v4446
        %v4448 = vmul.f32 %v4435, 1.442695
        %v4449 = vpow.pop %v4448
        %v4450 = vmul.f32 %v4436, 1.442695
        %v4451 = vpow.pop %v4450
        %v4452 = vmul.f32 %v4437, 1.442695
        %v4453 = vpow.pop %v4452
        %v4454 = vmul.f32 %v4438, 1.442695
        %v4455 = vpow.pop %v4454
        %v4456 = vmul.f32 %v4439, 1.442695
        %v4457 = vpow.pop %v4456
        %v4458 = vmul.f32 %v4440, 1.442695
        %v4459 = vpow.pop %v4458
        %v4460 = vmul.f32 %v4441, 1.442695
        %v4461 = vpow.pop %v4460
        %v4462 = vmul.f32 %v4442, 1.442695
        %v4463 = vpow.pop %v4462
        %v4464 = vmul.f32 %v4443, 1.442695
        %v4465 = vpow.pop %v4464
        %v4466 = vmul.f32 %v4444, 1.442695
        %v4467 = vpow.pop %v4466
        %v4468 = vmul.f32 %v4445, 1.442695
        %v4469 = vpow.pop %v4468
        %v4470 = vmul.f32 %v4410, %v4447
        %v4471 = vmul.f32 %v4411, %v4449
        %v4472 = vmul.f32 %v4412, %v4451
        %v4473 = vmul.f32 %v4413, %v4453
        %v4474 = vmul.f32 %v4414, %v4455
        %v4475 = vmul.f32 %v4415, %v4457
        %v4476 = vmul.f32 %v4416, %v4459
        %v4477 = vmul.f32 %v4417, %v4461
        %v4478 = vmul.f32 %v4418, %v4463
        %v4479 = vmul.f32 %v4419, %v4465
        %v4480 = vmul.f32 %v4420, %v4467
        %v4481 = vmul.f32 %v4421, %v4469
        %v4482 = vsub.f32 1.0, %v4470
        %v4483 = vsub.f32 1.0, %v4471
        %v4484 = vsub.f32 1.0, %v4472
        %v4485 = vsub.f32 1.0, %v4473
        %v4486 = vsub.f32 1.0, %v4474
        %v4487 = vsub.f32 1.0, %v4475
        %v4488 = vsub.f32 1.0, %v4476
        %v4489 = vsub.f32 1.0, %v4477
        %v4490 = vsub.f32 1.0, %v4478
        %v4491 = vsub.f32 1.0, %v4479
        %v4492 = vsub.f32 1.0, %v4480
        %v4493 = vsub.f32 1.0, %v4481
        %vm4494 = vcmp.ge.f32.partialorder %v4086, 0.0
        %vm4495 = vcmp.ge.f32.partialorder %v4087, 0.0
        %vm4496 = vcmp.ge.f32.partialorder %v4088, 0.0
        %vm4497 = vcmp.ge.f32.partialorder %v4089, 0.0
        %vm4498 = vcmp.ge.f32.partialorder %v4090, 0.0
        %vm4499 = vcmp.ge.f32.partialorder %v4091, 0.0
        %vm4500 = vcmp.ge.f32.partialorder %v4092, 0.0
        %vm4501 = vcmp.ge.f32.partialorder %v4093, 0.0
        %vm4502 = vcmp.ge.f32.partialorder %v4094, 0.0
        %vm4503 = vcmp.ge.f32.partialorder %v4095, 0.0
        %vm4504 = vcmp.ge.f32.partialorder %v4096, 0.0
        %vm4505 = vcmp.ge.f32.partialorder %v4097, 0.0
        %v4506 = vsub.f32 0.0, %v4482
        %v4507 = vsub.f32 0.0, %v4483
        %v4508 = vsub.f32 0.0, %v4484
        %v4509 = vsub.f32 0.0, %v4485
        %v4510 = vsub.f32 0.0, %v4486
        %v4511 = vsub.f32 0.0, %v4487
        %v4512 = vsub.f32 0.0, %v4488
        %v4513 = vsub.f32 0.0, %v4489
        %v4514 = vsub.f32 0.0, %v4490
        %v4515 = vsub.f32 0.0, %v4491
        %v4516 = vsub.f32 0.0, %v4492
        %v4517 = vsub.f32 0.0, %v4493
        %v4518 = vsel %vm4494, %v4482, %v4506
        %v4519 = vsel %vm4495, %v4483, %v4507
        %v4520 = vsel %vm4496, %v4484, %v4508
        %v4521 = vsel %vm4497, %v4485, %v4509
        %v4522 = vsel %vm4498, %v4486, %v4510
        %v4523 = vsel %vm4499, %v4487, %v4511
        %v4524 = vsel %vm4500, %v4488, %v4512
        %v4525 = vsel %vm4501, %v4489, %v4513
        %v4526 = vsel %vm4502, %v4490, %v4514
        %v4527 = vsel %vm4503, %v4491, %v4515
        %v4528 = vsel %vm4504, %v4492, %v4516
        %v4529 = vsel %vm4505, %v4493, %v4517
        %v4530 = vadd.f32 %v4518, 1.0
        %v4531 = vadd.f32 %v4519, 1.0
        %v4532 = vadd.f32 %v4520, 1.0
        %v4533 = vadd.f32 %v4521, 1.0
        %v4534 = vadd.f32 %v4522, 1.0
        %v4535 = vadd.f32 %v4523, 1.0
        %v4536 = vadd.f32 %v4524, 1.0
        %v4537 = vadd.f32 %v4525, 1.0
        %v4538 = vadd.f32 %v4526, 1.0
        %v4539 = vadd.f32 %v4527, 1.0
        %v4540 = vadd.f32 %v4528, 1.0
        %v4541 = vadd.f32 %v4529, 1.0
        %v4542 = vmul.f32 %v4074, %v4530
        %v4543 = vmul.f32 %v4075, %v4531
        %v4544 = vmul.f32 %v4076, %v4532
        %v4545 = vmul.f32 %v4077, %v4533
        %v4546 = vmul.f32 %v4078, %v4534
        %v4547 = vmul.f32 %v4079, %v4535
        %v4548 = vmul.f32 %v4080, %v4536
        %v4549 = vmul.f32 %v4081, %v4537
        %v4550 = vmul.f32 %v4082, %v4538
        %v4551 = vmul.f32 %v4083, %v4539
        %v4552 = vmul.f32 %v4084, %v4540
        %v4553 = vmul.f32 %v4085, %v4541
        %v4554 = vadd.f32 %v4542, %v2554
        %v4555 = vadd.f32 %v4543, %v2555
        %v4556 = vadd.f32 %v4544, %v2556
        %v4557 = vadd.f32 %v4545, %v2557
        %v4558 = vadd.f32 %v4546, %v2558
        %v4559 = vadd.f32 %v4547, %v2559
        %v4560 = vadd.f32 %v4548, %v2560
        %v4561 = vadd.f32 %v4549, %v2561
        %v4562 = vadd.f32 %v4550, %v2562
        %v4563 = vadd.f32 %v4551, %v2563
        %v4564 = vadd.f32 %v4552, %v2564
        %v4565 = vadd.f32 %v4553, %v2565
        %4566 = vst [vmem:[%s315] sm:$0xff] %v4554
        %4567 = vst [vmem:[%s315 + $0x8] sm:$0xff] %v4555
        %4568 = vst [vmem:[%s315 + $0x10] sm:$0xff] %v4556
        %4569 = vst [vmem:[%s315 + $0x18] sm:$0xff] %v4557
        %4570 = vst [vmem:[%s315 + $0x20] sm:$0xff] %v4558
        %4571 = vst [vmem:[%s315 + $0x28] sm:$0xff] %v4559
        %4572 = vst [vmem:[%s315 + $0x30] sm:$0xff] %v4560
        %4573 = vst [vmem:[%s315 + $0x38] sm:$0xff] %v4561
        %4574 = vst [vmem:[%s315 + $0x40] sm:$0xff] %v4562
        %4575 = vst [vmem:[%s315 + $0x48] sm:$0xff] %v4563
        %4576 = vst [vmem:[%s315 + $0x50] sm:$0xff] %v4564
        %4577 = vst [vmem:[%s315 + $0x58] sm:$0xff] %v4565
        %s4578 = sand.u32 %s185, 1
        %s4579 = scalar_lea.sflag [#allocation6], %s4578
        %s4580 = sand.u32 %s185, 1
        %s4581 = smul.addr %s4580, 96
        %s4582 = scalar_lea.vmem [#allocation9], %s4581
        // Predicated region
        $region57: #{tpu_custom_call.1} parent=47 // pred_check
          %p4583 = pneg %p195
        $region58: #{tpu_custom_call.1} parent=47 // pred_check_branch
          %4585 = sbr.rel (%p4583) target = $region60
        $region59: #{tpu_custom_call.1} parent=47 // pred_region
          %4587 = vsyncadd %s4579, 0
          %s4588 = smul.addr %s25, 12
          %s4589 = smul.addr %s4588, 8
          %s4590 = scalar_lea.hbm %s7, %s4589
          %s4592 = sshll.u32 %s4582, 4
          %s4593 = int_to_ptr.vmem [resolvable:$true] %s4592
          %s4594 = sshll.u32 %s4590, 4
          %s4595 = int_to_ptr.hbm [resolvable:$true] %s4594
          %4597 = dma.vmem_to_hbm [thread:$0]  %s4593, 1536, %s4595, %s4579
        $region60: #{tpu_custom_call.1} parent=47 // pred_fallthru
          _
      $region48: #{tpu_custom_call.1} parent=5 // pred_fallthru
        _
      %p4598 = scmp.le.s32.totalorder 2, %s20
      // Predicated region
      $region61: #{tpu_custom_call.1} parent=5 // pred_check
        %p4599 = pneg %p4598
      $region62: #{tpu_custom_call.1} parent=5 // pred_check_branch
        %4601 = sbr.rel (%p4599) target = $region64
      $region63: #{tpu_custom_call.1} parent=5 // pred_region
        %s4602 = ssub.s32 %s20, 2
        // Predicated region
        $region65: #{tpu_custom_call.1} parent=63 // pred_check
          %p4603 = pneg %p201
        $region66: #{tpu_custom_call.1} parent=63 // pred_check_branch
          %4605 = sbr.rel (%p4603) target = $region68
        $region67: #{tpu_custom_call.1} parent=63 // pred_region
          %s4606 = sand.u32 %s186, 1
          %s4607 = scalar_lea.sflag [#allocation6], %s4606
          %s4608 = sand.u32 %s186, 1
          %s4609 = smul.addr %s4608, 96
          %s4610 = scalar_lea.vmem [#allocation9], %s4609
          %4612 = dma.done %s4607, 1536
        $region68: #{tpu_custom_call.1} parent=63 // pred_fallthru
          _
      $region64: #{tpu_custom_call.1} parent=5 // pred_fallthru
        _
    $region6: #{tpu_custom_call.1} parent=1 // loop_footer
      %s24 = sadd.s32 1, %s20
    $region7: #{tpu_custom_call.1} parent=1 // loop_footer_branch
      %19 = sbr.rel target = $region3
    $region8: #{tpu_custom_call.1} parent=1 // loop_exit
      _
    %4613 = vsyncpa [#allocation5], 1
    %s4614 = scalar_lea.sflag [#allocation5], 1
    %4615 = vsyncpa %s4614, 1
    %4616 = vsyncpa [#allocation8], 1
    %4617 = vsyncpa [#allocation6], 1
    %s4618 = scalar_lea.sflag [#allocation6], 1
    %4619 = vsyncpa %s4618, 1

</llo_original>
